<compile_context>
chip_gen: v6e
topology: v6e:2x2x1
jax: 0.10.0
libtpu: 0.0.40
codegen_flags: <defaults>
</compile_context>

<pallas_src>
import jax
import jax.numpy as jnp
from jax.experimental import pallas as pl
from jax.experimental.pallas import tpu as pltpu


_GRU_TN = 128   # GRU output tile width (multiple of 128); grid = Hp // _GRU_TN


# ----------------------------------------------------------------------------
# Pallas kernels
# ----------------------------------------------------------------------------
def _elu(y):
    # exp(min(y,0)) avoids inf on the discarded positive lanes.
    return jnp.where(y > 0, y, jnp.exp(jnp.minimum(y, 0.0)) - 1.0)


def _gated_conv_kernel(z_ref, w_ref, b_ref, out_ref):
    """Fused gated (trans)conv block on a stacked im2col input.

    z_ref   : [Kin, N]    bf16  stacked [prev-frame cols ; cur-frame cols]
    w_ref   : [2*R, Kin]  bf16  rows = [main ; gate]
    b_ref   : [2*R, 1]    f32
    out_ref : [R, N]      bf16 (f32 for the final decoder stage)
    """
    rows = out_ref.shape[0]
    pre = jnp.dot(w_ref[...], z_ref[...],
                  preferred_element_type=jnp.float32) + b_ref[...]
    main = pre[:rows, :]
    gate = pre[rows:, :]
    y = jax.nn.sigmoid(gate) * main
    y = _elu(y)      # ELU inside the gated conv block
    y = _elu(y)      # outer per-block non-linearity (modeled as ELU)
    out_ref[...] = y.astype(out_ref.dtype)


def _gru_kernel(x_ref, h_ref, wi_ref, wh_ref, si_ref, sh_ref,
                bi_ref, bh_ref, hs_ref, hout_ref):
    """One output-tile of a single-step GRU cell (grid over the hidden dim).

    x_ref, h_ref   : [B, H]      bf16 (matmul inputs, full)
    wi_ref, wh_ref : [H, 3*tn]   int8, columns ordered [r | z | n] per tile
    si_ref, sh_ref : [1, 3*tn]   f32 per-output-column dequant scales
    bi_ref, bh_ref : [1, 3*tn]   f32
    hs_ref         : [B, tn]     f32 previous hidden state, this tile
    hout_ref       : [B, tn]     f32 new hidden state, this tile
    """
    tn = hout_ref.shape[-1]
    qi = wi_ref[...].astype(jnp.bfloat16)      # int8 -> bf16 in VMEM (MXU path)
    qh = wh_ref[...].astype(jnp.bfloat16)
    ipre = jnp.dot(x_ref[...], qi, preferred_element_type=jnp.float32)
    ipre = ipre * si_ref[...] + bi_ref[...]
    hpre = jnp.dot(h_ref[...], qh, preferred_element_type=jnp.float32)
    hpre = hpre * sh_ref[...] + bh_ref[...]
    i_r, i_z, i_n = ipre[:, :tn], ipre[:, tn:2 * tn], ipre[:, 2 * tn:]
    h_r, h_z, h_n = hpre[:, :tn], hpre[:, tn:2 * tn], hpre[:, 2 * tn:]
    r = jax.nn.sigmoid(i_r + h_r)
    z = jax.nn.sigmoid(i_z + h_z)
    n = jnp.tanh(i_n + r * h_n)
    hout_ref[...] = (1.0 - z) * n + z * hs_ref[...]


# ----------------------------------------------------------------------------
# Pallas wrappers
# ----------------------------------------------------------------------------
_VMEM = pl.BlockSpec(memory_space=pltpu.MemorySpace.VMEM)


def gated_conv_pallas(z, p, out_dtype=jnp.bfloat16):
    """Encoder gated conv: single block, z already bf16 + column-padded %128."""
    rows = p["w"].shape[0] // 2
    n = z.shape[1]
    return pl.pallas_call(
        _gated_conv_kernel,
        out_shape=jax.ShapeDtypeStruct((rows, n), out_dtype),
        in_specs=[_VMEM, _VMEM, _VMEM],
        out_specs=_VMEM,
    )(z, p["w"], p["b"])


def gated_conv_pair_pallas(z2, p2, out_dtype=jnp.bfloat16):
    """Both decoders' polyphase gated trans-conv for one stage, grid=(2,).

    z2 : [2, 4*Cin, Npad] bf16   p2["w"]: [2, 4*Cout, 4*Cin] bf16
    p2["b"]: [2, 4*Cout, 1] f32  output: [2, 2*Cout, Npad] (even;odd phases)
    """
    _, kin, n = z2.shape
    wrows = p2["w"].shape[1]
    out_rows = wrows // 2
    return pl.pallas_call(
        _gated_conv_kernel,
        out_shape=jax.ShapeDtypeStruct((2, out_rows, n), out_dtype),
        grid=(2,),
        in_specs=[
            pl.BlockSpec((None, kin, n), lambda d: (d, 0, 0)),
            pl.BlockSpec((None, wrows, kin), lambda d: (d, 0, 0)),
            pl.BlockSpec((None, wrows, 1), lambda d: (d, 0, 0)),
        ],
        out_specs=pl.BlockSpec((None, out_rows, n), lambda d: (d, 0, 0)),
        compiler_params=pltpu.CompilerParams(
            dimension_semantics=("parallel",)),
    )(z2, p2["w"], p2["b"])


def gru_cell_pallas(x, h, gp):
    """Single GRU step; int8 weights streamed in 3*tn-wide tiles."""
    B, H = x.shape
    tn = _GRU_TN
    Hp = gp["bi"].shape[1] // 3          # padded hidden dim (960 -> 1024)
    nt = Hp // tn
    x_b = x.astype(jnp.bfloat16)
    h_b = h.astype(jnp.bfloat16)
    h_pad = jnp.pad(h.astype(jnp.float32), ((0, 0), (0, Hp - H)))
    hout = pl.pallas_call(
        _gru_kernel,
        out_shape=jax.ShapeDtypeStruct((B, Hp), jnp.float32),
        grid=(nt,),
        in_specs=[
            pl.BlockSpec((B, H), lambda t: (0, 0)),          # x (bf16)
            pl.BlockSpec((B, H), lambda t: (0, 0)),          # h (bf16)
            pl.BlockSpec((H, 3 * tn), lambda t: (0, t)),     # Wi tile (int8)
            pl.BlockSpec((H, 3 * tn), lambda t: (0, t)),     # Wh tile (int8)
            pl.BlockSpec((1, 3 * tn), lambda t: (0, t)),     # si
            pl.BlockSpec((1, 3 * tn), lambda t: (0, t)),     # sh
            pl.BlockSpec((1, 3 * tn), lambda t: (0, t)),     # bi
            pl.BlockSpec((1, 3 * tn), lambda t: (0, t)),     # bh
            pl.BlockSpec((B, tn), lambda t: (0, t)),         # h state tile
        ],
        out_specs=pl.BlockSpec((B, tn), lambda t: (0, t)),
        compiler_params=pltpu.CompilerParams(
            dimension_semantics=("parallel",)),
    )(x_b, h_b, gp["wi"], gp["wh"], gp["si"], gp["sh"],
      gp["bi"], gp["bh"], h_pad)
    return hout[:, :H]


# ----------------------------------------------------------------------------
# JAX glue: im2col and column padding
# ----------------------------------------------------------------------------
def _im2col(x, K, stride, pad):
    """x: [B, C, F] -> ([C*K, B*Fout], Fout); row order (c, k), k fastest."""
    B, C, F = x.shape
    xp = jnp.pad(x, ((0, 0), (0, 0), (pad, pad)))
    Fout = (F + 2 * pad - K) // stride + 1
    idx = stride * jnp.arange(Fout)[None, :] + jnp.arange(K)[:, None]   # [K, Fout]
    cols = xp[:, :, idx]                          # [B, C, K, Fout]
    cols = cols.reshape(B, C * K, Fout)
    cols = jnp.transpose(cols, (1, 0, 2)).reshape(C * K, B * Fout)
    return cols, Fout


def _pad_cols(a, mult=128):
    """Pad the last axis up to a multiple of `mult` (lane-dense kernel I/O)."""
    n = a.shape[-1]
    extra = (-n) % mult
    if extra:
        a = jnp.pad(a, [(0, 0)] * (a.ndim - 1) + [(0, extra)])
    return a


def apply_encoder_block(x, x_prev, p):
    """x, x_prev: [B, Cin, Fin] -> (y [B, Cout, Fout] bf16, x_prev_out = x)."""
    K, stride, pad = 3, 2, 0
    B = x.shape[0]
    xcol, Fout = _im2col(x, K, stride, pad)
    pcol, _ = _im2col(x_prev, K, stride, pad)
    z = _pad_cols(jnp.concatenate([pcol, xcol], axis=0).astype(jnp.bfloat16))
    y = gated_conv_pallas(z, p, jnp.bfloat16)      # [Cout, Npad]
    cout = y.shape[0]
    n = B * Fout
    y = y[:, :n].reshape(cout, B, Fout).transpose(1, 0, 2)
    return y, x


# ----------------------------------------------------------------------------
# Parameters (deterministic synthetic init; fused / polyphase / quantized)
# ----------------------------------------------------------------------------
def make_gated_conv_params(key, cin, cout, K=3, scale=0.05):
    """Encoder gated conv: fused [main;gate] x [prev;cur] -> [2*Cout, 2*Cin*K]."""
    ks = jax.random.split(key, 6)
    shp = (cout, cin * K)
    w1 = scale * jax.random.normal(ks[0], shp, jnp.float32)   # main, prev frame
    w2 = scale * jax.random.normal(ks[1], shp, jnp.float32)   # main, cur frame
    g1 = scale * jax.random.normal(ks[2], shp, jnp.float32)   # gate, prev frame
    g2 = scale * jax.random.normal(ks[3], shp, jnp.float32)   # gate, cur frame
    b = scale * jax.random.normal(ks[4], (cout, 1), jnp.float32)
    gb = scale * jax.random.normal(ks[5], (cout, 1), jnp.float32)
    w = jnp.concatenate([jnp.concatenate([w1, w2], axis=1),
                         jnp.concatenate([g1, g2], axis=1)], axis=0)
    return dict(w=w.astype(jnp.bfloat16),
                b=jnp.concatenate([b, gb], axis=0))


def make_gated_trans_conv_params(key, cin, cout, K=3, scale=0.05):
    """Decoder gated transposed conv, polyphase-packed.

    Stride-2, K=3 transposed conv over F inputs == two phases over a K=2,
    pad=1 im2col of the raw input (F+1 columns, row order (c,k) k fastest):
        even output  y[2m]   = W0 @ x[m-1] + W2 @ x[m]
        odd  output  y[2m+1] = W1 @ x[m]
    Fused weight rows: [main_even ; main_odd ; gate_even ; gate_odd] (Cout each)
    cols: [prev-frame (2*Cin) ; cur-frame (2*Cin)].
    """
    ks = jax.random.split(key, 6)
    shp = (cout, cin, K)
    w_prev = scale * jax.random.normal(ks[0], shp, jnp.float32)
    w_cur = scale * jax.random.normal(ks[1], shp, jnp.float32)
    g_prev = scale * jax.random.normal(ks[2], shp, jnp.float32)
    g_cur = scale * jax.random.normal(ks[3], shp, jnp.float32)
    b = scale * jax.random.normal(ks[4], (cout, 1), jnp.float32)
    gb = scale * jax.random.normal(ks[5], (cout, 1), jnp.float32)

    def poly(w):
        # col (c, k=0) multiplies x[m-1]; col (c, k=1) multiplies x[m]
        even = jnp.stack([w[:, :, 0], w[:, :, 2]], axis=-1).reshape(cout, 2 * cin)
        odd = jnp.stack([jnp.zeros_like(w[:, :, 1]), w[:, :, 1]],
                        axis=-1).reshape(cout, 2 * cin)
        return even, odd

    we_p, wo_p = poly(w_prev)
    we_c, wo_c = poly(w_cur)
    ge_p, go_p = poly(g_prev)
    ge_c, go_c = poly(g_cur)
    w = jnp.concatenate([
        jnp.concatenate([we_p, we_c], axis=1),
        jnp.concatenate([wo_p, wo_c], axis=1),
        jnp.concatenate([ge_p, ge_c], axis=1),
        jnp.concatenate([go_p, go_c], axis=1)], axis=0)      # [4*Cout, 4*Cin]
    bias = jnp.concatenate([b, b, gb, gb], axis=0)           # [4*Cout, 1]
    return dict(w=w.astype(jnp.bfloat16), b=bias)


def _fuse_tiles(mats, tn):
    """Tile-interleave [r|z|n] per tn-wide output tile: [R, Hp] x3 -> [R, 3*Hp]."""
    Hp = mats[0].shape[1]
    tiles = []
    for t in range(Hp // tn):
        sl = slice(t * tn, (t + 1) * tn)
        tiles += [m[:, sl] for m in mats]
    return jnp.concatenate(tiles, axis=1)


def make_gru_params(key, H, tn=_GRU_TN, scale=0.05):
    ks = jax.random.split(key, 8)
    m = lambda k: scale * jax.random.normal(k, (H, H), jnp.float32)
    wir, wiz, win = m(ks[0]), m(ks[1]), m(ks[2])
    whr, whz, whn = m(ks[3]), m(ks[4]), m(ks[5])
    bi3 = scale * jax.random.normal(ks[6], (3, H), jnp.float32)
    bh3 = scale * jax.random.normal(ks[7], (3, H), jnp.float32)

    Hp = pl.cdiv(H, tn) * tn                 # 960 -> 1024
    pad_w = lambda w: jnp.pad(w, ((0, 0), (0, Hp - H)))
    pad_b = lambda b: jnp.pad(b, ((0, 0), (0, Hp - H)))

    wi_f = _fuse_tiles([pad_w(wir), pad_w(wiz), pad_w(win)], tn)   # [H, 3*Hp]
    wh_f = _fuse_tiles([pad_w(whr), pad_w(whz), pad_w(whn)], tn)
    bi_f = _fuse_tiles([pad_b(bi3[0:1]), pad_b(bi3[1:2]), pad_b(bi3[2:3])], tn)
    bh_f = _fuse_tiles([pad_b(bh3[0:1]), pad_b(bh3[1:2]), pad_b(bh3[2:3])], tn)

    def quant_int8(w):
        amax = jnp.max(jnp.abs(w), axis=0, keepdims=True)
        s = jnp.maximum(amax, 1e-6) / 127.0
        q = jnp.clip(jnp.round(w / s), -127.0, 127.0).astype(jnp.int8)
        return q, s.astype(jnp.float32)

    qi, si = quant_int8(wi_f)
    qh, sh = quant_int8(wh_f)
    return dict(wi=qi, wh=qh, si=si, sh=sh, bi=bi_f, bh=bh_f)


def make_params(key):
    keys = jax.random.split(key, 16)
    # Encoder: 16->64 (F 255->127), 64->64 (127->63), 64->64 (63->31), 64->64 (31->15)
    enc_io = [(16, 64), (64, 64), (64, 64), (64, 64)]
    encoder = [make_gated_conv_params(keys[i], ci, co)
               for i, (ci, co) in enumerate(enc_io)]
    # Two decoders (real/imag), each: 128->64 x3, then 128->1; stacked per stage
    dec_io = [(128, 64), (128, 64), (128, 64), (128, 1)]
    decoder_stages = []
    for j, (ci, co) in enumerate(dec_io):
        per_dec = [make_gated_trans_conv_params(keys[4 + 4 * d + j], ci, co)
                   for d in range(2)]
        decoder_stages.append(dict(
            w=jnp.stack([p["w"] for p in per_dec]),    # [2, 4*Cout, 4*Cin] bf16
            b=jnp.stack([p["b"] for p in per_dec]),    # [2, 4*Cout, 1] f32
        ))
    gru = make_gru_params(keys[12], 64 * 15)
    return dict(encoder=encoder, decoder_stages=decoder_stages, gru=gru)


# ----------------------------------------------------------------------------
# Full forward (mirrors OnlineGCRN.forward)
# ----------------------------------------------------------------------------
def online_gcrn_forward(x, x_prev_enc, x_prev_dec, h_prev_gru, params):
    encoder_outputs = []
    x_prev_enc_out = []
    for i, p in enumerate(params["encoder"]):
        y, xp = apply_encoder_block(x, x_prev_enc[i], p)
        x_prev_enc_out.append(xp)
        encoder_outputs.append(y)
        x = y

    B, C, Fb = x.shape
    xf = x.reshape(B, C * Fb)
    h0 = h_prev_gru[0]                              # [B, H]
    hn = gru_cell_pallas(xf, h0, params["gru"])     # GRU step (output == new h)
    h_new = hn[None]                                # [1, B, H]
    r = hn.reshape(B, C, Fb).astype(jnp.bfloat16)

    # Decoders: both run per stage through one grid=(2,) "parallel" pallas_call.
    xd = [r, r]
    x_prev_dec_out = [[], []]
    n_stages = len(params["decoder_stages"])
    for j, pstage in enumerate(params["decoder_stages"]):
        skip = encoder_outputs[-1 - j]
        zs = []
        Fp1 = None
        for i in range(2):
            xin = jnp.concatenate([xd[i], skip], axis=1)     # [B, 128, F] bf16
            x_prev_dec_out[i].append(xin)                    # x_prev = conv input
            prev = x_prev_dec[i][j].astype(jnp.bfloat16)
            xcol, Fp1 = _im2col(xin, 2, 1, 1)                # [2*Cin, B*(F+1)]
            pcol, _ = _im2col(prev, 2, 1, 1)
            zs.append(jnp.concatenate([pcol, xcol], axis=0))
        z2 = _pad_cols(jnp.stack(zs, axis=0))                # [2, 4*Cin, Npad]
        out_dtype = jnp.float32 if j == n_stages - 1 else jnp.bfloat16
        y2 = gated_conv_pair_pallas(z2, pstage, out_dtype)   # [2, 2*Cout, Npad]
        cout = y2.shape[1] // 2
        n = B * Fp1
        F = Fp1 - 1
        new_xd = []
        for i in range(2):
            ye = y2[i, :cout, :n].reshape(cout, B, Fp1)      # even phase (F+1)
            yo = y2[i, cout:, :n].reshape(cout, B, Fp1)      # odd phase (use F)
            body = jnp.stack([ye[..., :F], yo[..., :F]],
                             axis=-1).reshape(cout, B, 2 * F)
            full = jnp.concatenate([body, ye[..., F:]], axis=-1)  # [cout,B,2F+1]
            new_xd.append(full.transpose(1, 0, 2))
        xd = new_xd
    decoder_outputs = xd

    return decoder_outputs, x_prev_enc_out, x_prev_dec_out, h_new


# ----------------------------------------------------------------------------
# Example run
# ----------------------------------------------------------------------------
if __name__ == "__main__":
    key = jax.random.PRNGKey(0)
    kp, kx = jax.random.split(key)
    params = make_params(kp)

    B = 1
    x = jax.random.normal(kx, (B, 16, 255), jnp.float32)

    # Streaming state (matches the module-level buffers in the reference).
    x_prev_enc = [jnp.zeros((B, 16, 255), jnp.float32),
                  jnp.zeros((B, 64, 127), jnp.float32),
                  jnp.zeros((B, 64, 63), jnp.float32),
                  jnp.zeros((B, 64, 31), jnp.float32)]
    x_prev_dec = [[jnp.zeros((B, 128, 15), jnp.float32),
                   jnp.zeros((B, 128, 31), jnp.float32),
                   jnp.zeros((B, 128, 63), jnp.float32),
                   jnp.zeros((B, 128, 127), jnp.float32)] for _ in range(2)]
    h_prev_gru = jnp.zeros((1, B, 64 * 15), jnp.float32)

    fwd = jax.jit(online_gcrn_forward)
    out = fwd(x, x_prev_enc, x_prev_dec, h_prev_gru, params)
    out = jax.block_until_ready(out)

    dec_outs, xpe, xpd, h_new = out
    assert dec_outs[0].shape == (B, 1, 255) and dec_outs[1].shape == (B, 1, 255)
    assert h_new.shape == (1, B, 960)
    assert all(a.shape == b.shape for a, b in zip(xpe, x_prev_enc))
    assert all(a.shape == b.shape
               for pa, pb in zip(xpd, x_prev_dec) for a, b in zip(pa, pb))
    assert all(bool(jnp.all(jnp.isfinite(d))) for d in dec_outs)
    assert bool(jnp.all(jnp.isfinite(h_new)))
    print("KERNEL_OK")
</pallas_src>

<mosaic_0001>
module attributes {stable_mosaic.version = 11 : i64} {
  func.func @_gated_conv_kernel(%arg0: memref<96x128xbf16, #tpu.memory_space<vmem>>, %arg1: memref<128x96xbf16, #tpu.memory_space<vmem>>, %arg2: memref<128x1xf32, #tpu.memory_space<vmem>>, %arg3: memref<64x128xbf16, #tpu.memory_space<vmem>>) attributes {dimension_semantics = [], scalar_prefetch = 0 : i64, scratch_operands = 0 : i64, tpu.core_type = #tpu.core_type<tc>} {
    %c0 = arith.constant 0 : index
    %c0_0 = arith.constant 0 : index
    %0 = vector.load %arg1[%c0, %c0_0] : memref<128x96xbf16, #tpu.memory_space<vmem>>, vector<128x96xbf16>
    %c0_1 = arith.constant 0 : index
    %c0_2 = arith.constant 0 : index
    %1 = vector.load %arg0[%c0_1, %c0_2] : memref<96x128xbf16, #tpu.memory_space<vmem>>, vector<96x128xbf16>
    %cst = arith.constant dense<0.000000e+00> : vector<128x128xf32>
    %2 = tpu.matmul %0, %1, %cst {dimension_numbers = #tpu.dot_dimension_numbers<[1], [0], [0], [1], [0, 0, 1, 1], [], []>} : vector<128x96xbf16>, vector<96x128xbf16>, vector<128x128xf32> -> vector<128x128xf32>
    %c0_3 = arith.constant 0 : index
    %c0_4 = arith.constant 0 : index
    %3 = vector.load %arg2[%c0_3, %c0_4] : memref<128x1xf32, #tpu.memory_space<vmem>>, vector<128x1xf32>
    %4 = vector.broadcast %3 : vector<128x1xf32> to vector<128x128xf32>
    %5 = arith.addf %2, %4 : vector<128x128xf32>
    %6 = vector.extract_strided_slice %5 {offsets = [0, 0], sizes = [64, 128], strides = [1, 1]} : vector<128x128xf32> to vector<64x128xf32>
    %7 = vector.extract_strided_slice %5 {offsets = [64, 0], sizes = [64, 128], strides = [1, 1]} : vector<128x128xf32> to vector<64x128xf32>
    %8 = arith.negf %7 : vector<64x128xf32>
    %9 = math.exp %8 : vector<64x128xf32>
    %cst_5 = arith.constant 1.000000e+00 : f32
    %10 = vector.broadcast %cst_5 : f32 to vector<64x128xf32>
    %11 = arith.addf %10, %9 : vector<64x128xf32>
    %12 = arith.divf %10, %11 : vector<64x128xf32>
    %13 = arith.mulf %12, %6 : vector<64x128xf32>
    %cst_6 = arith.constant 0.000000e+00 : f32
    %14 = vector.broadcast %cst_6 : f32 to vector<64x128xf32>
    %15 = arith.cmpf ogt, %13, %14 : vector<64x128xf32>
    %cst_7 = arith.constant 0.000000e+00 : f32
    %16 = vector.broadcast %cst_7 : f32 to vector<64x128xf32>
    %17 = arith.minimumf %13, %16 : vector<64x128xf32>
    %18 = math.exp %17 : vector<64x128xf32>
    %cst_8 = arith.constant 1.000000e+00 : f32
    %19 = vector.broadcast %cst_8 : f32 to vector<64x128xf32>
    %20 = arith.subf %18, %19 : vector<64x128xf32>
    %21 = arith.select %15, %13, %20 : vector<64x128xi1>, vector<64x128xf32>
    %cst_9 = arith.constant 0.000000e+00 : f32
    %22 = vector.broadcast %cst_9 : f32 to vector<64x128xf32>
    %23 = arith.cmpf ogt, %21, %22 : vector<64x128xf32>
    %cst_10 = arith.constant 0.000000e+00 : f32
    %24 = vector.broadcast %cst_10 : f32 to vector<64x128xf32>
    %25 = arith.minimumf %21, %24 : vector<64x128xf32>
    %26 = math.exp %25 : vector<64x128xf32>
    %cst_11 = arith.constant 1.000000e+00 : f32
    %27 = vector.broadcast %cst_11 : f32 to vector<64x128xf32>
    %28 = arith.subf %26, %27 : vector<64x128xf32>
    %29 = arith.select %23, %21, %28 : vector<64x128xi1>, vector<64x128xf32>
    %30 = arith.truncf %29 : vector<64x128xf32> to vector<64x128xbf16>
    %c0_12 = arith.constant 0 : index
    %c0_13 = arith.constant 0 : index
    %31 = vector.load %arg3[%c0_12, %c0_13] : memref<64x128xbf16, #tpu.memory_space<vmem>>, vector<64x128xbf16>
    tpu.vector_store %arg3[%c0_12, %c0_13], %30 {strides = array<i32>} : memref<64x128xbf16, #tpu.memory_space<vmem>>, vector<64x128xbf16>,
    return
  }
}

module attributes {stable_mosaic.version = 11 : i64} {
  func.func @_gated_conv_kernel(%arg0: memref<384x128xbf16, #tpu.memory_space<vmem>>, %arg1: memref<128x384xbf16, #tpu.memory_space<vmem>>, %arg2: memref<128x1xf32, #tpu.memory_space<vmem>>, %arg3: memref<64x128xbf16, #tpu.memory_space<vmem>>) attributes {dimension_semantics = [], scalar_prefetch = 0 : i64, scratch_operands = 0 : i64, tpu.core_type = #tpu.core_type<tc>} {
    %c0 = arith.constant 0 : index
    %c0_0 = arith.constant 0 : index
    %0 = vector.load %arg1[%c0, %c0_0] : memref<128x384xbf16, #tpu.memory_space<vmem>>, vector<128x384xbf16>
    %c0_1 = arith.constant 0 : index
    %c0_2 = arith.constant 0 : index
    %1 = vector.load %arg0[%c0_1, %c0_2] : memref<384x128xbf16, #tpu.memory_space<vmem>>, vector<384x128xbf16>
    %cst = arith.constant dense<0.000000e+00> : vector<128x128xf32>
    %2 = tpu.matmul %0, %1, %cst {dimension_numbers = #tpu.dot_dimension_numbers<[1], [0], [0], [1], [0, 0, 1, 1], [], []>} : vector<128x384xbf16>, vector<384x128xbf16>, vector<128x128xf32> -> vector<128x128xf32>
    %c0_3 = arith.constant 0 : index
    %c0_4 = arith.constant 0 : index
    %3 = vector.load %arg2[%c0_3, %c0_4] : memref<128x1xf32, #tpu.memory_space<vmem>>, vector<128x1xf32>
    %4 = vector.broadcast %3 : vector<128x1xf32> to vector<128x128xf32>
    %5 = arith.addf %2, %4 : vector<128x128xf32>
    %6 = vector.extract_strided_slice %5 {offsets = [0, 0], sizes = [64, 128], strides = [1, 1]} : vector<128x128xf32> to vector<64x128xf32>
    %7 = vector.extract_strided_slice %5 {offsets = [64, 0], sizes = [64, 128], strides = [1, 1]} : vector<128x128xf32> to vector<64x128xf32>
    %8 = arith.negf %7 : vector<64x128xf32>
    %9 = math.exp %8 : vector<64x128xf32>
    %cst_5 = arith.constant 1.000000e+00 : f32
    %10 = vector.broadcast %cst_5 : f32 to vector<64x128xf32>
    %11 = arith.addf %10, %9 : vector<64x128xf32>
    %12 = arith.divf %10, %11 : vector<64x128xf32>
    %13 = arith.mulf %12, %6 : vector<64x128xf32>
    %cst_6 = arith.constant 0.000000e+00 : f32
    %14 = vector.broadcast %cst_6 : f32 to vector<64x128xf32>
    %15 = arith.cmpf ogt, %13, %14 : vector<64x128xf32>
    %cst_7 = arith.constant 0.000000e+00 : f32
    %16 = vector.broadcast %cst_7 : f32 to vector<64x128xf32>
    %17 = arith.minimumf %13, %16 : vector<64x128xf32>
    %18 = math.exp %17 : vector<64x128xf32>
    %cst_8 = arith.constant 1.000000e+00 : f32
    %19 = vector.broadcast %cst_8 : f32 to vector<64x128xf32>
    %20 = arith.subf %18, %19 : vector<64x128xf32>
    %21 = arith.select %15, %13, %20 : vector<64x128xi1>, vector<64x128xf32>
    %cst_9 = arith.constant 0.000000e+00 : f32
    %22 = vector.broadcast %cst_9 : f32 to vector<64x128xf32>
    %23 = arith.cmpf ogt, %21, %22 : vector<64x128xf32>
    %cst_10 = arith.constant 0.000000e+00 : f32
    %24 = vector.broadcast %cst_10 : f32 to vector<64x128xf32>
    %25 = arith.minimumf %21, %24 : vector<64x128xf32>
    %26 = math.exp %25 : vector<64x128xf32>
    %cst_11 = arith.constant 1.000000e+00 : f32
    %27 = vector.broadcast %cst_11 : f32 to vector<64x128xf32>
    %28 = arith.subf %26, %27 : vector<64x128xf32>
    %29 = arith.select %23, %21, %28 : vector<64x128xi1>, vector<64x128xf32>
    %30 = arith.truncf %29 : vector<64x128xf32> to vector<64x128xbf16>
    %c0_12 = arith.constant 0 : index
    %c0_13 = arith.constant 0 : index
    %31 = vector.load %arg3[%c0_12, %c0_13] : memref<64x128xbf16, #tpu.memory_space<vmem>>, vector<64x128xbf16>
    tpu.vector_store %arg3[%c0_12, %c0_13], %30 {strides = array<i32>} : memref<64x128xbf16, #tpu.memory_space<vmem>>, vector<64x128xbf16>,
    return
  }
}

module attributes {stable_mosaic.version = 11 : i64} {
  func.func @_gru_kernel(%arg0: i32, %arg1: memref<1x960xbf16, #tpu.memory_space<vmem>>, %arg2: memref<1x960xbf16, #tpu.memory_space<vmem>>, %arg3: memref<960x384xi8, #tpu.memory_space<vmem>>, %arg4: memref<960x384xi8, #tpu.memory_space<vmem>>, %arg5: memref<1x384xf32, #tpu.memory_space<vmem>>, %arg6: memref<1x384xf32, #tpu.memory_space<vmem>>, %arg7: memref<1x384xf32, #tpu.memory_space<vmem>>, %arg8: memref<1x384xf32, #tpu.memory_space<vmem>>, %arg9: memref<1x128xf32, #tpu.memory_space<vmem>>, %arg10: memref<1x128xf32, #tpu.memory_space<vmem>>) attributes {dimension_semantics = [#tpu.dimension_semantics<parallel>], iteration_bounds = array<i64: 8>, scalar_prefetch = 0 : i64, scratch_operands = 0 : i64, tpu.core_type = #tpu.core_type<tc>, window_params = [{pipeline_mode = #tpu.pipeline_mode<synchronous>, transform_indices = @transform_0, window_bounds = array<i64: 1, 960>}, {pipeline_mode = #tpu.pipeline_mode<synchronous>, transform_indices = @transform_1, window_bounds = array<i64: 1, 960>}, {transform_indices = @transform_2, window_bounds = array<i64: 960, 384>}, {transform_indices = @transform_3, window_bounds = array<i64: 960, 384>}, {transform_indices = @transform_4, window_bounds = array<i64: 1, 384>}, {transform_indices = @transform_5, window_bounds = array<i64: 1, 384>}, {transform_indices = @transform_6, window_bounds = array<i64: 1, 384>}, {transform_indices = @transform_7, window_bounds = array<i64: 1, 384>}, {transform_indices = @transform_8, window_bounds = array<i64: 1, 128>}, {transform_indices = @transform_9, window_bounds = array<i64: 1, 128>}]} {
    %c0 = arith.constant 0 : index
    %c0_0 = arith.constant 0 : index
    %0 = vector.load %arg3[%c0, %c0_0] : memref<960x384xi8, #tpu.memory_space<vmem>>, vector<960x384xi8>
    %1 = arith.sitofp %0 : vector<960x384xi8> to vector<960x384xbf16>
    %c0_1 = arith.constant 0 : index
    %c0_2 = arith.constant 0 : index
    %2 = vector.load %arg4[%c0_1, %c0_2] : memref<960x384xi8, #tpu.memory_space<vmem>>, vector<960x384xi8>
    %3 = arith.sitofp %2 : vector<960x384xi8> to vector<960x384xbf16>
    %c0_3 = arith.constant 0 : index
    %c0_4 = arith.constant 0 : index
    %4 = vector.load %arg1[%c0_3, %c0_4] : memref<1x960xbf16, #tpu.memory_space<vmem>>, vector<1x960xbf16>
    %cst = arith.constant dense<0.000000e+00> : vector<1x384xf32>
    %5 = tpu.matmul %4, %1, %cst {dimension_numbers = #tpu.dot_dimension_numbers<[1], [0], [0], [1], [0, 0, 1, 1], [], []>} : vector<1x960xbf16>, vector<960x384xbf16>, vector<1x384xf32> -> vector<1x384xf32>
    %c0_5 = arith.constant 0 : index
    %c0_6 = arith.constant 0 : index
    %6 = vector.load %arg5[%c0_5, %c0_6] : memref<1x384xf32, #tpu.memory_space<vmem>>, vector<1x384xf32>
    %7 = arith.mulf %5, %6 : vector<1x384xf32>
    %c0_7 = arith.constant 0 : index
    %c0_8 = arith.constant 0 : index
    %8 = vector.load %arg7[%c0_7, %c0_8] : memref<1x384xf32, #tpu.memory_space<vmem>>, vector<1x384xf32>
    %9 = arith.addf %7, %8 : vector<1x384xf32>
    %c0_9 = arith.constant 0 : index
    %c0_10 = arith.constant 0 : index
    %10 = vector.load %arg2[%c0_9, %c0_10] : memref<1x960xbf16, #tpu.memory_space<vmem>>, vector<1x960xbf16>
    %cst_11 = arith.constant dense<0.000000e+00> : vector<1x384xf32>
    %11 = tpu.matmul %10, %3, %cst_11 {dimension_numbers = #tpu.dot_dimension_numbers<[1], [0], [0], [1], [0, 0, 1, 1], [], []>} : vector<1x960xbf16>, vector<960x384xbf16>, vector<1x384xf32> -> vector<1x384xf32>
    %c0_12 = arith.constant 0 : index
    %c0_13 = arith.constant 0 : index
    %12 = vector.load %arg6[%c0_12, %c0_13] : memref<1x384xf32, #tpu.memory_space<vmem>>, vector<1x384xf32>
    %13 = arith.mulf %11, %12 : vector<1x384xf32>
    %c0_14 = arith.constant 0 : index
    %c0_15 = arith.constant 0 : index
    %14 = vector.load %arg8[%c0_14, %c0_15] : memref<1x384xf32, #tpu.memory_space<vmem>>, vector<1x384xf32>
    %15 = arith.addf %13, %14 : vector<1x384xf32>
    %16 = vector.extract_strided_slice %9 {offsets = [0, 0], sizes = [1, 128], strides = [1, 1]} : vector<1x384xf32> to vector<1x128xf32>
    %17 = vector.extract_strided_slice %9 {offsets = [0, 128], sizes = [1, 128], strides = [1, 1]} : vector<1x384xf32> to vector<1x128xf32>
    %18 = vector.extract_strided_slice %9 {offsets = [0, 256], sizes = [1, 128], strides = [1, 1]} : vector<1x384xf32> to vector<1x128xf32>
    %19 = vector.extract_strided_slice %15 {offsets = [0, 0], sizes = [1, 128], strides = [1, 1]} : vector<1x384xf32> to vector<1x128xf32>
    %20 = vector.extract_strided_slice %15 {offsets = [0, 128], sizes = [1, 128], strides = [1, 1]} : vector<1x384xf32> to vector<1x128xf32>
    %21 = vector.extract_strided_slice %15 {offsets = [0, 256], sizes = [1, 128], strides = [1, 1]} : vector<1x384xf32> to vector<1x128xf32>
    %22 = arith.addf %16, %19 : vector<1x128xf32>
    %23 = arith.negf %22 : vector<1x128xf32>
    %24 = math.exp %23 : vector<1x128xf32>
    %cst_16 = arith.constant 1.000000e+00 : f32
    %25 = vector.broadcast %cst_16 : f32 to vector<1x128xf32>
    %26 = arith.addf %25, %24 : vector<1x128xf32>
    %27 = arith.divf %25, %26 : vector<1x128xf32>
    %28 = arith.addf %17, %20 : vector<1x128xf32>
    %29 = arith.negf %28 : vector<1x128xf32>
    %30 = math.exp %29 : vector<1x128xf32>
    %cst_17 = arith.constant 1.000000e+00 : f32
    %31 = vector.broadcast %cst_17 : f32 to vector<1x128xf32>
    %32 = arith.addf %31, %30 : vector<1x128xf32>
    %33 = arith.divf %31, %32 : vector<1x128xf32>
    %34 = arith.mulf %27, %21 : vector<1x128xf32>
    %35 = arith.addf %18, %34 : vector<1x128xf32>
    %36 = math.tanh %35 : vector<1x128xf32>
    %cst_18 = arith.constant 1.000000e+00 : f32
    %37 = vector.broadcast %cst_18 : f32 to vector<1x128xf32>
    %38 = arith.subf %37, %33 : vector<1x128xf32>
    %39 = arith.mulf %38, %36 : vector<1x128xf32>
    %c0_19 = arith.constant 0 : index
    %c0_20 = arith.constant 0 : index
    %40 = vector.load %arg9[%c0_19, %c0_20] : memref<1x128xf32, #tpu.memory_space<vmem>>, vector<1x128xf32>
    %41 = arith.mulf %33, %40 : vector<1x128xf32>
    %42 = arith.addf %39, %41 : vector<1x128xf32>
    %c0_21 = arith.constant 0 : index
    %c0_22 = arith.constant 0 : index
    %43 = vector.load %arg10[%c0_21, %c0_22] : memref<1x128xf32, #tpu.memory_space<vmem>>, vector<1x128xf32>
    tpu.vector_store %arg10[%c0_21, %c0_22], %42 {strides = array<i32>} : memref<1x128xf32, #tpu.memory_space<vmem>>, vector<1x128xf32>,
    return
  }
  func.func @transform_0(%arg0: i32) -> (i32, i32) {
    %c0_i32 = arith.constant 0 : i32
    %c0_i32_0 = arith.constant 0 : i32
    %c0_i32_1 = arith.constant 0 : i32
    return %c0_i32, %c0_i32_0 : i32, i32
  }
  func.func @transform_1(%arg0: i32) -> (i32, i32) {
    %c0_i32 = arith.constant 0 : i32
    %c0_i32_0 = arith.constant 0 : i32
    %c0_i32_1 = arith.constant 0 : i32
    return %c0_i32, %c0_i32_0 : i32, i32
  }
  func.func @transform_2(%arg0: i32) -> (i32, i32) {
    %c0_i32 = arith.constant 0 : i32
    %c0_i32_0 = arith.constant 0 : i32
    return %c0_i32, %arg0 : i32, i32
  }
  func.func @transform_3(%arg0: i32) -> (i32, i32) {
    %c0_i32 = arith.constant 0 : i32
    %c0_i32_0 = arith.constant 0 : i32
    return %c0_i32, %arg0 : i32, i32
  }
  func.func @transform_4(%arg0: i32) -> (i32, i32) {
    %c0_i32 = arith.constant 0 : i32
    %c0_i32_0 = arith.constant 0 : i32
    return %c0_i32, %arg0 : i32, i32
  }
  func.func @transform_5(%arg0: i32) -> (i32, i32) {
    %c0_i32 = arith.constant 0 : i32
    %c0_i32_0 = arith.constant 0 : i32
    return %c0_i32, %arg0 : i32, i32
  }
  func.func @transform_6(%arg0: i32) -> (i32, i32) {
    %c0_i32 = arith.constant 0 : i32
    %c0_i32_0 = arith.constant 0 : i32
    return %c0_i32, %arg0 : i32, i32
  }
  func.func @transform_7(%arg0: i32) -> (i32, i32) {
    %c0_i32 = arith.constant 0 : i32
    %c0_i32_0 = arith.constant 0 : i32
    return %c0_i32, %arg0 : i32, i32
  }
  func.func @transform_8(%arg0: i32) -> (i32, i32) {
    %c0_i32 = arith.constant 0 : i32
    %c0_i32_0 = arith.constant 0 : i32
    return %c0_i32, %arg0 : i32, i32
  }
  func.func @transform_9(%arg0: i32) -> (i32, i32) {
    %c0_i32 = arith.constant 0 : i32
    %c0_i32_0 = arith.constant 0 : i32
    return %c0_i32, %arg0 : i32, i32
  }
}

module attributes {stable_mosaic.version = 11 : i64} {
  func.func @_gated_conv_kernel(%arg0: i32, %arg1: memref<1x512x128xbf16, #tpu.memory_space<vmem>>, %arg2: memref<1x256x512xbf16, #tpu.memory_space<vmem>>, %arg3: memref<1x256x1xf32, #tpu.memory_space<vmem>>, %arg4: memref<1x128x128xbf16, #tpu.memory_space<vmem>>) attributes {dimension_semantics = [#tpu.dimension_semantics<parallel>], iteration_bounds = array<i64: 2>, scalar_prefetch = 0 : i64, scratch_operands = 0 : i64, tpu.core_type = #tpu.core_type<tc>, window_params = [{transform_indices = @transform_0, window_bounds = array<i64: 1, 512, 128>}, {transform_indices = @transform_1, window_bounds = array<i64: 1, 256, 512>}, {transform_indices = @transform_2, window_bounds = array<i64: 1, 256, 1>}, {transform_indices = @transform_3, window_bounds = array<i64: 1, 128, 128>}]} {
    %c0 = arith.constant 0 : index
    %c0_0 = arith.constant 0 : index
    %c0_1 = arith.constant 0 : index
    %0 = vector.load %arg2[%c0, %c0_0, %c0_1] : memref<1x256x512xbf16, #tpu.memory_space<vmem>>, vector<1x256x512xbf16>
    %1 = vector.shape_cast %0 : vector<1x256x512xbf16> to vector<256x512xbf16>
    %c0_2 = arith.constant 0 : index
    %c0_3 = arith.constant 0 : index
    %c0_4 = arith.constant 0 : index
    %2 = vector.load %arg1[%c0_2, %c0_3, %c0_4] : memref<1x512x128xbf16, #tpu.memory_space<vmem>>, vector<1x512x128xbf16>
    %3 = vector.shape_cast %2 : vector<1x512x128xbf16> to vector<512x128xbf16>
    %cst = arith.constant dense<0.000000e+00> : vector<256x128xf32>
    %4 = tpu.matmul %1, %3, %cst {dimension_numbers = #tpu.dot_dimension_numbers<[1], [0], [0], [1], [0, 0, 1, 1], [], []>} : vector<256x512xbf16>, vector<512x128xbf16>, vector<256x128xf32> -> vector<256x128xf32>
    %c0_5 = arith.constant 0 : index
    %c0_6 = arith.constant 0 : index
    %c0_7 = arith.constant 0 : index
    %5 = vector.load %arg3[%c0_5, %c0_6, %c0_7] : memref<1x256x1xf32, #tpu.memory_space<vmem>>, vector<1x256x1xf32>
    %6 = vector.shape_cast %5 : vector<1x256x1xf32> to vector<256x1xf32>
    %7 = vector.broadcast %6 : vector<256x1xf32> to vector<256x128xf32>
    %8 = arith.addf %4, %7 : vector<256x128xf32>
    %9 = vector.extract_strided_slice %8 {offsets = [0, 0], sizes = [128, 128], strides = [1, 1]} : vector<256x128xf32> to vector<128x128xf32>
    %10 = vector.extract_strided_slice %8 {offsets = [128, 0], sizes = [128, 128], strides = [1, 1]} : vector<256x128xf32> to vector<128x128xf32>
    %11 = arith.negf %10 : vector<128x128xf32>
    %12 = math.exp %11 : vector<128x128xf32>
    %cst_8 = arith.constant 1.000000e+00 : f32
    %13 = vector.broadcast %cst_8 : f32 to vector<128x128xf32>
    %14 = arith.addf %13, %12 : vector<128x128xf32>
    %15 = arith.divf %13, %14 : vector<128x128xf32>
    %16 = arith.mulf %15, %9 : vector<128x128xf32>
    %cst_9 = arith.constant 0.000000e+00 : f32
    %17 = vector.broadcast %cst_9 : f32 to vector<128x128xf32>
    %18 = arith.cmpf ogt, %16, %17 : vector<128x128xf32>
    %cst_10 = arith.constant 0.000000e+00 : f32
    %19 = vector.broadcast %cst_10 : f32 to vector<128x128xf32>
    %20 = arith.minimumf %16, %19 : vector<128x128xf32>
    %21 = math.exp %20 : vector<128x128xf32>
    %cst_11 = arith.constant 1.000000e+00 : f32
    %22 = vector.broadcast %cst_11 : f32 to vector<128x128xf32>
    %23 = arith.subf %21, %22 : vector<128x128xf32>
    %24 = arith.select %18, %16, %23 : vector<128x128xi1>, vector<128x128xf32>
    %cst_12 = arith.constant 0.000000e+00 : f32
    %25 = vector.broadcast %cst_12 : f32 to vector<128x128xf32>
    %26 = arith.cmpf ogt, %24, %25 : vector<128x128xf32>
    %cst_13 = arith.constant 0.000000e+00 : f32
    %27 = vector.broadcast %cst_13 : f32 to vector<128x128xf32>
    %28 = arith.minimumf %24, %27 : vector<128x128xf32>
    %29 = math.exp %28 : vector<128x128xf32>
    %cst_14 = arith.constant 1.000000e+00 : f32
    %30 = vector.broadcast %cst_14 : f32 to vector<128x128xf32>
    %31 = arith.subf %29, %30 : vector<128x128xf32>
    %32 = arith.select %26, %24, %31 : vector<128x128xi1>, vector<128x128xf32>
    %33 = arith.truncf %32 : vector<128x128xf32> to vector<128x128xbf16>
    %c0_15 = arith.constant 0 : index
    %c0_16 = arith.constant 0 : index
    %c0_17 = arith.constant 0 : index
    %34 = vector.load %arg4[%c0_15, %c0_16, %c0_17] : memref<1x128x128xbf16, #tpu.memory_space<vmem>>, vector<1x128x128xbf16>
    %35 = vector.shape_cast %34 : vector<1x128x128xbf16> to vector<128x128xbf16>
    %36 = vector.shape_cast %33 : vector<128x128xbf16> to vector<1x128x128xbf16>
    tpu.vector_store %arg4[%c0_15, %c0_16, %c0_17], %36 {strides = array<i32>} : memref<1x128x128xbf16, #tpu.memory_space<vmem>>, vector<1x128x128xbf16>,
    return
  }
  func.func @transform_0(%arg0: i32) -> (i32, i32, i32) {
    %c0_i32 = arith.constant 0 : i32
    %c0_i32_0 = arith.constant 0 : i32
    %c0_i32_1 = arith.constant 0 : i32
    return %arg0, %c0_i32, %c0_i32_0 : i32, i32, i32
  }
  func.func @transform_1(%arg0: i32) -> (i32, i32, i32) {
    %c0_i32 = arith.constant 0 : i32
    %c0_i32_0 = arith.constant 0 : i32
    %c0_i32_1 = arith.constant 0 : i32
    return %arg0, %c0_i32, %c0_i32_0 : i32, i32, i32
  }
  func.func @transform_2(%arg0: i32) -> (i32, i32, i32) {
    %c0_i32 = arith.constant 0 : i32
    %c0_i32_0 = arith.constant 0 : i32
    %c0_i32_1 = arith.constant 0 : i32
    return %arg0, %c0_i32, %c0_i32_0 : i32, i32, i32
  }
  func.func @transform_3(%arg0: i32) -> (i32, i32, i32) {
    %c0_i32 = arith.constant 0 : i32
    %c0_i32_0 = arith.constant 0 : i32
    %c0_i32_1 = arith.constant 0 : i32
    return %arg0, %c0_i32, %c0_i32_0 : i32, i32, i32
  }
}

module attributes {stable_mosaic.version = 11 : i64} {
  func.func @_gated_conv_kernel(%arg0: i32, %arg1: memref<1x512x128xbf16, #tpu.memory_space<vmem>>, %arg2: memref<1x4x512xbf16, #tpu.memory_space<vmem>>, %arg3: memref<1x4x1xf32, #tpu.memory_space<vmem>>, %arg4: memref<1x2x128xf32, #tpu.memory_space<vmem>>) attributes {dimension_semantics = [#tpu.dimension_semantics<parallel>], iteration_bounds = array<i64: 2>, scalar_prefetch = 0 : i64, scratch_operands = 0 : i64, tpu.core_type = #tpu.core_type<tc>, window_params = [{transform_indices = @transform_0, window_bounds = array<i64: 1, 512, 128>}, {transform_indices = @transform_1, window_bounds = array<i64: 1, 4, 512>}, {transform_indices = @transform_2, window_bounds = array<i64: 1, 4, 1>}, {transform_indices = @transform_3, window_bounds = array<i64: 1, 2, 128>}]} {
    %c0 = arith.constant 0 : index
    %c0_0 = arith.constant 0 : index
    %c0_1 = arith.constant 0 : index
    %0 = vector.load %arg2[%c0, %c0_0, %c0_1] : memref<1x4x512xbf16, #tpu.memory_space<vmem>>, vector<1x4x512xbf16>
    %1 = vector.shape_cast %0 : vector<1x4x512xbf16> to vector<4x512xbf16>
    %c0_2 = arith.constant 0 : index
    %c0_3 = arith.constant 0 : index
    %c0_4 = arith.constant 0 : index
    %2 = vector.load %arg1[%c0_2, %c0_3, %c0_4] : memref<1x512x128xbf16, #tpu.memory_space<vmem>>, vector<1x512x128xbf16>
    %3 = vector.shape_cast %2 : vector<1x512x128xbf16> to vector<512x128xbf16>
    %cst = arith.constant dense<0.000000e+00> : vector<4x128xf32>
    %4 = tpu.matmul %1, %3, %cst {dimension_numbers = #tpu.dot_dimension_numbers<[1], [0], [0], [1], [0, 0, 1, 1], [], []>} : vector<4x512xbf16>, vector<512x128xbf16>, vector<4x128xf32> -> vector<4x128xf32>
    %c0_5 = arith.constant 0 : index
    %c0_6 = arith.constant 0 : index
    %c0_7 = arith.constant 0 : index
    %5 = vector.load %arg3[%c0_5, %c0_6, %c0_7] : memref<1x4x1xf32, #tpu.memory_space<vmem>>, vector<1x4x1xf32>
    %6 = vector.shape_cast %5 : vector<1x4x1xf32> to vector<4x1xf32>
    %7 = vector.broadcast %6 : vector<4x1xf32> to vector<4x128xf32>
    %8 = arith.addf %4, %7 : vector<4x128xf32>
    %9 = vector.extract_strided_slice %8 {offsets = [0, 0], sizes = [2, 128], strides = [1, 1]} : vector<4x128xf32> to vector<2x128xf32>
    %10 = vector.extract_strided_slice %8 {offsets = [2, 0], sizes = [2, 128], strides = [1, 1]} : vector<4x128xf32> to vector<2x128xf32>
    %11 = arith.negf %10 : vector<2x128xf32>
    %12 = math.exp %11 : vector<2x128xf32>
    %cst_8 = arith.constant 1.000000e+00 : f32
    %13 = vector.broadcast %cst_8 : f32 to vector<2x128xf32>
    %14 = arith.addf %13, %12 : vector<2x128xf32>
    %15 = arith.divf %13, %14 : vector<2x128xf32>
    %16 = arith.mulf %15, %9 : vector<2x128xf32>
    %cst_9 = arith.constant 0.000000e+00 : f32
    %17 = vector.broadcast %cst_9 : f32 to vector<2x128xf32>
    %18 = arith.cmpf ogt, %16, %17 : vector<2x128xf32>
    %cst_10 = arith.constant 0.000000e+00 : f32
    %19 = vector.broadcast %cst_10 : f32 to vector<2x128xf32>
    %20 = arith.minimumf %16, %19 : vector<2x128xf32>
    %21 = math.exp %20 : vector<2x128xf32>
    %cst_11 = arith.constant 1.000000e+00 : f32
    %22 = vector.broadcast %cst_11 : f32 to vector<2x128xf32>
    %23 = arith.subf %21, %22 : vector<2x128xf32>
    %24 = arith.select %18, %16, %23 : vector<2x128xi1>, vector<2x128xf32>
    %cst_12 = arith.constant 0.000000e+00 : f32
    %25 = vector.broadcast %cst_12 : f32 to vector<2x128xf32>
    %26 = arith.cmpf ogt, %24, %25 : vector<2x128xf32>
    %cst_13 = arith.constant 0.000000e+00 : f32
    %27 = vector.broadcast %cst_13 : f32 to vector<2x128xf32>
    %28 = arith.minimumf %24, %27 : vector<2x128xf32>
    %29 = math.exp %28 : vector<2x128xf32>
    %cst_14 = arith.constant 1.000000e+00 : f32
    %30 = vector.broadcast %cst_14 : f32 to vector<2x128xf32>
    %31 = arith.subf %29, %30 : vector<2x128xf32>
    %32 = arith.select %26, %24, %31 : vector<2x128xi1>, vector<2x128xf32>
    %c0_15 = arith.constant 0 : index
    %c0_16 = arith.constant 0 : index
    %c0_17 = arith.constant 0 : index
    %33 = vector.load %arg4[%c0_15, %c0_16, %c0_17] : memref<1x2x128xf32, #tpu.memory_space<vmem>>, vector<1x2x128xf32>
    %34 = vector.shape_cast %33 : vector<1x2x128xf32> to vector<2x128xf32>
    %35 = vector.shape_cast %32 : vector<2x128xf32> to vector<1x2x128xf32>
    tpu.vector_store %arg4[%c0_15, %c0_16, %c0_17], %35 {strides = array<i32>} : memref<1x2x128xf32, #tpu.memory_space<vmem>>, vector<1x2x128xf32>,
    return
  }
  func.func @transform_0(%arg0: i32) -> (i32, i32, i32) {
    %c0_i32 = arith.constant 0 : i32
    %c0_i32_0 = arith.constant 0 : i32
    %c0_i32_1 = arith.constant 0 : i32
    return %arg0, %c0_i32, %c0_i32_0 : i32, i32, i32
  }
  func.func @transform_1(%arg0: i32) -> (i32, i32, i32) {
    %c0_i32 = arith.constant 0 : i32
    %c0_i32_0 = arith.constant 0 : i32
    %c0_i32_1 = arith.constant 0 : i32
    return %arg0, %c0_i32, %c0_i32_0 : i32, i32, i32
  }
  func.func @transform_2(%arg0: i32) -> (i32, i32, i32) {
    %c0_i32 = arith.constant 0 : i32
    %c0_i32_0 = arith.constant 0 : i32
    %c0_i32_1 = arith.constant 0 : i32
    return %arg0, %c0_i32, %c0_i32_0 : i32, i32, i32
  }
  func.func @transform_3(%arg0: i32) -> (i32, i32, i32) {
    %c0_i32 = arith.constant 0 : i32
    %c0_i32_0 = arith.constant 0 : i32
    %c0_i32_1 = arith.constant 0 : i32
    return %arg0, %c0_i32, %c0_i32_0 : i32, i32, i32
  }
}

</mosaic_0001>

<llo_original>
// kernel: online_gcrn_forward.9
$region0: #{online_gcrn_forward.9}
  #allocation0 [shape = 'u32[]', space=smem, size = 0x4, offset = 0x4, fixed_abs, tag = 'smem constant byte address 0x4 - core index']
  #allocation1 [shape = 'u32[144,128]{1,0:T(1,128)}', space=vmem, size = 0x12000, scoped, tag = 'internal scratch']
  %s0 = inlined_call_operand.vmem [shape: bf16[96,128], index: 0, kind: input, shape index: {}]
  %s1 = inlined_call_operand.vmem [shape: bf16[128,96], index: 1, kind: input, shape index: {}]
  %s2 = inlined_call_operand.vmem [shape: f32[128,1], index: 2, kind: input, shape index: {}]
  %s3 = inlined_call_operand.vmem [shape: bf16[64,128], index: 3, kind: output, shape index: {}]
  %s4 = sld [smem:[#allocation0]]
  $region22: #{online_gcrn_forward.9} parent=0
    _
  %s6 = ssub.s32 1, %s4
  %s7 = scalar_select 0, %s6, %s4
  // Predicated region
  $region2: #{online_gcrn_forward.9} parent=0 // pred_check
    _
  $region3: #{online_gcrn_forward.9} parent=0 // pred_check_branch
    %9 = sbr.rel (0) target = $region5
  $region4: #{online_gcrn_forward.9} parent=0 // pred_region
    _
  $region5: #{online_gcrn_forward.9} parent=0 // pred_fallthru
    _
  // Predicated region
  $region6: #{online_gcrn_forward.9} parent=0 // pred_check
    _
  $region7: #{online_gcrn_forward.9} parent=0 // pred_check_branch
    %11 = sbr.rel (0) target = $region9
  $region8: #{online_gcrn_forward.9} parent=0 // pred_region
    _
  $region9: #{online_gcrn_forward.9} parent=0 // pred_fallthru
    _
  // Predicated region
  $region10: #{online_gcrn_forward.9} parent=0 // pred_check
    _
  $region11: #{online_gcrn_forward.9} parent=0 // pred_check_branch
    %13 = sbr.rel (0) target = $region13
  $region12: #{online_gcrn_forward.9} parent=0 // pred_region
    _
  $region13: #{online_gcrn_forward.9} parent=0 // pred_fallthru
    _
  %v15 = vld [vmem:[%s1] sm:$0xf]
  %v16 = vld [vmem:[%s1 + $0x4] sm:$0xf]
  %v17 = vld [vmem:[%s1 + $0x8] sm:$0xf]
  %v18 = vld [vmem:[%s1 + $0xc] sm:$0xf]
  %v19 = vld [vmem:[%s1 + $0x10] sm:$0xf]
  %v20 = vld [vmem:[%s1 + $0x14] sm:$0xf]
  %v21 = vld [vmem:[%s1 + $0x18] sm:$0xf]
  %v22 = vld [vmem:[%s1 + $0x1c] sm:$0xf]
  %v23 = vld [vmem:[%s1 + $0x20] sm:$0xf]
  %v24 = vld [vmem:[%s1 + $0x24] sm:$0xf]
  %v25 = vld [vmem:[%s1 + $0x28] sm:$0xf]
  %v26 = vld [vmem:[%s1 + $0x2c] sm:$0xf]
  %v27 = vld [vmem:[%s1 + $0x30] sm:$0xf]
  %v28 = vld [vmem:[%s1 + $0x34] sm:$0xf]
  %v29 = vld [vmem:[%s1 + $0x38] sm:$0xf]
  %v30 = vld [vmem:[%s1 + $0x3c] sm:$0xf]
  %v31 = vld [vmem:[%s0] sm:$0xf]
  %v32 = vld [vmem:[%s0 + $0x4] sm:$0xf]
  %v33 = vld [vmem:[%s0 + $0x8] sm:$0xf]
  %v34 = vld [vmem:[%s0 + $0xc] sm:$0xf]
  %v35 = vld [vmem:[%s0 + $0x10] sm:$0xf]
  %v36 = vld [vmem:[%s0 + $0x14] sm:$0xf]
  %v37 = vld [vmem:[%s0 + $0x18] sm:$0xf]
  %v38 = vld [vmem:[%s0 + $0x1c] sm:$0xf]
  %v39 = vld [vmem:[%s0 + $0x20] sm:$0xf]
  %v40 = vld [vmem:[%s0 + $0x24] sm:$0xf]
  %v41 = vld [vmem:[%s0 + $0x28] sm:$0xf]
  %v42 = vld [vmem:[%s0 + $0x2c] sm:$0xf]
  %v43 = vld [vmem:[%s2] sm:$0xff]
  %v44 = vld [vmem:[%s2 + $0x8] sm:$0xff]
  %v45 = vld [vmem:[%s2 + $0x10] sm:$0xff]
  %v46 = vld [vmem:[%s2 + $0x18] sm:$0xff]
  %v47 = vld [vmem:[%s2 + $0x20] sm:$0xff]
  %v48 = vld [vmem:[%s2 + $0x28] sm:$0xff]
  %v49 = vld [vmem:[%s2 + $0x30] sm:$0xff]
  %v50 = vld [vmem:[%s2 + $0x38] sm:$0xff]
  %v51 = vld [vmem:[%s2 + $0x40] sm:$0xff]
  %v52 = vld [vmem:[%s2 + $0x48] sm:$0xff]
  %v53 = vld [vmem:[%s2 + $0x50] sm:$0xff]
  %v54 = vld [vmem:[%s2 + $0x58] sm:$0xff]
  %v55 = vld [vmem:[%s2 + $0x60] sm:$0xff]
  %v56 = vld [vmem:[%s2 + $0x68] sm:$0xff]
  %v57 = vld [vmem:[%s2 + $0x70] sm:$0xff]
  %v58 = vld [vmem:[%s2 + $0x78] sm:$0xff]
  %60 = vset.pattern.permute.xlu0 0
  %61 = vperm.xlu0 %60, %v43
  %v62 = vpop.permute.xlu0 %61
  %65 = vset.pattern.permute.xlu0 0
  %66 = vperm.xlu0 %65, %v44
  %v67 = vpop.permute.xlu0 %66
  %70 = vset.pattern.permute.xlu0 0
  %71 = vperm.xlu0 %70, %v45
  %v72 = vpop.permute.xlu0 %71
  %75 = vset.pattern.permute.xlu0 0
  %76 = vperm.xlu0 %75, %v46
  %v77 = vpop.permute.xlu0 %76
  %80 = vset.pattern.permute.xlu0 0
  %81 = vperm.xlu0 %80, %v47
  %v82 = vpop.permute.xlu0 %81
  %85 = vset.pattern.permute.xlu0 0
  %86 = vperm.xlu0 %85, %v48
  %v87 = vpop.permute.xlu0 %86
  %90 = vset.pattern.permute.xlu0 0
  %91 = vperm.xlu0 %90, %v49
  %v92 = vpop.permute.xlu0 %91
  %95 = vset.pattern.permute.xlu0 0
  %96 = vperm.xlu0 %95, %v50
  %v97 = vpop.permute.xlu0 %96
  %100 = vset.pattern.permute.xlu0 0
  %101 = vperm.xlu0 %100, %v51
  %v102 = vpop.permute.xlu0 %101
  %105 = vset.pattern.permute.xlu0 0
  %106 = vperm.xlu0 %105, %v52
  %v107 = vpop.permute.xlu0 %106
  %110 = vset.pattern.permute.xlu0 0
  %111 = vperm.xlu0 %110, %v53
  %v112 = vpop.permute.xlu0 %111
  %115 = vset.pattern.permute.xlu0 0
  %116 = vperm.xlu0 %115, %v54
  %v117 = vpop.permute.xlu0 %116
  %120 = vset.pattern.permute.xlu0 0
  %121 = vperm.xlu0 %120, %v55
  %v122 = vpop.permute.xlu0 %121
  %125 = vset.pattern.permute.xlu0 0
  %126 = vperm.xlu0 %125, %v56
  %v127 = vpop.permute.xlu0 %126
  %130 = vset.pattern.permute.xlu0 0
  %131 = vperm.xlu0 %130, %v57
  %v132 = vpop.permute.xlu0 %131
  %135 = vset.pattern.permute.xlu0 0
  %136 = vperm.xlu0 %135, %v58
  %v137 = vpop.permute.xlu0 %136
  %v155 = vunpack.c.l.b16 %v15
  %v156 = vunpack.c.l.b16 %v16
  %v157 = vunpack.c.l.b16 %v17
  %v158 = vunpack.c.l.b16 %v18
  %v159 = vunpack.c.l.b16 %v19
  %v160 = vunpack.c.l.b16 %v20
  %v161 = vunpack.c.l.b16 %v21
  %v162 = vunpack.c.l.b16 %v22
  %v163 = vunpack.c.l.b16 %v23
  %v164 = vunpack.c.l.b16 %v24
  %v165 = vunpack.c.l.b16 %v25
  %v166 = vunpack.c.l.b16 %v26
  %v167 = vunpack.c.l.b16 %v27
  %v168 = vunpack.c.l.b16 %v28
  %v169 = vunpack.c.l.b16 %v29
  %v170 = vunpack.c.l.b16 %v30
  %v171 = vpack.c.b16 %v156, %v155
  %v172 = vpack.c.b16 %v158, %v157
  %v173 = vpack.c.b16 %v160, %v159
  %v174 = vpack.c.b16 %v162, %v161
  %v175 = vpack.c.b16 %v164, %v163
  %v176 = vpack.c.b16 %v166, %v165
  %v177 = vpack.c.b16 %v168, %v167
  %v178 = vpack.c.b16 %v170, %v169
  %v191 = vunpack.c.l.b16 %v31
  %v192 = vunpack.c.l.b16 %v32
  %v193 = vunpack.c.l.b16 %v33
  %v194 = vunpack.c.l.b16 %v34
  %v195 = vunpack.c.l.b16 %v35
  %v196 = vunpack.c.l.b16 %v36
  %v197 = vunpack.c.l.b16 %v37
  %v198 = vunpack.c.l.b16 %v38
  %v199 = vunpack.c.l.b16 %v39
  %v200 = vunpack.c.l.b16 %v40
  %v201 = vunpack.c.l.b16 %v41
  %v202 = vunpack.c.l.b16 %v42
  %v203 = vpack.c.b16 %v192, %v191
  %v204 = vpack.c.b16 %v194, %v193
  %v205 = vpack.c.b16 %v196, %v195
  %v206 = vpack.c.b16 %v198, %v197
  %v207 = vpack.c.b16 %v200, %v199
  %v208 = vpack.c.b16 %v202, %v201
  %vm215 = vcmask 785408
  %v217 = vsel %vm215, %v171, 0
  %v220 = vsel %vm215, %v172, 0
  %v223 = vsel %vm215, %v173, 0
  %v226 = vsel %vm215, %v174, 0
  %v229 = vsel %vm215, %v175, 0
  %v232 = vsel %vm215, %v176, 0
  %v235 = vsel %vm215, %v177, 0
  %v238 = vsel %vm215, %v178, 0
  %240 = vmatprep.subr.bf16.mxu0 0
  %241 = vmatpush1.bf16.msra.mxu0 0
  %242 = vmatprep.subr.bf16.mxu0 0
  %243 = vmatpush1.bf16.msra.mxu0 0
  %244 = vmatprep.subr.bf16.mxu0 0
  %245 = vmatpush1.bf16.msra.mxu0 %v208
  %246 = vmatprep.subr.bf16.mxu0 0
  %247 = vmatpush1.bf16.msra.mxu0 %v207
  %248 = vmatprep.subr.bf16.mxu0 0
  %249 = vmatpush1.bf16.msra.mxu0 %v206
  %250 = vmatprep.subr.bf16.mxu0 0
  %251 = vmatpush1.bf16.msra.mxu0 %v205
  %252 = vmatprep.subr.bf16.mxu0 0
  %253 = vmatpush1.bf16.msra.mxu0 %v204
  %254 = vmatprep.subr.bf16.mxu0 0
  %255 = vmatpush1.bf16.msra.mxu0 %v203
  %256 = vmatprep.subr.bf16.mxu0 0
  %257 = vmatpush2.bf16.msra.mxu0 0
  %258 = vmatprep.subr.bf16.mxu0 0
  %259 = vmatpush2.bf16.msra.mxu0 0
  %260 = vmatprep.subr.bf16.mxu0 0
  %261 = vmatpush2.bf16.msra.mxu0 0
  %262 = vmatprep.subr.bf16.mxu0 0
  %263 = vmatpush2.bf16.msra.mxu0 0
  %264 = vmatprep.subr.bf16.mxu0 0
  %265 = vmatpush2.bf16.msra.mxu0 0
  %266 = vmatprep.subr.bf16.mxu0 0
  %267 = vmatpush2.bf16.msra.mxu0 0
  %268 = vmatprep.subr.bf16.mxu0 0
  %269 = vmatpush2.bf16.msra.mxu0 0
  %270 = vmatprep.subr.bf16.mxu0 0
  %271 = vmatpush2.bf16.msra.mxu0 0
  %272 = vmatprep.mubr.bf16.mxu0 0
  %273 = vmatmul.mubr.bf16.gmra.mxu0 %v217
  %v274 = vpop.f32.mrf.mxu0
  %v275 = vadd.f32 %v62, %v274
  %v276 = vpop.f32.mrf.mxu0
  %v277 = vpop.f32.mrf.mxu0
  %v278 = vadd.f32 %v67, %v277
  %v279 = vpop.f32.mrf.mxu0
  %280 = vmatprep.mubr.bf16.mxu0 0
  %281 = vmatmul.mubr.bf16.gmra.mxu0 %v220
  %v282 = vpop.f32.mrf.mxu0
  %v283 = vadd.f32 %v72, %v282
  %v284 = vpop.f32.mrf.mxu0
  %v285 = vpop.f32.mrf.mxu0
  %v286 = vadd.f32 %v77, %v285
  %v287 = vpop.f32.mrf.mxu0
  %288 = vmatprep.mubr.bf16.mxu0 0
  %289 = vmatmul.mubr.bf16.gmra.mxu0 %v223
  %v290 = vpop.f32.mrf.mxu0
  %v291 = vadd.f32 %v82, %v290
  %v292 = vpop.f32.mrf.mxu0
  %v293 = vpop.f32.mrf.mxu0
  %v294 = vadd.f32 %v87, %v293
  %v295 = vpop.f32.mrf.mxu0
  %296 = vmatprep.mubr.bf16.mxu0 0
  %297 = vmatmul.mubr.bf16.gmra.mxu0 %v226
  %v298 = vpop.f32.mrf.mxu0
  %v299 = vadd.f32 %v92, %v298
  %v300 = vpop.f32.mrf.mxu0
  %v301 = vpop.f32.mrf.mxu0
  %v302 = vadd.f32 %v97, %v301
  %v303 = vpop.f32.mrf.mxu0
  %304 = vmatprep.mubr.bf16.mxu0 0
  %305 = vmatmul.mubr.bf16.gmra.mxu0 %v229
  %v306 = vpop.f32.mrf.mxu0
  %v307 = vadd.f32 %v102, %v306
  %v308 = vpop.f32.mrf.mxu0
  %v309 = vpop.f32.mrf.mxu0
  %v310 = vadd.f32 %v107, %v309
  %v311 = vpop.f32.mrf.mxu0
  %312 = vmatprep.mubr.bf16.mxu0 0
  %313 = vmatmul.mubr.bf16.gmra.mxu0 %v232
  %v314 = vpop.f32.mrf.mxu0
  %v315 = vadd.f32 %v112, %v314
  %v316 = vpop.f32.mrf.mxu0
  %v317 = vpop.f32.mrf.mxu0
  %v318 = vadd.f32 %v117, %v317
  %v319 = vpop.f32.mrf.mxu0
  %320 = vmatprep.mubr.bf16.mxu0 0
  %321 = vmatmul.mubr.bf16.gmra.mxu0 %v235
  %v322 = vpop.f32.mrf.mxu0
  %v323 = vadd.f32 %v122, %v322
  %v324 = vpop.f32.mrf.mxu0
  %v325 = vpop.f32.mrf.mxu0
  %v326 = vadd.f32 %v127, %v325
  %v327 = vpop.f32.mrf.mxu0
  %328 = vmatprep.mubr.bf16.mxu0 0
  %329 = vmatmul.mubr.bf16.gmra.mxu0 %v238
  %v330 = vpop.f32.mrf.mxu0
  %v331 = vadd.f32 %v132, %v330
  %v332 = vpop.f32.mrf.mxu0
  %v333 = vpop.f32.mrf.mxu0
  %v334 = vadd.f32 %v137, %v333
  %v335 = vpop.f32.mrf.mxu0
  %336 = vdwg.mxu0
  %v337 = vxor.u32 %v307, 2147483648
  %v338 = vxor.u32 %v310, 2147483648
  %v339 = vxor.u32 %v315, 2147483648
  %v340 = vxor.u32 %v318, 2147483648
  %v341 = vxor.u32 %v323, 2147483648
  %v342 = vxor.u32 %v326, 2147483648
  %v343 = vxor.u32 %v331, 2147483648
  %v344 = vxor.u32 %v334, 2147483648
  %v345 = vmul.f32 %v337, 1.442695
  %v346 = vpow.pop %v345
  %v347 = vmul.f32 %v338, 1.442695
  %v348 = vpow.pop %v347
  %v349 = vmul.f32 %v339, 1.442695
  %v350 = vpow.pop %v349
  %v351 = vmul.f32 %v340, 1.442695
  %v352 = vpow.pop %v351
  %v353 = vmul.f32 %v341, 1.442695
  %v354 = vpow.pop %v353
  %v355 = vmul.f32 %v342, 1.442695
  %v356 = vpow.pop %v355
  %v357 = vmul.f32 %v343, 1.442695
  %v358 = vpow.pop %v357
  %v359 = vmul.f32 %v344, 1.442695
  %v360 = vpow.pop %v359
  %v361 = vadd.f32 %v346, 1.0
  %v362 = vadd.f32 %v348, 1.0
  %v363 = vadd.f32 %v350, 1.0
  %v364 = vadd.f32 %v352, 1.0
  %v365 = vadd.f32 %v354, 1.0
  %v366 = vadd.f32 %v356, 1.0
  %v367 = vadd.f32 %v358, 1.0
  %v368 = vadd.f32 %v360, 1.0
  %v369 = vrcp.pop %v361
  %v370 = vmul.f32 1.0, %v369
  %v371 = vrcp.pop %v362
  %v372 = vmul.f32 1.0, %v371
  %v373 = vrcp.pop %v363
  %v374 = vmul.f32 1.0, %v373
  %v375 = vrcp.pop %v364
  %v376 = vmul.f32 1.0, %v375
  %v377 = vrcp.pop %v365
  %v378 = vmul.f32 1.0, %v377
  %v379 = vrcp.pop %v366
  %v380 = vmul.f32 1.0, %v379
  %v381 = vrcp.pop %v367
  %v382 = vmul.f32 1.0, %v381
  %v383 = vrcp.pop %v368
  %v384 = vmul.f32 1.0, %v383
  %v385 = vmul.f32 %v370, %v275
  %v386 = vmul.f32 %v372, %v278
  %v387 = vmul.f32 %v374, %v283
  %v388 = vmul.f32 %v376, %v286
  %v389 = vmul.f32 %v378, %v291
  %v390 = vmul.f32 %v380, %v294
  %v391 = vmul.f32 %v382, %v299
  %v392 = vmul.f32 %v384, %v302
  %vm393 = vcmp.gt.f32.partialorder %v385, 0.0
  %vm394 = vcmp.gt.f32.partialorder %v386, 0.0
  %vm395 = vcmp.gt.f32.partialorder %v387, 0.0
  %vm396 = vcmp.gt.f32.partialorder %v388, 0.0
  %vm397 = vcmp.gt.f32.partialorder %v389, 0.0
  %vm398 = vcmp.gt.f32.partialorder %v390, 0.0
  %vm399 = vcmp.gt.f32.partialorder %v391, 0.0
  %vm400 = vcmp.gt.f32.partialorder %v392, 0.0
  %v401 = vmin.f32 %v385, 0.0
  %v402 = vmin.f32 %v386, 0.0
  %v403 = vmin.f32 %v387, 0.0
  %v404 = vmin.f32 %v388, 0.0
  %v405 = vmin.f32 %v389, 0.0
  %v406 = vmin.f32 %v390, 0.0
  %v407 = vmin.f32 %v391, 0.0
  %v408 = vmin.f32 %v392, 0.0
  %v409 = vmul.f32 %v401, 1.442695
  %v410 = vpow.pop %v409
  %v411 = vmul.f32 %v402, 1.442695
  %v412 = vpow.pop %v411
  %v413 = vmul.f32 %v403, 1.442695
  %v414 = vpow.pop %v413
  %v415 = vmul.f32 %v404, 1.442695
  %v416 = vpow.pop %v415
  %v417 = vmul.f32 %v405, 1.442695
  %v418 = vpow.pop %v417
  %v419 = vmul.f32 %v406, 1.442695
  %v420 = vpow.pop %v419
  %v421 = vmul.f32 %v407, 1.442695
  %v422 = vpow.pop %v421
  %v423 = vmul.f32 %v408, 1.442695
  %v424 = vpow.pop %v423
  %v425 = vsub.f32 %v410, 1.0
  %v426 = vsub.f32 %v412, 1.0
  %v427 = vsub.f32 %v414, 1.0
  %v428 = vsub.f32 %v416, 1.0
  %v429 = vsub.f32 %v418, 1.0
  %v430 = vsub.f32 %v420, 1.0
  %v431 = vsub.f32 %v422, 1.0
  %v432 = vsub.f32 %v424, 1.0
  %v433 = vsel %vm393, %v385, %v425
  %v434 = vsel %vm394, %v386, %v426
  %v435 = vsel %vm395, %v387, %v427
  %v436 = vsel %vm396, %v388, %v428
  %v437 = vsel %vm397, %v389, %v429
  %v438 = vsel %vm398, %v390, %v430
  %v439 = vsel %vm399, %v391, %v431
  %v440 = vsel %vm400, %v392, %v432
  %vm441 = vcmp.gt.f32.partialorder %v433, 0.0
  %vm442 = vcmp.gt.f32.partialorder %v434, 0.0
  %vm443 = vcmp.gt.f32.partialorder %v435, 0.0
  %vm444 = vcmp.gt.f32.partialorder %v436, 0.0
  %vm445 = vcmp.gt.f32.partialorder %v437, 0.0
  %vm446 = vcmp.gt.f32.partialorder %v438, 0.0
  %vm447 = vcmp.gt.f32.partialorder %v439, 0.0
  %vm448 = vcmp.gt.f32.partialorder %v440, 0.0
  %v449 = vmin.f32 %v433, 0.0
  %v450 = vmin.f32 %v434, 0.0
  %v451 = vmin.f32 %v435, 0.0
  %v452 = vmin.f32 %v436, 0.0
  %v453 = vmin.f32 %v437, 0.0
  %v454 = vmin.f32 %v438, 0.0
  %v455 = vmin.f32 %v439, 0.0
  %v456 = vmin.f32 %v440, 0.0
  %v457 = vmul.f32 %v449, 1.442695
  %v458 = vpow.pop %v457
  %v459 = vmul.f32 %v450, 1.442695
  %v460 = vpow.pop %v459
  %v461 = vmul.f32 %v451, 1.442695
  %v462 = vpow.pop %v461
  %v463 = vmul.f32 %v452, 1.442695
  %v464 = vpow.pop %v463
  %v465 = vmul.f32 %v453, 1.442695
  %v466 = vpow.pop %v465
  %v467 = vmul.f32 %v454, 1.442695
  %v468 = vpow.pop %v467
  %v469 = vmul.f32 %v455, 1.442695
  %v470 = vpow.pop %v469
  %v471 = vmul.f32 %v456, 1.442695
  %v472 = vpow.pop %v471
  %v473 = vsub.f32 %v458, 1.0
  %v474 = vsub.f32 %v460, 1.0
  %v475 = vsub.f32 %v462, 1.0
  %v476 = vsub.f32 %v464, 1.0
  %v477 = vsub.f32 %v466, 1.0
  %v478 = vsub.f32 %v468, 1.0
  %v479 = vsub.f32 %v470, 1.0
  %v480 = vsub.f32 %v472, 1.0
  %v481 = vsel %vm441, %v433, %v473
  %v482 = vsel %vm442, %v434, %v474
  %v483 = vsel %vm443, %v435, %v475
  %v484 = vsel %vm444, %v436, %v476
  %v485 = vsel %vm445, %v437, %v477
  %v486 = vsel %vm446, %v438, %v478
  %v487 = vsel %vm447, %v439, %v479
  %v488 = vsel %vm448, %v440, %v480
  %v489 = vpack.c.bf16 %v482, %v481
  %v490 = vpack.c.bf16 %v484, %v483
  %v491 = vpack.c.bf16 %v486, %v485
  %v492 = vpack.c.bf16 %v488, %v487
  %v497 = vunpack.c.l.b16 %v489
  %v498 = vunpack.c.h.b16 %v489
  %v499 = vunpack.c.l.b16 %v490
  %v500 = vunpack.c.h.b16 %v490
  %v501 = vunpack.c.l.b16 %v491
  %v502 = vunpack.c.h.b16 %v491
  %v503 = vunpack.c.l.b16 %v492
  %v504 = vunpack.c.h.b16 %v492
  %v505 = vpack.c.b16 %v497, %v497
  %v506 = vpack.c.b16 %v498, %v498
  %v507 = vpack.c.b16 %v499, %v499
  %v508 = vpack.c.b16 %v500, %v500
  %v509 = vpack.c.b16 %v501, %v501
  %v510 = vpack.c.b16 %v502, %v502
  %v511 = vpack.c.b16 %v503, %v503
  %v512 = vpack.c.b16 %v504, %v504
  %521 = vst [vmem:[%s3] sm:$0xf] %v505
  %522 = vst [vmem:[%s3 + $0x4] sm:$0xf] %v506
  %523 = vst [vmem:[%s3 + $0x8] sm:$0xf] %v507
  %524 = vst [vmem:[%s3 + $0xc] sm:$0xf] %v508
  %525 = vst [vmem:[%s3 + $0x10] sm:$0xf] %v509
  %526 = vst [vmem:[%s3 + $0x14] sm:$0xf] %v510
  %527 = vst [vmem:[%s3 + $0x18] sm:$0xf] %v511
  %528 = vst [vmem:[%s3 + $0x1c] sm:$0xf] %v512
  // Predicated region
  $region14: #{online_gcrn_forward.9} parent=0 // pred_check
    _
  $region15: #{online_gcrn_forward.9} parent=0 // pred_check_branch
    %530 = sbr.rel (0) target = $region17
  $region16: #{online_gcrn_forward.9} parent=0 // pred_region
    _
  $region17: #{online_gcrn_forward.9} parent=0 // pred_fallthru
    _
  // Predicated region
  $region18: #{online_gcrn_forward.9} parent=0 // pred_check
    _
  $region19: #{online_gcrn_forward.9} parent=0 // pred_check_branch
    %532 = sbr.rel (0) target = $region21
  $region20: #{online_gcrn_forward.9} parent=0 // pred_region
    _
  $region21: #{online_gcrn_forward.9} parent=0 // pred_fallthru
    _

// kernel: online_gcrn_forward.10
$region0: #{online_gcrn_forward.10}
  #allocation0 [shape = 'u32[]', space=smem, size = 0x4, offset = 0x4, fixed_abs, tag = 'smem constant byte address 0x4 - core index']
  #allocation1 [shape = 'u32[144,128]{1,0:T(1,128)}', space=vmem, size = 0x12000, scoped, tag = 'internal scratch']
  %s0 = inlined_call_operand.vmem [shape: bf16[384,128], index: 0, kind: input, shape index: {}]
  %s1 = inlined_call_operand.vmem [shape: bf16[128,384], index: 1, kind: input, shape index: {}]
  %s2 = inlined_call_operand.vmem [shape: f32[128,1], index: 2, kind: input, shape index: {}]
  %s3 = inlined_call_operand.vmem [shape: bf16[64,128], index: 3, kind: output, shape index: {}]
  %s4 = sld [smem:[#allocation0]]
  $region22: #{online_gcrn_forward.10} parent=0
    _
  %s6 = ssub.s32 1, %s4
  %s7 = scalar_select 0, %s6, %s4
  // Predicated region
  $region2: #{online_gcrn_forward.10} parent=0 // pred_check
    _
  $region3: #{online_gcrn_forward.10} parent=0 // pred_check_branch
    %9 = sbr.rel (0) target = $region5
  $region4: #{online_gcrn_forward.10} parent=0 // pred_region
    _
  $region5: #{online_gcrn_forward.10} parent=0 // pred_fallthru
    _
  // Predicated region
  $region6: #{online_gcrn_forward.10} parent=0 // pred_check
    _
  $region7: #{online_gcrn_forward.10} parent=0 // pred_check_branch
    %11 = sbr.rel (0) target = $region9
  $region8: #{online_gcrn_forward.10} parent=0 // pred_region
    _
  $region9: #{online_gcrn_forward.10} parent=0 // pred_fallthru
    _
  // Predicated region
  $region10: #{online_gcrn_forward.10} parent=0 // pred_check
    _
  $region11: #{online_gcrn_forward.10} parent=0 // pred_check_branch
    %13 = sbr.rel (0) target = $region13
  $region12: #{online_gcrn_forward.10} parent=0 // pred_region
    _
  $region13: #{online_gcrn_forward.10} parent=0 // pred_fallthru
    _
  %v15 = vld [vmem:[%s1] sm:$0xff]
  %v16 = vld [vmem:[%s1 + $0x8] sm:$0xf]
  %v17 = vld [vmem:[%s1 + $0xc] sm:$0xff]
  %v18 = vld [vmem:[%s1 + $0x14] sm:$0xf]
  %v19 = vld [vmem:[%s1 + $0x18] sm:$0xff]
  %v20 = vld [vmem:[%s1 + $0x20] sm:$0xf]
  %v21 = vld [vmem:[%s1 + $0x24] sm:$0xff]
  %v22 = vld [vmem:[%s1 + $0x2c] sm:$0xf]
  %v23 = vld [vmem:[%s1 + $0x30] sm:$0xff]
  %v24 = vld [vmem:[%s1 + $0x38] sm:$0xf]
  %v25 = vld [vmem:[%s1 + $0x3c] sm:$0xff]
  %v26 = vld [vmem:[%s1 + $0x44] sm:$0xf]
  %v27 = vld [vmem:[%s1 + $0x48] sm:$0xff]
  %v28 = vld [vmem:[%s1 + $0x50] sm:$0xf]
  %v29 = vld [vmem:[%s1 + $0x54] sm:$0xff]
  %v30 = vld [vmem:[%s1 + $0x5c] sm:$0xf]
  %v31 = vld [vmem:[%s1 + $0x60] sm:$0xff]
  %v32 = vld [vmem:[%s1 + $0x68] sm:$0xf]
  %v33 = vld [vmem:[%s1 + $0x6c] sm:$0xff]
  %v34 = vld [vmem:[%s1 + $0x74] sm:$0xf]
  %v35 = vld [vmem:[%s1 + $0x78] sm:$0xff]
  %v36 = vld [vmem:[%s1 + $0x80] sm:$0xf]
  %v37 = vld [vmem:[%s1 + $0x84] sm:$0xff]
  %v38 = vld [vmem:[%s1 + $0x8c] sm:$0xf]
  %v39 = vld [vmem:[%s1 + $0x90] sm:$0xff]
  %v40 = vld [vmem:[%s1 + $0x98] sm:$0xf]
  %v41 = vld [vmem:[%s1 + $0x9c] sm:$0xff]
  %v42 = vld [vmem:[%s1 + $0xa4] sm:$0xf]
  %v43 = vld [vmem:[%s1 + $0xa8] sm:$0xff]
  %v44 = vld [vmem:[%s1 + $0xb0] sm:$0xf]
  %v45 = vld [vmem:[%s1 + $0xb4] sm:$0xff]
  %v46 = vld [vmem:[%s1 + $0xbc] sm:$0xf]
  %v47 = vld [vmem:[%s0] sm:$0xf]
  %v48 = vld [vmem:[%s0 + $0x4] sm:$0xf]
  %v49 = vld [vmem:[%s0 + $0x8] sm:$0xf]
  %v50 = vld [vmem:[%s0 + $0xc] sm:$0xf]
  %v51 = vld [vmem:[%s0 + $0x10] sm:$0xf]
  %v52 = vld [vmem:[%s0 + $0x14] sm:$0xf]
  %v53 = vld [vmem:[%s0 + $0x18] sm:$0xf]
  %v54 = vld [vmem:[%s0 + $0x1c] sm:$0xf]
  %v55 = vld [vmem:[%s0 + $0x20] sm:$0xf]
  %v56 = vld [vmem:[%s0 + $0x24] sm:$0xf]
  %v57 = vld [vmem:[%s0 + $0x28] sm:$0xf]
  %v58 = vld [vmem:[%s0 + $0x2c] sm:$0xf]
  %v59 = vld [vmem:[%s0 + $0x30] sm:$0xf]
  %v60 = vld [vmem:[%s0 + $0x34] sm:$0xf]
  %v61 = vld [vmem:[%s0 + $0x38] sm:$0xf]
  %v62 = vld [vmem:[%s0 + $0x3c] sm:$0xf]
  %v63 = vld [vmem:[%s0 + $0x40] sm:$0xf]
  %v64 = vld [vmem:[%s0 + $0x44] sm:$0xf]
  %v65 = vld [vmem:[%s0 + $0x48] sm:$0xf]
  %v66 = vld [vmem:[%s0 + $0x4c] sm:$0xf]
  %v67 = vld [vmem:[%s0 + $0x50] sm:$0xf]
  %v68 = vld [vmem:[%s0 + $0x54] sm:$0xf]
  %v69 = vld [vmem:[%s0 + $0x58] sm:$0xf]
  %v70 = vld [vmem:[%s0 + $0x5c] sm:$0xf]
  %v71 = vld [vmem:[%s0 + $0x60] sm:$0xf]
  %v72 = vld [vmem:[%s0 + $0x64] sm:$0xf]
  %v73 = vld [vmem:[%s0 + $0x68] sm:$0xf]
  %v74 = vld [vmem:[%s0 + $0x6c] sm:$0xf]
  %v75 = vld [vmem:[%s0 + $0x70] sm:$0xf]
  %v76 = vld [vmem:[%s0 + $0x74] sm:$0xf]
  %v77 = vld [vmem:[%s0 + $0x78] sm:$0xf]
  %v78 = vld [vmem:[%s0 + $0x7c] sm:$0xf]
  %v79 = vld [vmem:[%s0 + $0x80] sm:$0xf]
  %v80 = vld [vmem:[%s0 + $0x84] sm:$0xf]
  %v81 = vld [vmem:[%s0 + $0x88] sm:$0xf]
  %v82 = vld [vmem:[%s0 + $0x8c] sm:$0xf]
  %v83 = vld [vmem:[%s0 + $0x90] sm:$0xf]
  %v84 = vld [vmem:[%s0 + $0x94] sm:$0xf]
  %v85 = vld [vmem:[%s0 + $0x98] sm:$0xf]
  %v86 = vld [vmem:[%s0 + $0x9c] sm:$0xf]
  %v87 = vld [vmem:[%s0 + $0xa0] sm:$0xf]
  %v88 = vld [vmem:[%s0 + $0xa4] sm:$0xf]
  %v89 = vld [vmem:[%s0 + $0xa8] sm:$0xf]
  %v90 = vld [vmem:[%s0 + $0xac] sm:$0xf]
  %v91 = vld [vmem:[%s0 + $0xb0] sm:$0xf]
  %v92 = vld [vmem:[%s0 + $0xb4] sm:$0xf]
  %v93 = vld [vmem:[%s0 + $0xb8] sm:$0xf]
  %v94 = vld [vmem:[%s0 + $0xbc] sm:$0xf]
  %v95 = vld [vmem:[%s2] sm:$0xff]
  %v96 = vld [vmem:[%s2 + $0x8] sm:$0xff]
  %v97 = vld [vmem:[%s2 + $0x10] sm:$0xff]
  %v98 = vld [vmem:[%s2 + $0x18] sm:$0xff]
  %v99 = vld [vmem:[%s2 + $0x20] sm:$0xff]
  %v100 = vld [vmem:[%s2 + $0x28] sm:$0xff]
  %v101 = vld [vmem:[%s2 + $0x30] sm:$0xff]
  %v102 = vld [vmem:[%s2 + $0x38] sm:$0xff]
  %v103 = vld [vmem:[%s2 + $0x40] sm:$0xff]
  %v104 = vld [vmem:[%s2 + $0x48] sm:$0xff]
  %v105 = vld [vmem:[%s2 + $0x50] sm:$0xff]
  %v106 = vld [vmem:[%s2 + $0x58] sm:$0xff]
  %v107 = vld [vmem:[%s2 + $0x60] sm:$0xff]
  %v108 = vld [vmem:[%s2 + $0x68] sm:$0xff]
  %v109 = vld [vmem:[%s2 + $0x70] sm:$0xff]
  %v110 = vld [vmem:[%s2 + $0x78] sm:$0xff]
  %112 = vset.pattern.permute.xlu0 0
  %113 = vperm.xlu0 %112, %v95
  %v114 = vpop.permute.xlu0 %113
  %117 = vset.pattern.permute.xlu0 0
  %118 = vperm.xlu0 %117, %v96
  %v119 = vpop.permute.xlu0 %118
  %122 = vset.pattern.permute.xlu0 0
  %123 = vperm.xlu0 %122, %v97
  %v124 = vpop.permute.xlu0 %123
  %127 = vset.pattern.permute.xlu0 0
  %128 = vperm.xlu0 %127, %v98
  %v129 = vpop.permute.xlu0 %128
  %132 = vset.pattern.permute.xlu0 0
  %133 = vperm.xlu0 %132, %v99
  %v134 = vpop.permute.xlu0 %133
  %137 = vset.pattern.permute.xlu0 0
  %138 = vperm.xlu0 %137, %v100
  %v139 = vpop.permute.xlu0 %138
  %142 = vset.pattern.permute.xlu0 0
  %143 = vperm.xlu0 %142, %v101
  %v144 = vpop.permute.xlu0 %143
  %147 = vset.pattern.permute.xlu0 0
  %148 = vperm.xlu0 %147, %v102
  %v149 = vpop.permute.xlu0 %148
  %152 = vset.pattern.permute.xlu0 0
  %153 = vperm.xlu0 %152, %v103
  %v154 = vpop.permute.xlu0 %153
  %157 = vset.pattern.permute.xlu0 0
  %158 = vperm.xlu0 %157, %v104
  %v159 = vpop.permute.xlu0 %158
  %162 = vset.pattern.permute.xlu0 0
  %163 = vperm.xlu0 %162, %v105
  %v164 = vpop.permute.xlu0 %163
  %167 = vset.pattern.permute.xlu0 0
  %168 = vperm.xlu0 %167, %v106
  %v169 = vpop.permute.xlu0 %168
  %172 = vset.pattern.permute.xlu0 0
  %173 = vperm.xlu0 %172, %v107
  %v174 = vpop.permute.xlu0 %173
  %177 = vset.pattern.permute.xlu0 0
  %178 = vperm.xlu0 %177, %v108
  %v179 = vpop.permute.xlu0 %178
  %182 = vset.pattern.permute.xlu0 0
  %183 = vperm.xlu0 %182, %v109
  %v184 = vpop.permute.xlu0 %183
  %187 = vset.pattern.permute.xlu0 0
  %188 = vperm.xlu0 %187, %v110
  %v189 = vpop.permute.xlu0 %188
  %v223 = vunpack.c.l.b16 %v15
  %v224 = vunpack.c.h.b16 %v15
  %v225 = vunpack.c.l.b16 %v16
  %v226 = vunpack.c.l.b16 %v17
  %v227 = vunpack.c.h.b16 %v17
  %v228 = vunpack.c.l.b16 %v18
  %v229 = vunpack.c.l.b16 %v19
  %v230 = vunpack.c.h.b16 %v19
  %v231 = vunpack.c.l.b16 %v20
  %v232 = vunpack.c.l.b16 %v21
  %v233 = vunpack.c.h.b16 %v21
  %v234 = vunpack.c.l.b16 %v22
  %v235 = vunpack.c.l.b16 %v23
  %v236 = vunpack.c.h.b16 %v23
  %v237 = vunpack.c.l.b16 %v24
  %v238 = vunpack.c.l.b16 %v25
  %v239 = vunpack.c.h.b16 %v25
  %v240 = vunpack.c.l.b16 %v26
  %v241 = vunpack.c.l.b16 %v27
  %v242 = vunpack.c.h.b16 %v27
  %v243 = vunpack.c.l.b16 %v28
  %v244 = vunpack.c.l.b16 %v29
  %v245 = vunpack.c.h.b16 %v29
  %v246 = vunpack.c.l.b16 %v30
  %v247 = vunpack.c.l.b16 %v31
  %v248 = vunpack.c.h.b16 %v31
  %v249 = vunpack.c.l.b16 %v32
  %v250 = vunpack.c.l.b16 %v33
  %v251 = vunpack.c.h.b16 %v33
  %v252 = vunpack.c.l.b16 %v34
  %v253 = vunpack.c.l.b16 %v35
  %v254 = vunpack.c.h.b16 %v35
  %v255 = vunpack.c.l.b16 %v36
  %v256 = vunpack.c.l.b16 %v37
  %v257 = vunpack.c.h.b16 %v37
  %v258 = vunpack.c.l.b16 %v38
  %v259 = vunpack.c.l.b16 %v39
  %v260 = vunpack.c.h.b16 %v39
  %v261 = vunpack.c.l.b16 %v40
  %v262 = vunpack.c.l.b16 %v41
  %v263 = vunpack.c.h.b16 %v41
  %v264 = vunpack.c.l.b16 %v42
  %v265 = vunpack.c.l.b16 %v43
  %v266 = vunpack.c.h.b16 %v43
  %v267 = vunpack.c.l.b16 %v44
  %v268 = vunpack.c.l.b16 %v45
  %v269 = vunpack.c.h.b16 %v45
  %v270 = vunpack.c.l.b16 %v46
  %v271 = vpack.c.b16 %v226, %v223
  %v272 = vpack.c.b16 %v227, %v224
  %v273 = vpack.c.b16 %v228, %v225
  %v274 = vpack.c.b16 %v232, %v229
  %v275 = vpack.c.b16 %v233, %v230
  %v276 = vpack.c.b16 %v234, %v231
  %v277 = vpack.c.b16 %v238, %v235
  %v278 = vpack.c.b16 %v239, %v236
  %v279 = vpack.c.b16 %v240, %v237
  %v280 = vpack.c.b16 %v244, %v241
  %v281 = vpack.c.b16 %v245, %v242
  %v282 = vpack.c.b16 %v246, %v243
  %v283 = vpack.c.b16 %v250, %v247
  %v284 = vpack.c.b16 %v251, %v248
  %v285 = vpack.c.b16 %v252, %v249
  %v286 = vpack.c.b16 %v256, %v253
  %v287 = vpack.c.b16 %v257, %v254
  %v288 = vpack.c.b16 %v258, %v255
  %v289 = vpack.c.b16 %v262, %v259
  %v290 = vpack.c.b16 %v263, %v260
  %v291 = vpack.c.b16 %v264, %v261
  %v292 = vpack.c.b16 %v268, %v265
  %v293 = vpack.c.b16 %v269, %v266
  %v294 = vpack.c.b16 %v270, %v267
  %v367 = vunpack.c.l.b16 %v47
  %v368 = vunpack.c.l.b16 %v48
  %v369 = vunpack.c.l.b16 %v49
  %v370 = vunpack.c.l.b16 %v50
  %v371 = vunpack.c.l.b16 %v51
  %v372 = vunpack.c.l.b16 %v52
  %v373 = vunpack.c.l.b16 %v53
  %v374 = vunpack.c.l.b16 %v54
  %v375 = vunpack.c.l.b16 %v55
  %v376 = vunpack.c.l.b16 %v56
  %v377 = vunpack.c.l.b16 %v57
  %v378 = vunpack.c.l.b16 %v58
  %v379 = vunpack.c.l.b16 %v59
  %v380 = vunpack.c.l.b16 %v60
  %v381 = vunpack.c.l.b16 %v61
  %v382 = vunpack.c.l.b16 %v62
  %v383 = vunpack.c.l.b16 %v63
  %v384 = vunpack.c.l.b16 %v64
  %v385 = vunpack.c.l.b16 %v65
  %v386 = vunpack.c.l.b16 %v66
  %v387 = vunpack.c.l.b16 %v67
  %v388 = vunpack.c.l.b16 %v68
  %v389 = vunpack.c.l.b16 %v69
  %v390 = vunpack.c.l.b16 %v70
  %v391 = vunpack.c.l.b16 %v71
  %v392 = vunpack.c.l.b16 %v72
  %v393 = vunpack.c.l.b16 %v73
  %v394 = vunpack.c.l.b16 %v74
  %v395 = vunpack.c.l.b16 %v75
  %v396 = vunpack.c.l.b16 %v76
  %v397 = vunpack.c.l.b16 %v77
  %v398 = vunpack.c.l.b16 %v78
  %v399 = vunpack.c.l.b16 %v79
  %v400 = vunpack.c.l.b16 %v80
  %v401 = vunpack.c.l.b16 %v81
  %v402 = vunpack.c.l.b16 %v82
  %v403 = vunpack.c.l.b16 %v83
  %v404 = vunpack.c.l.b16 %v84
  %v405 = vunpack.c.l.b16 %v85
  %v406 = vunpack.c.l.b16 %v86
  %v407 = vunpack.c.l.b16 %v87
  %v408 = vunpack.c.l.b16 %v88
  %v409 = vunpack.c.l.b16 %v89
  %v410 = vunpack.c.l.b16 %v90
  %v411 = vunpack.c.l.b16 %v91
  %v412 = vunpack.c.l.b16 %v92
  %v413 = vunpack.c.l.b16 %v93
  %v414 = vunpack.c.l.b16 %v94
  %v415 = vpack.c.b16 %v368, %v367
  %v416 = vpack.c.b16 %v370, %v369
  %v417 = vpack.c.b16 %v372, %v371
  %v418 = vpack.c.b16 %v374, %v373
  %v419 = vpack.c.b16 %v376, %v375
  %v420 = vpack.c.b16 %v378, %v377
  %v421 = vpack.c.b16 %v380, %v379
  %v422 = vpack.c.b16 %v382, %v381
  %v423 = vpack.c.b16 %v384, %v383
  %v424 = vpack.c.b16 %v386, %v385
  %v425 = vpack.c.b16 %v388, %v387
  %v426 = vpack.c.b16 %v390, %v389
  %v427 = vpack.c.b16 %v392, %v391
  %v428 = vpack.c.b16 %v394, %v393
  %v429 = vpack.c.b16 %v396, %v395
  %v430 = vpack.c.b16 %v398, %v397
  %v431 = vpack.c.b16 %v400, %v399
  %v432 = vpack.c.b16 %v402, %v401
  %v433 = vpack.c.b16 %v404, %v403
  %v434 = vpack.c.b16 %v406, %v405
  %v435 = vpack.c.b16 %v408, %v407
  %v436 = vpack.c.b16 %v410, %v409
  %v437 = vpack.c.b16 %v412, %v411
  %v438 = vpack.c.b16 %v414, %v413
  %463 = vmatprep.subr.bf16.mxu0 0
  %464 = vmatpush1.bf16.msra.mxu0 %v422
  %465 = vmatprep.subr.bf16.mxu0 0
  %466 = vmatpush1.bf16.msra.mxu0 %v421
  %467 = vmatprep.subr.bf16.mxu0 0
  %468 = vmatpush1.bf16.msra.mxu0 %v420
  %469 = vmatprep.subr.bf16.mxu0 0
  %470 = vmatpush1.bf16.msra.mxu0 %v419
  %471 = vmatprep.subr.bf16.mxu0 0
  %472 = vmatpush1.bf16.msra.mxu0 %v418
  %473 = vmatprep.subr.bf16.mxu0 0
  %474 = vmatpush1.bf16.msra.mxu0 %v417
  %475 = vmatprep.subr.bf16.mxu0 0
  %476 = vmatpush1.bf16.msra.mxu0 %v416
  %477 = vmatprep.subr.bf16.mxu0 0
  %478 = vmatpush1.bf16.msra.mxu0 %v415
  %479 = vmatprep.subr.bf16.mxu0 0
  %480 = vmatpush2.bf16.msra.mxu0 %v430
  %481 = vmatprep.subr.bf16.mxu0 0
  %482 = vmatpush2.bf16.msra.mxu0 %v429
  %483 = vmatprep.subr.bf16.mxu0 0
  %484 = vmatpush2.bf16.msra.mxu0 %v428
  %485 = vmatprep.subr.bf16.mxu0 0
  %486 = vmatpush2.bf16.msra.mxu0 %v427
  %487 = vmatprep.subr.bf16.mxu0 0
  %488 = vmatpush2.bf16.msra.mxu0 %v426
  %489 = vmatprep.subr.bf16.mxu0 0
  %490 = vmatpush2.bf16.msra.mxu0 %v425
  %491 = vmatprep.subr.bf16.mxu0 0
  %492 = vmatpush2.bf16.msra.mxu0 %v424
  %493 = vmatprep.subr.bf16.mxu0 0
  %494 = vmatpush2.bf16.msra.mxu0 %v423
  %495 = vmatprep.mubr.bf16.mxu0 %v272
  %496 = vmatmul.mubr.bf16.gmra.mxu0 %v271
  %v497 = vpop.f32.mrf.mxu0
  %v498 = vadd.f32 %v114, %v497
  %v499 = vpop.f32.mrf.mxu0
  %v500 = vpop.f32.mrf.mxu0
  %v501 = vadd.f32 %v119, %v500
  %v502 = vpop.f32.mrf.mxu0
  %503 = vmatprep.mubr.bf16.mxu0 %v275
  %504 = vmatmul.mubr.bf16.gmra.mxu0 %v274
  %v505 = vpop.f32.mrf.mxu0
  %v506 = vadd.f32 %v124, %v505
  %v507 = vpop.f32.mrf.mxu0
  %v508 = vpop.f32.mrf.mxu0
  %v509 = vadd.f32 %v129, %v508
  %v510 = vpop.f32.mrf.mxu0
  %511 = vmatprep.mubr.bf16.mxu0 %v278
  %512 = vmatmul.mubr.bf16.gmra.mxu0 %v277
  %v513 = vpop.f32.mrf.mxu0
  %v514 = vadd.f32 %v134, %v513
  %v515 = vpop.f32.mrf.mxu0
  %v516 = vpop.f32.mrf.mxu0
  %v517 = vadd.f32 %v139, %v516
  %v518 = vpop.f32.mrf.mxu0
  %519 = vmatprep.mubr.bf16.mxu0 %v281
  %520 = vmatmul.mubr.bf16.gmra.mxu0 %v280
  %v521 = vpop.f32.mrf.mxu0
  %v522 = vadd.f32 %v144, %v521
  %v523 = vpop.f32.mrf.mxu0
  %v524 = vpop.f32.mrf.mxu0
  %v525 = vadd.f32 %v149, %v524
  %v526 = vpop.f32.mrf.mxu0
  %527 = vmatprep.mubr.bf16.mxu0 %v284
  %528 = vmatmul.mubr.bf16.gmra.mxu0 %v283
  %v529 = vpop.f32.mrf.mxu0
  %v530 = vadd.f32 %v154, %v529
  %v531 = vpop.f32.mrf.mxu0
  %v532 = vpop.f32.mrf.mxu0
  %v533 = vadd.f32 %v159, %v532
  %v534 = vpop.f32.mrf.mxu0
  %535 = vmatprep.mubr.bf16.mxu0 %v287
  %536 = vmatmul.mubr.bf16.gmra.mxu0 %v286
  %v537 = vpop.f32.mrf.mxu0
  %v538 = vadd.f32 %v164, %v537
  %v539 = vpop.f32.mrf.mxu0
  %v540 = vpop.f32.mrf.mxu0
  %v541 = vadd.f32 %v169, %v540
  %v542 = vpop.f32.mrf.mxu0
  %543 = vmatprep.mubr.bf16.mxu0 %v290
  %544 = vmatmul.mubr.bf16.gmra.mxu0 %v289
  %v545 = vpop.f32.mrf.mxu0
  %v546 = vadd.f32 %v174, %v545
  %v547 = vpop.f32.mrf.mxu0
  %v548 = vpop.f32.mrf.mxu0
  %v549 = vadd.f32 %v179, %v548
  %v550 = vpop.f32.mrf.mxu0
  %551 = vmatprep.mubr.bf16.mxu0 %v293
  %552 = vmatmul.mubr.bf16.gmra.mxu0 %v292
  %v553 = vpop.f32.mrf.mxu0
  %v554 = vadd.f32 %v184, %v553
  %v555 = vpop.f32.mrf.mxu0
  %v556 = vpop.f32.mrf.mxu0
  %v557 = vadd.f32 %v189, %v556
  %v558 = vpop.f32.mrf.mxu0
  %559 = vdwg.mxu0
  %560 = vmatprep.subr.bf16.mxu0 0
  %561 = vmatpush1.bf16.msra.mxu0 %v438
  %562 = vmatprep.subr.bf16.mxu0 0
  %563 = vmatpush1.bf16.msra.mxu0 %v437
  %564 = vmatprep.subr.bf16.mxu0 0
  %565 = vmatpush1.bf16.msra.mxu0 %v436
  %566 = vmatprep.subr.bf16.mxu0 0
  %567 = vmatpush1.bf16.msra.mxu0 %v435
  %568 = vmatprep.subr.bf16.mxu0 0
  %569 = vmatpush1.bf16.msra.mxu0 %v434
  %570 = vmatprep.subr.bf16.mxu0 0
  %571 = vmatpush1.bf16.msra.mxu0 %v433
  %572 = vmatprep.subr.bf16.mxu0 0
  %573 = vmatpush1.bf16.msra.mxu0 %v432
  %574 = vmatprep.subr.bf16.mxu0 0
  %575 = vmatpush1.bf16.msra.mxu0 %v431
  %576 = vmatprep.subr.bf16.mxu0 0
  %577 = vmatpush2.bf16.msra.mxu0 0
  %578 = vmatprep.subr.bf16.mxu0 0
  %579 = vmatpush2.bf16.msra.mxu0 0
  %580 = vmatprep.subr.bf16.mxu0 0
  %581 = vmatpush2.bf16.msra.mxu0 0
  %582 = vmatprep.subr.bf16.mxu0 0
  %583 = vmatpush2.bf16.msra.mxu0 0
  %584 = vmatprep.subr.bf16.mxu0 0
  %585 = vmatpush2.bf16.msra.mxu0 0
  %586 = vmatprep.subr.bf16.mxu0 0
  %587 = vmatpush2.bf16.msra.mxu0 0
  %588 = vmatprep.subr.bf16.mxu0 0
  %589 = vmatpush2.bf16.msra.mxu0 0
  %590 = vmatprep.subr.bf16.mxu0 0
  %591 = vmatpush2.bf16.msra.mxu0 0
  %592 = vmatprep.mubr.bf16.mxu0 0
  %593 = vmatmul.mubr.bf16.gmra.mxu0 %v273
  %v594 = vpop.f32.mrf.mxu0
  %v595 = vadd.f32 %v498, %v594
  %v596 = vpop.f32.mrf.mxu0
  %v597 = vpop.f32.mrf.mxu0
  %v598 = vadd.f32 %v501, %v597
  %v599 = vpop.f32.mrf.mxu0
  %600 = vmatprep.mubr.bf16.mxu0 0
  %601 = vmatmul.mubr.bf16.gmra.mxu0 %v276
  %v602 = vpop.f32.mrf.mxu0
  %v603 = vadd.f32 %v506, %v602
  %v604 = vpop.f32.mrf.mxu0
  %v605 = vpop.f32.mrf.mxu0
  %v606 = vadd.f32 %v509, %v605
  %v607 = vpop.f32.mrf.mxu0
  %608 = vmatprep.mubr.bf16.mxu0 0
  %609 = vmatmul.mubr.bf16.gmra.mxu0 %v279
  %v610 = vpop.f32.mrf.mxu0
  %v611 = vadd.f32 %v514, %v610
  %v612 = vpop.f32.mrf.mxu0
  %v613 = vpop.f32.mrf.mxu0
  %v614 = vadd.f32 %v517, %v613
  %v615 = vpop.f32.mrf.mxu0
  %616 = vmatprep.mubr.bf16.mxu0 0
  %617 = vmatmul.mubr.bf16.gmra.mxu0 %v282
  %v618 = vpop.f32.mrf.mxu0
  %v619 = vadd.f32 %v522, %v618
  %v620 = vpop.f32.mrf.mxu0
  %v621 = vpop.f32.mrf.mxu0
  %v622 = vadd.f32 %v525, %v621
  %v623 = vpop.f32.mrf.mxu0
  %624 = vmatprep.mubr.bf16.mxu0 0
  %625 = vmatmul.mubr.bf16.gmra.mxu0 %v285
  %v626 = vpop.f32.mrf.mxu0
  %v627 = vadd.f32 %v530, %v626
  %v628 = vpop.f32.mrf.mxu0
  %v629 = vpop.f32.mrf.mxu0
  %v630 = vadd.f32 %v533, %v629
  %v631 = vpop.f32.mrf.mxu0
  %632 = vmatprep.mubr.bf16.mxu0 0
  %633 = vmatmul.mubr.bf16.gmra.mxu0 %v288
  %v634 = vpop.f32.mrf.mxu0
  %v635 = vadd.f32 %v538, %v634
  %v636 = vpop.f32.mrf.mxu0
  %v637 = vpop.f32.mrf.mxu0
  %v638 = vadd.f32 %v541, %v637
  %v639 = vpop.f32.mrf.mxu0
  %640 = vmatprep.mubr.bf16.mxu0 0
  %641 = vmatmul.mubr.bf16.gmra.mxu0 %v291
  %v642 = vpop.f32.mrf.mxu0
  %v643 = vadd.f32 %v546, %v642
  %v644 = vpop.f32.mrf.mxu0
  %v645 = vpop.f32.mrf.mxu0
  %v646 = vadd.f32 %v549, %v645
  %v647 = vpop.f32.mrf.mxu0
  %648 = vmatprep.mubr.bf16.mxu0 0
  %649 = vmatmul.mubr.bf16.gmra.mxu0 %v294
  %v650 = vpop.f32.mrf.mxu0
  %v651 = vadd.f32 %v554, %v650
  %v652 = vpop.f32.mrf.mxu0
  %v653 = vpop.f32.mrf.mxu0
  %v654 = vadd.f32 %v557, %v653
  %v655 = vpop.f32.mrf.mxu0
  %656 = vdwg.mxu0
  %v657 = vxor.u32 %v627, 2147483648
  %v658 = vxor.u32 %v630, 2147483648
  %v659 = vxor.u32 %v635, 2147483648
  %v660 = vxor.u32 %v638, 2147483648
  %v661 = vxor.u32 %v643, 2147483648
  %v662 = vxor.u32 %v646, 2147483648
  %v663 = vxor.u32 %v651, 2147483648
  %v664 = vxor.u32 %v654, 2147483648
  %v665 = vmul.f32 %v657, 1.442695
  %v666 = vpow.pop %v665
  %v667 = vmul.f32 %v658, 1.442695
  %v668 = vpow.pop %v667
  %v669 = vmul.f32 %v659, 1.442695
  %v670 = vpow.pop %v669
  %v671 = vmul.f32 %v660, 1.442695
  %v672 = vpow.pop %v671
  %v673 = vmul.f32 %v661, 1.442695
  %v674 = vpow.pop %v673
  %v675 = vmul.f32 %v662, 1.442695
  %v676 = vpow.pop %v675
  %v677 = vmul.f32 %v663, 1.442695
  %v678 = vpow.pop %v677
  %v679 = vmul.f32 %v664, 1.442695
  %v680 = vpow.pop %v679
  %v681 = vadd.f32 %v666, 1.0
  %v682 = vadd.f32 %v668, 1.0
  %v683 = vadd.f32 %v670, 1.0
  %v684 = vadd.f32 %v672, 1.0
  %v685 = vadd.f32 %v674, 1.0
  %v686 = vadd.f32 %v676, 1.0
  %v687 = vadd.f32 %v678, 1.0
  %v688 = vadd.f32 %v680, 1.0
  %v689 = vrcp.pop %v681
  %v690 = vmul.f32 1.0, %v689
  %v691 = vrcp.pop %v682
  %v692 = vmul.f32 1.0, %v691
  %v693 = vrcp.pop %v683
  %v694 = vmul.f32 1.0, %v693
  %v695 = vrcp.pop %v684
  %v696 = vmul.f32 1.0, %v695
  %v697 = vrcp.pop %v685
  %v698 = vmul.f32 1.0, %v697
  %v699 = vrcp.pop %v686
  %v700 = vmul.f32 1.0, %v699
  %v701 = vrcp.pop %v687
  %v702 = vmul.f32 1.0, %v701
  %v703 = vrcp.pop %v688
  %v704 = vmul.f32 1.0, %v703
  %v705 = vmul.f32 %v690, %v595
  %v706 = vmul.f32 %v692, %v598
  %v707 = vmul.f32 %v694, %v603
  %v708 = vmul.f32 %v696, %v606
  %v709 = vmul.f32 %v698, %v611
  %v710 = vmul.f32 %v700, %v614
  %v711 = vmul.f32 %v702, %v619
  %v712 = vmul.f32 %v704, %v622
  %vm713 = vcmp.gt.f32.partialorder %v705, 0.0
  %vm714 = vcmp.gt.f32.partialorder %v706, 0.0
  %vm715 = vcmp.gt.f32.partialorder %v707, 0.0
  %vm716 = vcmp.gt.f32.partialorder %v708, 0.0
  %vm717 = vcmp.gt.f32.partialorder %v709, 0.0
  %vm718 = vcmp.gt.f32.partialorder %v710, 0.0
  %vm719 = vcmp.gt.f32.partialorder %v711, 0.0
  %vm720 = vcmp.gt.f32.partialorder %v712, 0.0
  %v721 = vmin.f32 %v705, 0.0
  %v722 = vmin.f32 %v706, 0.0
  %v723 = vmin.f32 %v707, 0.0
  %v724 = vmin.f32 %v708, 0.0
  %v725 = vmin.f32 %v709, 0.0
  %v726 = vmin.f32 %v710, 0.0
  %v727 = vmin.f32 %v711, 0.0
  %v728 = vmin.f32 %v712, 0.0
  %v729 = vmul.f32 %v721, 1.442695
  %v730 = vpow.pop %v729
  %v731 = vmul.f32 %v722, 1.442695
  %v732 = vpow.pop %v731
  %v733 = vmul.f32 %v723, 1.442695
  %v734 = vpow.pop %v733
  %v735 = vmul.f32 %v724, 1.442695
  %v736 = vpow.pop %v735
  %v737 = vmul.f32 %v725, 1.442695
  %v738 = vpow.pop %v737
  %v739 = vmul.f32 %v726, 1.442695
  %v740 = vpow.pop %v739
  %v741 = vmul.f32 %v727, 1.442695
  %v742 = vpow.pop %v741
  %v743 = vmul.f32 %v728, 1.442695
  %v744 = vpow.pop %v743
  %v745 = vsub.f32 %v730, 1.0
  %v746 = vsub.f32 %v732, 1.0
  %v747 = vsub.f32 %v734, 1.0
  %v748 = vsub.f32 %v736, 1.0
  %v749 = vsub.f32 %v738, 1.0
  %v750 = vsub.f32 %v740, 1.0
  %v751 = vsub.f32 %v742, 1.0
  %v752 = vsub.f32 %v744, 1.0
  %v753 = vsel %vm713, %v705, %v745
  %v754 = vsel %vm714, %v706, %v746
  %v755 = vsel %vm715, %v707, %v747
  %v756 = vsel %vm716, %v708, %v748
  %v757 = vsel %vm717, %v709, %v749
  %v758 = vsel %vm718, %v710, %v750
  %v759 = vsel %vm719, %v711, %v751
  %v760 = vsel %vm720, %v712, %v752
  %vm761 = vcmp.gt.f32.partialorder %v753, 0.0
  %vm762 = vcmp.gt.f32.partialorder %v754, 0.0
  %vm763 = vcmp.gt.f32.partialorder %v755, 0.0
  %vm764 = vcmp.gt.f32.partialorder %v756, 0.0
  %vm765 = vcmp.gt.f32.partialorder %v757, 0.0
  %vm766 = vcmp.gt.f32.partialorder %v758, 0.0
  %vm767 = vcmp.gt.f32.partialorder %v759, 0.0
  %vm768 = vcmp.gt.f32.partialorder %v760, 0.0
  %v769 = vmin.f32 %v753, 0.0
  %v770 = vmin.f32 %v754, 0.0
  %v771 = vmin.f32 %v755, 0.0
  %v772 = vmin.f32 %v756, 0.0
  %v773 = vmin.f32 %v757, 0.0
  %v774 = vmin.f32 %v758, 0.0
  %v775 = vmin.f32 %v759, 0.0
  %v776 = vmin.f32 %v760, 0.0
  %v777 = vmul.f32 %v769, 1.442695
  %v778 = vpow.pop %v777
  %v779 = vmul.f32 %v770, 1.442695
  %v780 = vpow.pop %v779
  %v781 = vmul.f32 %v771, 1.442695
  %v782 = vpow.pop %v781
  %v783 = vmul.f32 %v772, 1.442695
  %v784 = vpow.pop %v783
  %v785 = vmul.f32 %v773, 1.442695
  %v786 = vpow.pop %v785
  %v787 = vmul.f32 %v774, 1.442695
  %v788 = vpow.pop %v787
  %v789 = vmul.f32 %v775, 1.442695
  %v790 = vpow.pop %v789
  %v791 = vmul.f32 %v776, 1.442695
  %v792 = vpow.pop %v791
  %v793 = vsub.f32 %v778, 1.0
  %v794 = vsub.f32 %v780, 1.0
  %v795 = vsub.f32 %v782, 1.0
  %v796 = vsub.f32 %v784, 1.0
  %v797 = vsub.f32 %v786, 1.0
  %v798 = vsub.f32 %v788, 1.0
  %v799 = vsub.f32 %v790, 1.0
  %v800 = vsub.f32 %v792, 1.0
  %v801 = vsel %vm761, %v753, %v793
  %v802 = vsel %vm762, %v754, %v794
  %v803 = vsel %vm763, %v755, %v795
  %v804 = vsel %vm764, %v756, %v796
  %v805 = vsel %vm765, %v757, %v797
  %v806 = vsel %vm766, %v758, %v798
  %v807 = vsel %vm767, %v759, %v799
  %v808 = vsel %vm768, %v760, %v800
  %v809 = vpack.c.bf16 %v802, %v801
  %v810 = vpack.c.bf16 %v804, %v803
  %v811 = vpack.c.bf16 %v806, %v805
  %v812 = vpack.c.bf16 %v808, %v807
  %v817 = vunpack.c.l.b16 %v809
  %v818 = vunpack.c.h.b16 %v809
  %v819 = vunpack.c.l.b16 %v810
  %v820 = vunpack.c.h.b16 %v810
  %v821 = vunpack.c.l.b16 %v811
  %v822 = vunpack.c.h.b16 %v811
  %v823 = vunpack.c.l.b16 %v812
  %v824 = vunpack.c.h.b16 %v812
  %v825 = vpack.c.b16 %v817, %v817
  %v826 = vpack.c.b16 %v818, %v818
  %v827 = vpack.c.b16 %v819, %v819
  %v828 = vpack.c.b16 %v820, %v820
  %v829 = vpack.c.b16 %v821, %v821
  %v830 = vpack.c.b16 %v822, %v822
  %v831 = vpack.c.b16 %v823, %v823
  %v832 = vpack.c.b16 %v824, %v824
  %841 = vst [vmem:[%s3] sm:$0xf] %v825
  %842 = vst [vmem:[%s3 + $0x4] sm:$0xf] %v826
  %843 = vst [vmem:[%s3 + $0x8] sm:$0xf] %v827
  %844 = vst [vmem:[%s3 + $0xc] sm:$0xf] %v828
  %845 = vst [vmem:[%s3 + $0x10] sm:$0xf] %v829
  %846 = vst [vmem:[%s3 + $0x14] sm:$0xf] %v830
  %847 = vst [vmem:[%s3 + $0x18] sm:$0xf] %v831
  %848 = vst [vmem:[%s3 + $0x1c] sm:$0xf] %v832
  // Predicated region
  $region14: #{online_gcrn_forward.10} parent=0 // pred_check
    _
  $region15: #{online_gcrn_forward.10} parent=0 // pred_check_branch
    %850 = sbr.rel (0) target = $region17
  $region16: #{online_gcrn_forward.10} parent=0 // pred_region
    _
  $region17: #{online_gcrn_forward.10} parent=0 // pred_fallthru
    _
  // Predicated region
  $region18: #{online_gcrn_forward.10} parent=0 // pred_check
    _
  $region19: #{online_gcrn_forward.10} parent=0 // pred_check_branch
    %852 = sbr.rel (0) target = $region21
  $region20: #{online_gcrn_forward.10} parent=0 // pred_region
    _
  $region21: #{online_gcrn_forward.10} parent=0 // pred_fallthru
    _

// kernel: online_gcrn_forward.13
$region0: #{online_gcrn_forward.13}
  #allocation0 [shape = 'u32[]', space=smem, size = 0x4, offset = 0x4, fixed_abs, tag = 'smem constant byte address 0x4 - core index']
  #allocation1 [shape = 'u32[144,128]{1,0:T(1,128)}', space=vmem, size = 0x12000, scoped, tag = 'internal scratch']
  %s0 = inlined_call_operand.vmem [shape: bf16[1,960], index: 0, kind: input, shape index: {}]
  %s1 = inlined_call_operand.vmem [shape: bf16[1,960], index: 1, kind: input, shape index: {}]
  %s2 = inlined_call_operand.vmem [shape: s8[960,3072], index: 2, kind: input, shape index: {}]
  %s3 = inlined_call_operand.vmem [shape: s8[960,3072], index: 3, kind: input, shape index: {}]
  %s4 = inlined_call_operand.vmem [shape: f32[1,3072], index: 4, kind: input, shape index: {}]
  %s5 = inlined_call_operand.vmem [shape: f32[1,3072], index: 5, kind: input, shape index: {}]
  %s6 = inlined_call_operand.vmem [shape: f32[1,3072], index: 6, kind: input, shape index: {}]
  %s7 = inlined_call_operand.vmem [shape: f32[1,3072], index: 7, kind: input, shape index: {}]
  %s8 = inlined_call_operand.vmem [shape: f32[1,1024], index: 8, kind: input, shape index: {}]
  %s9 = inlined_call_operand.vmem [shape: f32[1,1024], index: 9, kind: output, shape index: {}]
  %s10 = sld [smem:[#allocation0]]
  $region115: #{online_gcrn_forward.13} parent=0
    _
  %s12 = ssub.s32 1, %s10
  %s13 = scalar_select 0, %s12, %s10
  $region1: #{online_gcrn_forward.13} parent=0
    #allocation2 [shape = 'u8[737280]{0}', space=vmem, size = 0xb4000, scoped, tag = 'input window, operand 2']
    #allocation3 [shape = 'u8[737280]{0}', space=vmem, size = 0xb4000, scoped, tag = 'input window, operand 3']
    loop: start=0, step=1, limit=10
    $region2: #{online_gcrn_forward.13} parent=1 // loop_pre_header
      _
    $region3: #{online_gcrn_forward.13} parent=1 // loop_header
      %s15 = sphi 0, %s19
      %p16 = scmp.ge.s32.totalorder %s15, 10
      %s23 = sphi 0, %s23
      %s25 = sphi 0, %s23
      %s26 = sphi 0, %s25
      %s40 = sphi 0, %s26
      %s44 = sphi 0, %s44
      %s46 = sphi 0, %s44
      %s47 = sphi 0, %s46
      %s61 = sphi 0, %s47
      %s67 = sphi 0, %s69
      %s70 = sphi 0, %s67
      %s71 = sphi 0, %s70
      %s87 = sphi 0, %s71
      %s93 = sphi 0, %s95
      %s96 = sphi 0, %s93
      %s97 = sphi 0, %s96
      %s113 = sphi 0, %s97
      %s119 = sphi 0, %s121
      %s122 = sphi 0, %s119
      %s123 = sphi 0, %s122
      %s139 = sphi 0, %s123
      %s145 = sphi 0, %s147
      %s148 = sphi 0, %s145
      %s149 = sphi 0, %s148
      %s165 = sphi 0, %s149
      %s171 = sphi 0, %s173
      %s174 = sphi 0, %s171
      %s175 = sphi 0, %s174
      %s191 = sphi 0, %s175
      %s197 = sphi 0, %s199
      %s200 = sphi 0, %s197
      %s201 = sphi 0, %s200
      %s217 = sphi 0, %s201
      %s223 = sphi 0, %s225
      %s226 = sphi 0, %s223
      %s227 = sphi 0, %s226
      %s243 = sphi 0, %s227
      %s249 = sphi 0, %s251
      %s252 = sphi 0, %s249
      %s253 = sphi 0, %s252
      %s269 = sphi 0, %s253
    $region4: #{online_gcrn_forward.13} parent=1 // loop_header_branch
      %18 = sbr.rel (%p16) target = $region8
    $region5: #{online_gcrn_forward.13} parent=1 // loop_body
      %s20 = ssub.s32 %s15, 1
      %s21 = ssub.s32 %s15, 2
      %s22 = sadd.s32 %s15, 1
      %s24 = sadd.s32 %s23, 1
      %p27 = scmp.eq.s32.totalorder %s15, 7
      %p28 = scmp.ne.s32.totalorder %s23, %s25
      %p29 = scmp.eq.s32.totalorder %s15, 0
      %p30 = por %p28, %p29
      %p31 = scmp.ne.s32.totalorder %s23, %s25
      %p32 = scmp.eq.s32.totalorder %s20, 7
      %p33 = por %p31, %p32
      %p34 = scmp.ne.s32.totalorder %s25, %s26
      %p35 = scmp.eq.s32.totalorder %s20, 0
      %p36 = por %p34, %p35
      %p37 = scmp.ne.s32.totalorder %s25, %s26
      %p38 = scmp.eq.s32.totalorder %s21, 7
      %p39 = por %p37, %p38
      %p41 = scmp.ne.s32.totalorder %s26, %s40
      %p42 = scmp.eq.s32.totalorder %s21, 0
      %p43 = por %p41, %p42
      %s45 = sadd.s32 %s44, 1
      %p48 = scmp.eq.s32.totalorder %s15, 7
      %p49 = scmp.ne.s32.totalorder %s44, %s46
      %p50 = scmp.eq.s32.totalorder %s15, 0
      %p51 = por %p49, %p50
      %p52 = scmp.ne.s32.totalorder %s44, %s46
      %p53 = scmp.eq.s32.totalorder %s20, 7
      %p54 = por %p52, %p53
      %p55 = scmp.ne.s32.totalorder %s46, %s47
      %p56 = scmp.eq.s32.totalorder %s20, 0
      %p57 = por %p55, %p56
      %p58 = scmp.ne.s32.totalorder %s46, %s47
      %p59 = scmp.eq.s32.totalorder %s21, 7
      %p60 = por %p58, %p59
      %p62 = scmp.ne.s32.totalorder %s47, %s61
      %p63 = scmp.eq.s32.totalorder %s21, 0
      %p64 = por %p62, %p63
      %s65 = ssub.s32 %s15, %s22
      %p66 = scmp.eq.s32.totalorder %s65, 0
      %s68 = sadd.s32 %s67, 1
      %s69 = scalar_select %p66, %s67, %s68
      %p72 = pneg %p66
      %p73 = scmp.eq.s32.totalorder %s15, 7
      %p74 = por %p72, %p73
      %p75 = scmp.ne.s32.totalorder %s67, %s70
      %p76 = scmp.eq.s32.totalorder %s15, 0
      %p77 = por %p75, %p76
      %p78 = scmp.ne.s32.totalorder %s67, %s70
      %p79 = scmp.eq.s32.totalorder %s20, 7
      %p80 = por %p78, %p79
      %p81 = scmp.ne.s32.totalorder %s70, %s71
      %p82 = scmp.eq.s32.totalorder %s20, 0
      %p83 = por %p81, %p82
      %p84 = scmp.ne.s32.totalorder %s70, %s71
      %p85 = scmp.eq.s32.totalorder %s21, 7
      %p86 = por %p84, %p85
      %p88 = scmp.ne.s32.totalorder %s71, %s87
      %p89 = scmp.eq.s32.totalorder %s21, 0
      %p90 = por %p88, %p89
      %s91 = ssub.s32 %s15, %s22
      %p92 = scmp.eq.s32.totalorder %s91, 0
      %s94 = sadd.s32 %s93, 1
      %s95 = scalar_select %p92, %s93, %s94
      %p98 = pneg %p92
      %p99 = scmp.eq.s32.totalorder %s15, 7
      %p100 = por %p98, %p99
      %p101 = scmp.ne.s32.totalorder %s93, %s96
      %p102 = scmp.eq.s32.totalorder %s15, 0
      %p103 = por %p101, %p102
      %p104 = scmp.ne.s32.totalorder %s93, %s96
      %p105 = scmp.eq.s32.totalorder %s20, 7
      %p106 = por %p104, %p105
      %p107 = scmp.ne.s32.totalorder %s96, %s97
      %p108 = scmp.eq.s32.totalorder %s20, 0
      %p109 = por %p107, %p108
      %p110 = scmp.ne.s32.totalorder %s96, %s97
      %p111 = scmp.eq.s32.totalorder %s21, 7
      %p112 = por %p110, %p111
      %p114 = scmp.ne.s32.totalorder %s97, %s113
      %p115 = scmp.eq.s32.totalorder %s21, 0
      %p116 = por %p114, %p115
      %s117 = ssub.s32 %s15, %s22
      %p118 = scmp.eq.s32.totalorder %s117, 0
      %s120 = sadd.s32 %s119, 1
      %s121 = scalar_select %p118, %s119, %s120
      %p124 = pneg %p118
      %p125 = scmp.eq.s32.totalorder %s15, 7
      %p126 = por %p124, %p125
      %p127 = scmp.ne.s32.totalorder %s119, %s122
      %p128 = scmp.eq.s32.totalorder %s15, 0
      %p129 = por %p127, %p128
      %p130 = scmp.ne.s32.totalorder %s119, %s122
      %p131 = scmp.eq.s32.totalorder %s20, 7
      %p132 = por %p130, %p131
      %p133 = scmp.ne.s32.totalorder %s122, %s123
      %p134 = scmp.eq.s32.totalorder %s20, 0
      %p135 = por %p133, %p134
      %p136 = scmp.ne.s32.totalorder %s122, %s123
      %p137 = scmp.eq.s32.totalorder %s21, 7
      %p138 = por %p136, %p137
      %p140 = scmp.ne.s32.totalorder %s123, %s139
      %p141 = scmp.eq.s32.totalorder %s21, 0
      %p142 = por %p140, %p141
      %s143 = ssub.s32 %s15, %s22
      %p144 = scmp.eq.s32.totalorder %s143, 0
      %s146 = sadd.s32 %s145, 1
      %s147 = scalar_select %p144, %s145, %s146
      %p150 = pneg %p144
      %p151 = scmp.eq.s32.totalorder %s15, 7
      %p152 = por %p150, %p151
      %p153 = scmp.ne.s32.totalorder %s145, %s148
      %p154 = scmp.eq.s32.totalorder %s15, 0
      %p155 = por %p153, %p154
      %p156 = scmp.ne.s32.totalorder %s145, %s148
      %p157 = scmp.eq.s32.totalorder %s20, 7
      %p158 = por %p156, %p157
      %p159 = scmp.ne.s32.totalorder %s148, %s149
      %p160 = scmp.eq.s32.totalorder %s20, 0
      %p161 = por %p159, %p160
      %p162 = scmp.ne.s32.totalorder %s148, %s149
      %p163 = scmp.eq.s32.totalorder %s21, 7
      %p164 = por %p162, %p163
      %p166 = scmp.ne.s32.totalorder %s149, %s165
      %p167 = scmp.eq.s32.totalorder %s21, 0
      %p168 = por %p166, %p167
      %s169 = ssub.s32 %s15, %s22
      %p170 = scmp.eq.s32.totalorder %s169, 0
      %s172 = sadd.s32 %s171, 1
      %s173 = scalar_select %p170, %s171, %s172
      %p176 = pneg %p170
      %p177 = scmp.eq.s32.totalorder %s15, 7
      %p178 = por %p176, %p177
      %p179 = scmp.ne.s32.totalorder %s171, %s174
      %p180 = scmp.eq.s32.totalorder %s15, 0
      %p181 = por %p179, %p180
      %p182 = scmp.ne.s32.totalorder %s171, %s174
      %p183 = scmp.eq.s32.totalorder %s20, 7
      %p184 = por %p182, %p183
      %p185 = scmp.ne.s32.totalorder %s174, %s175
      %p186 = scmp.eq.s32.totalorder %s20, 0
      %p187 = por %p185, %p186
      %p188 = scmp.ne.s32.totalorder %s174, %s175
      %p189 = scmp.eq.s32.totalorder %s21, 7
      %p190 = por %p188, %p189
      %p192 = scmp.ne.s32.totalorder %s175, %s191
      %p193 = scmp.eq.s32.totalorder %s21, 0
      %p194 = por %p192, %p193
      %s195 = ssub.s32 %s15, %s22
      %p196 = scmp.eq.s32.totalorder %s195, 0
      %s198 = sadd.s32 %s197, 1
      %s199 = scalar_select %p196, %s197, %s198
      %p202 = pneg %p196
      %p203 = scmp.eq.s32.totalorder %s15, 7
      %p204 = por %p202, %p203
      %p205 = scmp.ne.s32.totalorder %s197, %s200
      %p206 = scmp.eq.s32.totalorder %s15, 0
      %p207 = por %p205, %p206
      %p208 = scmp.ne.s32.totalorder %s197, %s200
      %p209 = scmp.eq.s32.totalorder %s20, 7
      %p210 = por %p208, %p209
      %p211 = scmp.ne.s32.totalorder %s200, %s201
      %p212 = scmp.eq.s32.totalorder %s20, 0
      %p213 = por %p211, %p212
      %p214 = scmp.ne.s32.totalorder %s200, %s201
      %p215 = scmp.eq.s32.totalorder %s21, 7
      %p216 = por %p214, %p215
      %p218 = scmp.ne.s32.totalorder %s201, %s217
      %p219 = scmp.eq.s32.totalorder %s21, 0
      %p220 = por %p218, %p219
      %s221 = ssub.s32 %s15, %s22
      %p222 = scmp.eq.s32.totalorder %s221, 0
      %s224 = sadd.s32 %s223, 1
      %s225 = scalar_select %p222, %s223, %s224
      %p228 = pneg %p222
      %p229 = scmp.eq.s32.totalorder %s15, 7
      %p230 = por %p228, %p229
      %p231 = scmp.ne.s32.totalorder %s223, %s226
      %p232 = scmp.eq.s32.totalorder %s15, 0
      %p233 = por %p231, %p232
      %p234 = scmp.ne.s32.totalorder %s223, %s226
      %p235 = scmp.eq.s32.totalorder %s20, 7
      %p236 = por %p234, %p235
      %p237 = scmp.ne.s32.totalorder %s226, %s227
      %p238 = scmp.eq.s32.totalorder %s20, 0
      %p239 = por %p237, %p238
      %p240 = scmp.ne.s32.totalorder %s226, %s227
      %p241 = scmp.eq.s32.totalorder %s21, 7
      %p242 = por %p240, %p241
      %p244 = scmp.ne.s32.totalorder %s227, %s243
      %p245 = scmp.eq.s32.totalorder %s21, 0
      %p246 = por %p244, %p245
      %s247 = ssub.s32 %s15, %s22
      %p248 = scmp.eq.s32.totalorder %s247, 0
      %s250 = sadd.s32 %s249, 1
      %s251 = scalar_select %p248, %s249, %s250
      %p254 = pneg %p248
      %p255 = scmp.eq.s32.totalorder %s15, 7
      %p256 = por %p254, %p255
      %p257 = scmp.ne.s32.totalorder %s249, %s252
      %p258 = scmp.eq.s32.totalorder %s15, 0
      %p259 = por %p257, %p258
      %p260 = scmp.ne.s32.totalorder %s249, %s252
      %p261 = scmp.eq.s32.totalorder %s20, 7
      %p262 = por %p260, %p261
      %p263 = scmp.ne.s32.totalorder %s252, %s253
      %p264 = scmp.eq.s32.totalorder %s20, 0
      %p265 = por %p263, %p264
      %p266 = scmp.ne.s32.totalorder %s252, %s253
      %p267 = scmp.eq.s32.totalorder %s21, 7
      %p268 = por %p266, %p267
      %p270 = scmp.ne.s32.totalorder %s253, %s269
      %p271 = scmp.eq.s32.totalorder %s21, 0
      %p272 = por %p270, %p271
      %p273 = scmp.le.s32.totalorder 1, %s15
      %p274 = scmp.lt.s32.totalorder %s15, 9
      %p275 = pnand %p273, %p274
      %p276 = pneg %p275
      // Predicated region
      $region9: #{online_gcrn_forward.13} parent=5 // pred_check
        _
      $region10: #{online_gcrn_forward.13} parent=5 // pred_check_branch
        %278 = sbr.rel (%p275) target = $region12
      $region11: #{online_gcrn_forward.13} parent=5 // pred_region
        %s279 = ssub.s32 %s15, 1
        // Predicated region
        $region13: #{online_gcrn_forward.13} parent=11 // pred_check
          %p280 = pneg %p36
        $region14: #{online_gcrn_forward.13} parent=11 // pred_check_branch
          %282 = sbr.rel (%p280) target = $region16
        $region15: #{online_gcrn_forward.13} parent=11 // pred_region
          _
        $region16: #{online_gcrn_forward.13} parent=11 // pred_fallthru
          _
        // Predicated region
        $region17: #{online_gcrn_forward.13} parent=11 // pred_check
          %p283 = pneg %p57
        $region18: #{online_gcrn_forward.13} parent=11 // pred_check_branch
          %285 = sbr.rel (%p283) target = $region20
        $region19: #{online_gcrn_forward.13} parent=11 // pred_region
          _
        $region20: #{online_gcrn_forward.13} parent=11 // pred_fallthru
          _
      $region12: #{online_gcrn_forward.13} parent=5 // pred_fallthru
        _
      %p286 = scmp.lt.s32.totalorder %s15, 8
      // Predicated region
      $region21: #{online_gcrn_forward.13} parent=5 // pred_check
        %p287 = pneg %p286
      $region22: #{online_gcrn_forward.13} parent=5 // pred_check_branch
        %289 = sbr.rel (%p287) target = $region24
      $region23: #{online_gcrn_forward.13} parent=5 // pred_region
        // Predicated region
        $region25: #{online_gcrn_forward.13} parent=23 // pred_check
          %p290 = pneg %p77
        $region26: #{online_gcrn_forward.13} parent=23 // pred_check_branch
          %292 = sbr.rel (%p290) target = $region28
        $region27: #{online_gcrn_forward.13} parent=23 // pred_region
          %s293 = sand.u32 %s67, 1
          %s294 = sand.u32 %s67, 1
          %s295 = smul.addr %s294, 720
          %s296 = scalar_lea.vmem [#allocation2], %s295
          %s297 = smul.u32 3, %s15
          %s298 = smul.addr %s297, 8
          %s299 = scalar_lea.vmem %s2, %s298
          // Predicated region
          $region29: #{online_gcrn_forward.13} parent=27 // pred_check
            _
          $region30: #{online_gcrn_forward.13} parent=27 // pred_check_branch
            %301 = sbr.rel (0) target = $region32
          $region31: #{online_gcrn_forward.13} parent=27 // pred_region
            // Predicated region
            $region33: #{online_gcrn_forward.13} parent=31 // pred_check
              _
            $region34: #{online_gcrn_forward.13} parent=31 // pred_check_branch
              %303 = sbr.rel (0) target = $region36
            $region35: #{online_gcrn_forward.13} parent=31 // pred_region
              loop: start=0, step=1, limit=1
              $region37: #{online_gcrn_forward.13} parent=35 // loop_pre_header
                _
              $region38: #{online_gcrn_forward.13} parent=35 // loop_header
                %s305 = sphi 0, %s309
                %p306 = scmp.ge.s32.totalorder %s305, 1
                %s310 = sphi %s299, %s299
                %s311 = sphi %s296, %s296
              $region39: #{online_gcrn_forward.13} parent=35 // loop_header_branch
                %308 = sbr.rel (%p306) target = $region43
              $region40: #{online_gcrn_forward.13} parent=35 // loop_body
                %v312 = vld [vmem:[%s310] sm:$0xff]
                %313 = vst [vmem:[%s311] sm:$0xff] %v312
                %v314 = vld [vmem:[%s310 + $0x8] sm:$0xff]
                %315 = vst [vmem:[%s311 + $0x8] sm:$0xff] %v314
                %v316 = vld [vmem:[%s310 + $0x10] sm:$0xff]
                %317 = vst [vmem:[%s311 + $0x10] sm:$0xff] %v316
                %v318 = vld [vmem:[%s310 + $0xc0] sm:$0xff]
                %319 = vst [vmem:[%s311 + $0x18] sm:$0xff] %v318
                %v320 = vld [vmem:[%s310 + $0xc8] sm:$0xff]
                %321 = vst [vmem:[%s311 + $0x20] sm:$0xff] %v320
                %v322 = vld [vmem:[%s310 + $0xd0] sm:$0xff]
                %323 = vst [vmem:[%s311 + $0x28] sm:$0xff] %v322
                %v324 = vld [vmem:[%s310 + $0x180] sm:$0xff]
                %325 = vst [vmem:[%s311 + $0x30] sm:$0xff] %v324
                %v326 = vld [vmem:[%s310 + $0x188] sm:$0xff]
                %327 = vst [vmem:[%s311 + $0x38] sm:$0xff] %v326
                %v328 = vld [vmem:[%s310 + $0x190] sm:$0xff]
                %329 = vst [vmem:[%s311 + $0x40] sm:$0xff] %v328
                %v330 = vld [vmem:[%s310 + $0x240] sm:$0xff]
                %331 = vst [vmem:[%s311 + $0x48] sm:$0xff] %v330
                %v332 = vld [vmem:[%s310 + $0x248] sm:$0xff]
                %333 = vst [vmem:[%s311 + $0x50] sm:$0xff] %v332
                %v334 = vld [vmem:[%s310 + $0x250] sm:$0xff]
                %335 = vst [vmem:[%s311 + $0x58] sm:$0xff] %v334
                %v336 = vld [vmem:[%s310 + $0x300] sm:$0xff]
                %337 = vst [vmem:[%s311 + $0x60] sm:$0xff] %v336
                %v338 = vld [vmem:[%s310 + $0x308] sm:$0xff]
                %339 = vst [vmem:[%s311 + $0x68] sm:$0xff] %v338
                %v340 = vld [vmem:[%s310 + $0x310] sm:$0xff]
                %341 = vst [vmem:[%s311 + $0x70] sm:$0xff] %v340
                %v342 = vld [vmem:[%s310 + $0x3c0] sm:$0xff]
                %343 = vst [vmem:[%s311 + $0x78] sm:$0xff] %v342
                %v344 = vld [vmem:[%s310 + $0x3c8] sm:$0xff]
                %345 = vst [vmem:[%s311 + $0x80] sm:$0xff] %v344
                %v346 = vld [vmem:[%s310 + $0x3d0] sm:$0xff]
                %347 = vst [vmem:[%s311 + $0x88] sm:$0xff] %v346
                %v348 = vld [vmem:[%s310 + $0x480] sm:$0xff]
                %349 = vst [vmem:[%s311 + $0x90] sm:$0xff] %v348
                %v350 = vld [vmem:[%s310 + $0x488] sm:$0xff]
                %351 = vst [vmem:[%s311 + $0x98] sm:$0xff] %v350
                %v352 = vld [vmem:[%s310 + $0x490] sm:$0xff]
                %353 = vst [vmem:[%s311 + $0xa0] sm:$0xff] %v352
                %v354 = vld [vmem:[%s310 + $0x540] sm:$0xff]
                %355 = vst [vmem:[%s311 + $0xa8] sm:$0xff] %v354
                %v356 = vld [vmem:[%s310 + $0x548] sm:$0xff]
                %357 = vst [vmem:[%s311 + $0xb0] sm:$0xff] %v356
                %v358 = vld [vmem:[%s310 + $0x550] sm:$0xff]
                %359 = vst [vmem:[%s311 + $0xb8] sm:$0xff] %v358
                %v360 = vld [vmem:[%s310 + $0x600] sm:$0xff]
                %361 = vst [vmem:[%s311 + $0xc0] sm:$0xff] %v360
                %v362 = vld [vmem:[%s310 + $0x608] sm:$0xff]
                %363 = vst [vmem:[%s311 + $0xc8] sm:$0xff] %v362
                %v364 = vld [vmem:[%s310 + $0x610] sm:$0xff]
                %365 = vst [vmem:[%s311 + $0xd0] sm:$0xff] %v364
                %v366 = vld [vmem:[%s310 + $0x6c0] sm:$0xff]
                %367 = vst [vmem:[%s311 + $0xd8] sm:$0xff] %v366
                %v368 = vld [vmem:[%s310 + $0x6c8] sm:$0xff]
                %369 = vst [vmem:[%s311 + $0xe0] sm:$0xff] %v368
                %v370 = vld [vmem:[%s310 + $0x6d0] sm:$0xff]
                %371 = vst [vmem:[%s311 + $0xe8] sm:$0xff] %v370
                %v372 = vld [vmem:[%s310 + $0x780] sm:$0xff]
                %373 = vst [vmem:[%s311 + $0xf0] sm:$0xff] %v372
                %v374 = vld [vmem:[%s310 + $0x788] sm:$0xff]
                %375 = vst [vmem:[%s311 + $0xf8] sm:$0xff] %v374
                %v376 = vld [vmem:[%s310 + $0x790] sm:$0xff]
                %377 = vst [vmem:[%s311 + $0x100] sm:$0xff] %v376
                %v378 = vld [vmem:[%s310 + $0x840] sm:$0xff]
                %379 = vst [vmem:[%s311 + $0x108] sm:$0xff] %v378
                %v380 = vld [vmem:[%s310 + $0x848] sm:$0xff]
                %381 = vst [vmem:[%s311 + $0x110] sm:$0xff] %v380
                %v382 = vld [vmem:[%s310 + $0x850] sm:$0xff]
                %383 = vst [vmem:[%s311 + $0x118] sm:$0xff] %v382
                %v384 = vld [vmem:[%s310 + $0x900] sm:$0xff]
                %385 = vst [vmem:[%s311 + $0x120] sm:$0xff] %v384
                %v386 = vld [vmem:[%s310 + $0x908] sm:$0xff]
                %387 = vst [vmem:[%s311 + $0x128] sm:$0xff] %v386
                %v388 = vld [vmem:[%s310 + $0x910] sm:$0xff]
                %389 = vst [vmem:[%s311 + $0x130] sm:$0xff] %v388
                %v390 = vld [vmem:[%s310 + $0x9c0] sm:$0xff]
                %391 = vst [vmem:[%s311 + $0x138] sm:$0xff] %v390
                %v392 = vld [vmem:[%s310 + $0x9c8] sm:$0xff]
                %393 = vst [vmem:[%s311 + $0x140] sm:$0xff] %v392
                %v394 = vld [vmem:[%s310 + $0x9d0] sm:$0xff]
                %395 = vst [vmem:[%s311 + $0x148] sm:$0xff] %v394
                %v396 = vld [vmem:[%s310 + $0xa80] sm:$0xff]
                %397 = vst [vmem:[%s311 + $0x150] sm:$0xff] %v396
                %v398 = vld [vmem:[%s310 + $0xa88] sm:$0xff]
                %399 = vst [vmem:[%s311 + $0x158] sm:$0xff] %v398
                %v400 = vld [vmem:[%s310 + $0xa90] sm:$0xff]
                %401 = vst [vmem:[%s311 + $0x160] sm:$0xff] %v400
                %v402 = vld [vmem:[%s310 + $0xb40] sm:$0xff]
                %403 = vst [vmem:[%s311 + $0x168] sm:$0xff] %v402
                %v404 = vld [vmem:[%s310 + $0xb48] sm:$0xff]
                %405 = vst [vmem:[%s311 + $0x170] sm:$0xff] %v404
                %v406 = vld [vmem:[%s310 + $0xb50] sm:$0xff]
                %407 = vst [vmem:[%s311 + $0x178] sm:$0xff] %v406
                %v408 = vld [vmem:[%s310 + $0xc00] sm:$0xff]
                %409 = vst [vmem:[%s311 + $0x180] sm:$0xff] %v408
                %v410 = vld [vmem:[%s310 + $0xc08] sm:$0xff]
                %411 = vst [vmem:[%s311 + $0x188] sm:$0xff] %v410
                %v412 = vld [vmem:[%s310 + $0xc10] sm:$0xff]
                %413 = vst [vmem:[%s311 + $0x190] sm:$0xff] %v412
                %v414 = vld [vmem:[%s310 + $0xcc0] sm:$0xff]
                %415 = vst [vmem:[%s311 + $0x198] sm:$0xff] %v414
                %v416 = vld [vmem:[%s310 + $0xcc8] sm:$0xff]
                %417 = vst [vmem:[%s311 + $0x1a0] sm:$0xff] %v416
                %v418 = vld [vmem:[%s310 + $0xcd0] sm:$0xff]
                %419 = vst [vmem:[%s311 + $0x1a8] sm:$0xff] %v418
                %v420 = vld [vmem:[%s310 + $0xd80] sm:$0xff]
                %421 = vst [vmem:[%s311 + $0x1b0] sm:$0xff] %v420
                %v422 = vld [vmem:[%s310 + $0xd88] sm:$0xff]
                %423 = vst [vmem:[%s311 + $0x1b8] sm:$0xff] %v422
                %v424 = vld [vmem:[%s310 + $0xd90] sm:$0xff]
                %425 = vst [vmem:[%s311 + $0x1c0] sm:$0xff] %v424
                %v426 = vld [vmem:[%s310 + $0xe40] sm:$0xff]
                %427 = vst [vmem:[%s311 + $0x1c8] sm:$0xff] %v426
                %v428 = vld [vmem:[%s310 + $0xe48] sm:$0xff]
                %429 = vst [vmem:[%s311 + $0x1d0] sm:$0xff] %v428
                %v430 = vld [vmem:[%s310 + $0xe50] sm:$0xff]
                %431 = vst [vmem:[%s311 + $0x1d8] sm:$0xff] %v430
                %v432 = vld [vmem:[%s310 + $0xf00] sm:$0xff]
                %433 = vst [vmem:[%s311 + $0x1e0] sm:$0xff] %v432
                %v434 = vld [vmem:[%s310 + $0xf08] sm:$0xff]
                %435 = vst [vmem:[%s311 + $0x1e8] sm:$0xff] %v434
                %v436 = vld [vmem:[%s310 + $0xf10] sm:$0xff]
                %437 = vst [vmem:[%s311 + $0x1f0] sm:$0xff] %v436
                %v438 = vld [vmem:[%s310 + $0xfc0] sm:$0xff]
                %439 = vst [vmem:[%s311 + $0x1f8] sm:$0xff] %v438
                %v440 = vld [vmem:[%s310 + $0xfc8] sm:$0xff]
                %441 = vst [vmem:[%s311 + $0x200] sm:$0xff] %v440
                %v442 = vld [vmem:[%s310 + $0xfd0] sm:$0xff]
                %443 = vst [vmem:[%s311 + $0x208] sm:$0xff] %v442
                %v444 = vld [vmem:[%s310 + $0x1080] sm:$0xff]
                %445 = vst [vmem:[%s311 + $0x210] sm:$0xff] %v444
                %v446 = vld [vmem:[%s310 + $0x1088] sm:$0xff]
                %447 = vst [vmem:[%s311 + $0x218] sm:$0xff] %v446
                %v448 = vld [vmem:[%s310 + $0x1090] sm:$0xff]
                %449 = vst [vmem:[%s311 + $0x220] sm:$0xff] %v448
                %v450 = vld [vmem:[%s310 + $0x1140] sm:$0xff]
                %451 = vst [vmem:[%s311 + $0x228] sm:$0xff] %v450
                %v452 = vld [vmem:[%s310 + $0x1148] sm:$0xff]
                %453 = vst [vmem:[%s311 + $0x230] sm:$0xff] %v452
                %v454 = vld [vmem:[%s310 + $0x1150] sm:$0xff]
                %455 = vst [vmem:[%s311 + $0x238] sm:$0xff] %v454
                %v456 = vld [vmem:[%s310 + $0x1200] sm:$0xff]
                %457 = vst [vmem:[%s311 + $0x240] sm:$0xff] %v456
                %v458 = vld [vmem:[%s310 + $0x1208] sm:$0xff]
                %459 = vst [vmem:[%s311 + $0x248] sm:$0xff] %v458
                %v460 = vld [vmem:[%s310 + $0x1210] sm:$0xff]
                %461 = vst [vmem:[%s311 + $0x250] sm:$0xff] %v460
                %v462 = vld [vmem:[%s310 + $0x12c0] sm:$0xff]
                %463 = vst [vmem:[%s311 + $0x258] sm:$0xff] %v462
                %v464 = vld [vmem:[%s310 + $0x12c8] sm:$0xff]
                %465 = vst [vmem:[%s311 + $0x260] sm:$0xff] %v464
                %v466 = vld [vmem:[%s310 + $0x12d0] sm:$0xff]
                %467 = vst [vmem:[%s311 + $0x268] sm:$0xff] %v466
                %v468 = vld [vmem:[%s310 + $0x1380] sm:$0xff]
                %469 = vst [vmem:[%s311 + $0x270] sm:$0xff] %v468
                %v470 = vld [vmem:[%s310 + $0x1388] sm:$0xff]
                %471 = vst [vmem:[%s311 + $0x278] sm:$0xff] %v470
                %v472 = vld [vmem:[%s310 + $0x1390] sm:$0xff]
                %473 = vst [vmem:[%s311 + $0x280] sm:$0xff] %v472
                %v474 = vld [vmem:[%s310 + $0x1440] sm:$0xff]
                %475 = vst [vmem:[%s311 + $0x288] sm:$0xff] %v474
                %v476 = vld [vmem:[%s310 + $0x1448] sm:$0xff]
                %477 = vst [vmem:[%s311 + $0x290] sm:$0xff] %v476
                %v478 = vld [vmem:[%s310 + $0x1450] sm:$0xff]
                %479 = vst [vmem:[%s311 + $0x298] sm:$0xff] %v478
                %v480 = vld [vmem:[%s310 + $0x1500] sm:$0xff]
                %481 = vst [vmem:[%s311 + $0x2a0] sm:$0xff] %v480
                %v482 = vld [vmem:[%s310 + $0x1508] sm:$0xff]
                %483 = vst [vmem:[%s311 + $0x2a8] sm:$0xff] %v482
                %v484 = vld [vmem:[%s310 + $0x1510] sm:$0xff]
                %485 = vst [vmem:[%s311 + $0x2b0] sm:$0xff] %v484
                %v486 = vld [vmem:[%s310 + $0x15c0] sm:$0xff]
                %487 = vst [vmem:[%s311 + $0x2b8] sm:$0xff] %v486
                %v488 = vld [vmem:[%s310 + $0x15c8] sm:$0xff]
                %489 = vst [vmem:[%s311 + $0x2c0] sm:$0xff] %v488
                %v490 = vld [vmem:[%s310 + $0x15d0] sm:$0xff]
                %491 = vst [vmem:[%s311 + $0x2c8] sm:$0xff] %v490
              $region41: #{online_gcrn_forward.13} parent=35 // loop_footer
                %s309 = sadd.s32 1, %s305
              $region42: #{online_gcrn_forward.13} parent=35 // loop_footer_branch
                %304 = sbr.rel target = $region38
              $region43: #{online_gcrn_forward.13} parent=35 // loop_exit
                _
            $region36: #{online_gcrn_forward.13} parent=31 // pred_fallthru
              _
            // Predicated region
            $region44: #{online_gcrn_forward.13} parent=31 // pred_check
              _
            $region45: #{online_gcrn_forward.13} parent=31 // pred_check_branch
              %493 = sbr.rel target = $region47
            $region46: #{online_gcrn_forward.13} parent=31 // pred_region
              _
            $region47: #{online_gcrn_forward.13} parent=31 // pred_fallthru
              _
          $region32: #{online_gcrn_forward.13} parent=27 // pred_fallthru
            _
          %494 = vnop
        $region28: #{online_gcrn_forward.13} parent=23 // pred_fallthru
          _
        // Predicated region
        $region48: #{online_gcrn_forward.13} parent=23 // pred_check
          %p495 = pneg %p103
        $region49: #{online_gcrn_forward.13} parent=23 // pred_check_branch
          %497 = sbr.rel (%p495) target = $region51
        $region50: #{online_gcrn_forward.13} parent=23 // pred_region
          %s498 = sand.u32 %s93, 1
          %s499 = sand.u32 %s93, 1
          %s500 = smul.addr %s499, 720
          %s501 = scalar_lea.vmem [#allocation3], %s500
          %s502 = smul.u32 3, %s15
          %s503 = smul.addr %s502, 8
          %s504 = scalar_lea.vmem %s3, %s503
          // Predicated region
          $region52: #{online_gcrn_forward.13} parent=50 // pred_check
            _
          $region53: #{online_gcrn_forward.13} parent=50 // pred_check_branch
            %506 = sbr.rel (0) target = $region55
          $region54: #{online_gcrn_forward.13} parent=50 // pred_region
            // Predicated region
            $region56: #{online_gcrn_forward.13} parent=54 // pred_check
              _
            $region57: #{online_gcrn_forward.13} parent=54 // pred_check_branch
              %508 = sbr.rel (0) target = $region59
            $region58: #{online_gcrn_forward.13} parent=54 // pred_region
              loop: start=0, step=1, limit=1
              $region60: #{online_gcrn_forward.13} parent=58 // loop_pre_header
                _
              $region61: #{online_gcrn_forward.13} parent=58 // loop_header
                %s510 = sphi 0, %s514
                %p511 = scmp.ge.s32.totalorder %s510, 1
                %s515 = sphi %s504, %s504
                %s516 = sphi %s501, %s501
              $region62: #{online_gcrn_forward.13} parent=58 // loop_header_branch
                %513 = sbr.rel (%p511) target = $region66
              $region63: #{online_gcrn_forward.13} parent=58 // loop_body
                %v517 = vld [vmem:[%s515] sm:$0xff]
                %518 = vst [vmem:[%s516] sm:$0xff] %v517
                %v519 = vld [vmem:[%s515 + $0x8] sm:$0xff]
                %520 = vst [vmem:[%s516 + $0x8] sm:$0xff] %v519
                %v521 = vld [vmem:[%s515 + $0x10] sm:$0xff]
                %522 = vst [vmem:[%s516 + $0x10] sm:$0xff] %v521
                %v523 = vld [vmem:[%s515 + $0xc0] sm:$0xff]
                %524 = vst [vmem:[%s516 + $0x18] sm:$0xff] %v523
                %v525 = vld [vmem:[%s515 + $0xc8] sm:$0xff]
                %526 = vst [vmem:[%s516 + $0x20] sm:$0xff] %v525
                %v527 = vld [vmem:[%s515 + $0xd0] sm:$0xff]
                %528 = vst [vmem:[%s516 + $0x28] sm:$0xff] %v527
                %v529 = vld [vmem:[%s515 + $0x180] sm:$0xff]
                %530 = vst [vmem:[%s516 + $0x30] sm:$0xff] %v529
                %v531 = vld [vmem:[%s515 + $0x188] sm:$0xff]
                %532 = vst [vmem:[%s516 + $0x38] sm:$0xff] %v531
                %v533 = vld [vmem:[%s515 + $0x190] sm:$0xff]
                %534 = vst [vmem:[%s516 + $0x40] sm:$0xff] %v533
                %v535 = vld [vmem:[%s515 + $0x240] sm:$0xff]
                %536 = vst [vmem:[%s516 + $0x48] sm:$0xff] %v535
                %v537 = vld [vmem:[%s515 + $0x248] sm:$0xff]
                %538 = vst [vmem:[%s516 + $0x50] sm:$0xff] %v537
                %v539 = vld [vmem:[%s515 + $0x250] sm:$0xff]
                %540 = vst [vmem:[%s516 + $0x58] sm:$0xff] %v539
                %v541 = vld [vmem:[%s515 + $0x300] sm:$0xff]
                %542 = vst [vmem:[%s516 + $0x60] sm:$0xff] %v541
                %v543 = vld [vmem:[%s515 + $0x308] sm:$0xff]
                %544 = vst [vmem:[%s516 + $0x68] sm:$0xff] %v543
                %v545 = vld [vmem:[%s515 + $0x310] sm:$0xff]
                %546 = vst [vmem:[%s516 + $0x70] sm:$0xff] %v545
                %v547 = vld [vmem:[%s515 + $0x3c0] sm:$0xff]
                %548 = vst [vmem:[%s516 + $0x78] sm:$0xff] %v547
                %v549 = vld [vmem:[%s515 + $0x3c8] sm:$0xff]
                %550 = vst [vmem:[%s516 + $0x80] sm:$0xff] %v549
                %v551 = vld [vmem:[%s515 + $0x3d0] sm:$0xff]
                %552 = vst [vmem:[%s516 + $0x88] sm:$0xff] %v551
                %v553 = vld [vmem:[%s515 + $0x480] sm:$0xff]
                %554 = vst [vmem:[%s516 + $0x90] sm:$0xff] %v553
                %v555 = vld [vmem:[%s515 + $0x488] sm:$0xff]
                %556 = vst [vmem:[%s516 + $0x98] sm:$0xff] %v555
                %v557 = vld [vmem:[%s515 + $0x490] sm:$0xff]
                %558 = vst [vmem:[%s516 + $0xa0] sm:$0xff] %v557
                %v559 = vld [vmem:[%s515 + $0x540] sm:$0xff]
                %560 = vst [vmem:[%s516 + $0xa8] sm:$0xff] %v559
                %v561 = vld [vmem:[%s515 + $0x548] sm:$0xff]
                %562 = vst [vmem:[%s516 + $0xb0] sm:$0xff] %v561
                %v563 = vld [vmem:[%s515 + $0x550] sm:$0xff]
                %564 = vst [vmem:[%s516 + $0xb8] sm:$0xff] %v563
                %v565 = vld [vmem:[%s515 + $0x600] sm:$0xff]
                %566 = vst [vmem:[%s516 + $0xc0] sm:$0xff] %v565
                %v567 = vld [vmem:[%s515 + $0x608] sm:$0xff]
                %568 = vst [vmem:[%s516 + $0xc8] sm:$0xff] %v567
                %v569 = vld [vmem:[%s515 + $0x610] sm:$0xff]
                %570 = vst [vmem:[%s516 + $0xd0] sm:$0xff] %v569
                %v571 = vld [vmem:[%s515 + $0x6c0] sm:$0xff]
                %572 = vst [vmem:[%s516 + $0xd8] sm:$0xff] %v571
                %v573 = vld [vmem:[%s515 + $0x6c8] sm:$0xff]
                %574 = vst [vmem:[%s516 + $0xe0] sm:$0xff] %v573
                %v575 = vld [vmem:[%s515 + $0x6d0] sm:$0xff]
                %576 = vst [vmem:[%s516 + $0xe8] sm:$0xff] %v575
                %v577 = vld [vmem:[%s515 + $0x780] sm:$0xff]
                %578 = vst [vmem:[%s516 + $0xf0] sm:$0xff] %v577
                %v579 = vld [vmem:[%s515 + $0x788] sm:$0xff]
                %580 = vst [vmem:[%s516 + $0xf8] sm:$0xff] %v579
                %v581 = vld [vmem:[%s515 + $0x790] sm:$0xff]
                %582 = vst [vmem:[%s516 + $0x100] sm:$0xff] %v581
                %v583 = vld [vmem:[%s515 + $0x840] sm:$0xff]
                %584 = vst [vmem:[%s516 + $0x108] sm:$0xff] %v583
                %v585 = vld [vmem:[%s515 + $0x848] sm:$0xff]
                %586 = vst [vmem:[%s516 + $0x110] sm:$0xff] %v585
                %v587 = vld [vmem:[%s515 + $0x850] sm:$0xff]
                %588 = vst [vmem:[%s516 + $0x118] sm:$0xff] %v587
                %v589 = vld [vmem:[%s515 + $0x900] sm:$0xff]
                %590 = vst [vmem:[%s516 + $0x120] sm:$0xff] %v589
                %v591 = vld [vmem:[%s515 + $0x908] sm:$0xff]
                %592 = vst [vmem:[%s516 + $0x128] sm:$0xff] %v591
                %v593 = vld [vmem:[%s515 + $0x910] sm:$0xff]
                %594 = vst [vmem:[%s516 + $0x130] sm:$0xff] %v593
                %v595 = vld [vmem:[%s515 + $0x9c0] sm:$0xff]
                %596 = vst [vmem:[%s516 + $0x138] sm:$0xff] %v595
                %v597 = vld [vmem:[%s515 + $0x9c8] sm:$0xff]
                %598 = vst [vmem:[%s516 + $0x140] sm:$0xff] %v597
                %v599 = vld [vmem:[%s515 + $0x9d0] sm:$0xff]
                %600 = vst [vmem:[%s516 + $0x148] sm:$0xff] %v599
                %v601 = vld [vmem:[%s515 + $0xa80] sm:$0xff]
                %602 = vst [vmem:[%s516 + $0x150] sm:$0xff] %v601
                %v603 = vld [vmem:[%s515 + $0xa88] sm:$0xff]
                %604 = vst [vmem:[%s516 + $0x158] sm:$0xff] %v603
                %v605 = vld [vmem:[%s515 + $0xa90] sm:$0xff]
                %606 = vst [vmem:[%s516 + $0x160] sm:$0xff] %v605
                %v607 = vld [vmem:[%s515 + $0xb40] sm:$0xff]
                %608 = vst [vmem:[%s516 + $0x168] sm:$0xff] %v607
                %v609 = vld [vmem:[%s515 + $0xb48] sm:$0xff]
                %610 = vst [vmem:[%s516 + $0x170] sm:$0xff] %v609
                %v611 = vld [vmem:[%s515 + $0xb50] sm:$0xff]
                %612 = vst [vmem:[%s516 + $0x178] sm:$0xff] %v611
                %v613 = vld [vmem:[%s515 + $0xc00] sm:$0xff]
                %614 = vst [vmem:[%s516 + $0x180] sm:$0xff] %v613
                %v615 = vld [vmem:[%s515 + $0xc08] sm:$0xff]
                %616 = vst [vmem:[%s516 + $0x188] sm:$0xff] %v615
                %v617 = vld [vmem:[%s515 + $0xc10] sm:$0xff]
                %618 = vst [vmem:[%s516 + $0x190] sm:$0xff] %v617
                %v619 = vld [vmem:[%s515 + $0xcc0] sm:$0xff]
                %620 = vst [vmem:[%s516 + $0x198] sm:$0xff] %v619
                %v621 = vld [vmem:[%s515 + $0xcc8] sm:$0xff]
                %622 = vst [vmem:[%s516 + $0x1a0] sm:$0xff] %v621
                %v623 = vld [vmem:[%s515 + $0xcd0] sm:$0xff]
                %624 = vst [vmem:[%s516 + $0x1a8] sm:$0xff] %v623
                %v625 = vld [vmem:[%s515 + $0xd80] sm:$0xff]
                %626 = vst [vmem:[%s516 + $0x1b0] sm:$0xff] %v625
                %v627 = vld [vmem:[%s515 + $0xd88] sm:$0xff]
                %628 = vst [vmem:[%s516 + $0x1b8] sm:$0xff] %v627
                %v629 = vld [vmem:[%s515 + $0xd90] sm:$0xff]
                %630 = vst [vmem:[%s516 + $0x1c0] sm:$0xff] %v629
                %v631 = vld [vmem:[%s515 + $0xe40] sm:$0xff]
                %632 = vst [vmem:[%s516 + $0x1c8] sm:$0xff] %v631
                %v633 = vld [vmem:[%s515 + $0xe48] sm:$0xff]
                %634 = vst [vmem:[%s516 + $0x1d0] sm:$0xff] %v633
                %v635 = vld [vmem:[%s515 + $0xe50] sm:$0xff]
                %636 = vst [vmem:[%s516 + $0x1d8] sm:$0xff] %v635
                %v637 = vld [vmem:[%s515 + $0xf00] sm:$0xff]
                %638 = vst [vmem:[%s516 + $0x1e0] sm:$0xff] %v637
                %v639 = vld [vmem:[%s515 + $0xf08] sm:$0xff]
                %640 = vst [vmem:[%s516 + $0x1e8] sm:$0xff] %v639
                %v641 = vld [vmem:[%s515 + $0xf10] sm:$0xff]
                %642 = vst [vmem:[%s516 + $0x1f0] sm:$0xff] %v641
                %v643 = vld [vmem:[%s515 + $0xfc0] sm:$0xff]
                %644 = vst [vmem:[%s516 + $0x1f8] sm:$0xff] %v643
                %v645 = vld [vmem:[%s515 + $0xfc8] sm:$0xff]
                %646 = vst [vmem:[%s516 + $0x200] sm:$0xff] %v645
                %v647 = vld [vmem:[%s515 + $0xfd0] sm:$0xff]
                %648 = vst [vmem:[%s516 + $0x208] sm:$0xff] %v647
                %v649 = vld [vmem:[%s515 + $0x1080] sm:$0xff]
                %650 = vst [vmem:[%s516 + $0x210] sm:$0xff] %v649
                %v651 = vld [vmem:[%s515 + $0x1088] sm:$0xff]
                %652 = vst [vmem:[%s516 + $0x218] sm:$0xff] %v651
                %v653 = vld [vmem:[%s515 + $0x1090] sm:$0xff]
                %654 = vst [vmem:[%s516 + $0x220] sm:$0xff] %v653
                %v655 = vld [vmem:[%s515 + $0x1140] sm:$0xff]
                %656 = vst [vmem:[%s516 + $0x228] sm:$0xff] %v655
                %v657 = vld [vmem:[%s515 + $0x1148] sm:$0xff]
                %658 = vst [vmem:[%s516 + $0x230] sm:$0xff] %v657
                %v659 = vld [vmem:[%s515 + $0x1150] sm:$0xff]
                %660 = vst [vmem:[%s516 + $0x238] sm:$0xff] %v659
                %v661 = vld [vmem:[%s515 + $0x1200] sm:$0xff]
                %662 = vst [vmem:[%s516 + $0x240] sm:$0xff] %v661
                %v663 = vld [vmem:[%s515 + $0x1208] sm:$0xff]
                %664 = vst [vmem:[%s516 + $0x248] sm:$0xff] %v663
                %v665 = vld [vmem:[%s515 + $0x1210] sm:$0xff]
                %666 = vst [vmem:[%s516 + $0x250] sm:$0xff] %v665
                %v667 = vld [vmem:[%s515 + $0x12c0] sm:$0xff]
                %668 = vst [vmem:[%s516 + $0x258] sm:$0xff] %v667
                %v669 = vld [vmem:[%s515 + $0x12c8] sm:$0xff]
                %670 = vst [vmem:[%s516 + $0x260] sm:$0xff] %v669
                %v671 = vld [vmem:[%s515 + $0x12d0] sm:$0xff]
                %672 = vst [vmem:[%s516 + $0x268] sm:$0xff] %v671
                %v673 = vld [vmem:[%s515 + $0x1380] sm:$0xff]
                %674 = vst [vmem:[%s516 + $0x270] sm:$0xff] %v673
                %v675 = vld [vmem:[%s515 + $0x1388] sm:$0xff]
                %676 = vst [vmem:[%s516 + $0x278] sm:$0xff] %v675
                %v677 = vld [vmem:[%s515 + $0x1390] sm:$0xff]
                %678 = vst [vmem:[%s516 + $0x280] sm:$0xff] %v677
                %v679 = vld [vmem:[%s515 + $0x1440] sm:$0xff]
                %680 = vst [vmem:[%s516 + $0x288] sm:$0xff] %v679
                %v681 = vld [vmem:[%s515 + $0x1448] sm:$0xff]
                %682 = vst [vmem:[%s516 + $0x290] sm:$0xff] %v681
                %v683 = vld [vmem:[%s515 + $0x1450] sm:$0xff]
                %684 = vst [vmem:[%s516 + $0x298] sm:$0xff] %v683
                %v685 = vld [vmem:[%s515 + $0x1500] sm:$0xff]
                %686 = vst [vmem:[%s516 + $0x2a0] sm:$0xff] %v685
                %v687 = vld [vmem:[%s515 + $0x1508] sm:$0xff]
                %688 = vst [vmem:[%s516 + $0x2a8] sm:$0xff] %v687
                %v689 = vld [vmem:[%s515 + $0x1510] sm:$0xff]
                %690 = vst [vmem:[%s516 + $0x2b0] sm:$0xff] %v689
                %v691 = vld [vmem:[%s515 + $0x15c0] sm:$0xff]
                %692 = vst [vmem:[%s516 + $0x2b8] sm:$0xff] %v691
                %v693 = vld [vmem:[%s515 + $0x15c8] sm:$0xff]
                %694 = vst [vmem:[%s516 + $0x2c0] sm:$0xff] %v693
                %v695 = vld [vmem:[%s515 + $0x15d0] sm:$0xff]
                %696 = vst [vmem:[%s516 + $0x2c8] sm:$0xff] %v695
              $region64: #{online_gcrn_forward.13} parent=58 // loop_footer
                %s514 = sadd.s32 1, %s510
              $region65: #{online_gcrn_forward.13} parent=58 // loop_footer_branch
                %509 = sbr.rel target = $region61
              $region66: #{online_gcrn_forward.13} parent=58 // loop_exit
                _
            $region59: #{online_gcrn_forward.13} parent=54 // pred_fallthru
              _
            // Predicated region
            $region67: #{online_gcrn_forward.13} parent=54 // pred_check
              _
            $region68: #{online_gcrn_forward.13} parent=54 // pred_check_branch
              %698 = sbr.rel target = $region70
            $region69: #{online_gcrn_forward.13} parent=54 // pred_region
              _
            $region70: #{online_gcrn_forward.13} parent=54 // pred_fallthru
              _
          $region55: #{online_gcrn_forward.13} parent=50 // pred_fallthru
            _
          %699 = vnop
        $region51: #{online_gcrn_forward.13} parent=23 // pred_fallthru
          _
        // Predicated region
        $region71: #{online_gcrn_forward.13} parent=23 // pred_check
          %p700 = pneg %p129
        $region72: #{online_gcrn_forward.13} parent=23 // pred_check_branch
          %702 = sbr.rel (%p700) target = $region74
        $region73: #{online_gcrn_forward.13} parent=23 // pred_region
          %s703 = smul.u32 3, %s15
          %p704 = scmp.lt.s32.totalorder %s703, 23
          %s705 = scalar_select %p704, %s703, 23
          %s706 = scalar_lea.vmem %s4, %s705
          %s707 = smul.u32 3, %s15
        $region74: #{online_gcrn_forward.13} parent=23 // pred_fallthru
          _
        // Predicated region
        $region75: #{online_gcrn_forward.13} parent=23 // pred_check
          %p708 = pneg %p155
        $region76: #{online_gcrn_forward.13} parent=23 // pred_check_branch
          %710 = sbr.rel (%p708) target = $region78
        $region77: #{online_gcrn_forward.13} parent=23 // pred_region
          %s711 = smul.u32 3, %s15
          %p712 = scmp.lt.s32.totalorder %s711, 23
          %s713 = scalar_select %p712, %s711, 23
          %s714 = scalar_lea.vmem %s5, %s713
          %s715 = smul.u32 3, %s15
        $region78: #{online_gcrn_forward.13} parent=23 // pred_fallthru
          _
        // Predicated region
        $region79: #{online_gcrn_forward.13} parent=23 // pred_check
          %p716 = pneg %p181
        $region80: #{online_gcrn_forward.13} parent=23 // pred_check_branch
          %718 = sbr.rel (%p716) target = $region82
        $region81: #{online_gcrn_forward.13} parent=23 // pred_region
          %s719 = smul.u32 3, %s15
          %p720 = scmp.lt.s32.totalorder %s719, 23
          %s721 = scalar_select %p720, %s719, 23
          %s722 = scalar_lea.vmem %s6, %s721
          %s723 = smul.u32 3, %s15
        $region82: #{online_gcrn_forward.13} parent=23 // pred_fallthru
          _
        // Predicated region
        $region83: #{online_gcrn_forward.13} parent=23 // pred_check
          %p724 = pneg %p207
        $region84: #{online_gcrn_forward.13} parent=23 // pred_check_branch
          %726 = sbr.rel (%p724) target = $region86
        $region85: #{online_gcrn_forward.13} parent=23 // pred_region
          %s727 = smul.u32 3, %s15
          %p728 = scmp.lt.s32.totalorder %s727, 23
          %s729 = scalar_select %p728, %s727, 23
          %s730 = scalar_lea.vmem %s7, %s729
          %s731 = smul.u32 3, %s15
        $region86: #{online_gcrn_forward.13} parent=23 // pred_fallthru
          _
        // Predicated region
        $region87: #{online_gcrn_forward.13} parent=23 // pred_check
          %p732 = pneg %p233
        $region88: #{online_gcrn_forward.13} parent=23 // pred_check_branch
          %734 = sbr.rel (%p732) target = $region90
        $region89: #{online_gcrn_forward.13} parent=23 // pred_region
          %p735 = scmp.lt.s32.totalorder %s15, 7
          %s736 = scalar_select %p735, %s15, 7
          %s737 = scalar_lea.vmem %s8, %s736
        $region90: #{online_gcrn_forward.13} parent=23 // pred_fallthru
          _
      $region24: #{online_gcrn_forward.13} parent=5 // pred_fallthru
        _
      %p738 = scmp.le.s32.totalorder 1, %s15
      %p739 = scmp.lt.s32.totalorder %s15, 9
      %p740 = pnand %p738, %p739
      %p741 = pneg %p740
      // Predicated region
      $region91: #{online_gcrn_forward.13} parent=5 // pred_check
        _
      $region92: #{online_gcrn_forward.13} parent=5 // pred_check_branch
        %743 = sbr.rel (%p740) target = $region94
      $region93: #{online_gcrn_forward.13} parent=5 // pred_region
        %s744 = ssub.s32 %s15, 1
        %s745 = sand.u32 %s70, 1
        %s746 = sand.u32 %s70, 1
        %s747 = smul.addr %s746, 720
        %s748 = scalar_lea.vmem [#allocation2], %s747
        // Predicated region
        $region95: #{online_gcrn_forward.13} parent=93 // pred_check
          %p749 = pneg %p83
        $region96: #{online_gcrn_forward.13} parent=93 // pred_check_branch
          %751 = sbr.rel (%p749) target = $region98
        $region97: #{online_gcrn_forward.13} parent=93 // pred_region
          _
        $region98: #{online_gcrn_forward.13} parent=93 // pred_fallthru
          _
        %s752 = sand.u32 %s96, 1
        %s753 = sand.u32 %s96, 1
        %s754 = smul.addr %s753, 720
        %s755 = scalar_lea.vmem [#allocation3], %s754
        // Predicated region
        $region99: #{online_gcrn_forward.13} parent=93 // pred_check
          %p756 = pneg %p109
        $region100: #{online_gcrn_forward.13} parent=93 // pred_check_branch
          %758 = sbr.rel (%p756) target = $region102
        $region101: #{online_gcrn_forward.13} parent=93 // pred_region
          _
        $region102: #{online_gcrn_forward.13} parent=93 // pred_fallthru
          _
        %p759 = pneg %p36
        %p760 = pneg %p33
        %p761 = pneg %p57
        %p762 = pneg %p54
        %s763 = sand.u32 %s70, 1
        %s764 = sand.u32 %s70, 1
        %s765 = smul.addr %s764, 720
        %s766 = scalar_lea.vmem [#allocation2], %s765
        %p767 = pneg %p83
        %p768 = pneg %p80
        %s769 = sand.u32 %s96, 1
        %s770 = sand.u32 %s96, 1
        %s771 = smul.addr %s770, 720
        %s772 = scalar_lea.vmem [#allocation3], %s771
        %p773 = pneg %p109
        %p774 = pneg %p106
        %s775 = smul.u32 3, %s20
        %p776 = scmp.lt.s32.totalorder %s775, 23
        %s777 = scalar_select %p776, %s775, 23
        %s778 = scalar_lea.vmem %s4, %s777
        %p779 = pneg %p135
        %p780 = pneg %p132
        %s781 = smul.u32 3, %s20
        %p782 = scmp.lt.s32.totalorder %s781, 23
        %s783 = scalar_select %p782, %s781, 23
        %s784 = scalar_lea.vmem %s5, %s783
        %p785 = pneg %p161
        %p786 = pneg %p158
        %s787 = smul.u32 3, %s20
        %p788 = scmp.lt.s32.totalorder %s787, 23
        %s789 = scalar_select %p788, %s787, 23
        %s790 = scalar_lea.vmem %s6, %s789
        %p791 = pneg %p187
        %p792 = pneg %p184
        %s793 = smul.u32 3, %s20
        %p794 = scmp.lt.s32.totalorder %s793, 23
        %s795 = scalar_select %p794, %s793, 23
        %s796 = scalar_lea.vmem %s7, %s795
        %p797 = pneg %p213
        %p798 = pneg %p210
        %p799 = scmp.lt.s32.totalorder %s20, 7
        %s800 = scalar_select %p799, %s20, 7
        %s801 = scalar_lea.vmem %s8, %s800
        %p802 = pneg %p239
        %p803 = pneg %p236
        %p804 = pneg %p265
        %p805 = pneg %p262
        %p806 = scmp.lt.s32.totalorder %s20, 7
        %s807 = scalar_select %p806, %s20, 7
        %s808 = scalar_lea.vmem %s9, %s807
        %s809 = smul.u32 3, %s20
        %s810 = smul.u32 3, %s20
        %s811 = smul.u32 3, %s20
        %p812 = scmp.lt.s32.totalorder %s811, 23
        %s813 = scalar_select %p812, %s811, 23
        %s814 = scalar_lea.vmem %s4, %s813
        %s815 = smul.u32 3, %s20
        %s816 = smul.u32 3, %s20
        %p817 = scmp.lt.s32.totalorder %s816, 23
        %s818 = scalar_select %p817, %s816, 23
        %s819 = scalar_lea.vmem %s5, %s818
        %s820 = smul.u32 3, %s20
        %s821 = smul.u32 3, %s20
        %p822 = scmp.lt.s32.totalorder %s821, 23
        %s823 = scalar_select %p822, %s821, 23
        %s824 = scalar_lea.vmem %s6, %s823
        %s825 = smul.u32 3, %s20
        %s826 = smul.u32 3, %s20
        %p827 = scmp.lt.s32.totalorder %s826, 23
        %s828 = scalar_select %p827, %s826, 23
        %s829 = scalar_lea.vmem %s7, %s828
        %s830 = smul.u32 3, %s20
        %p831 = scmp.lt.s32.totalorder %s20, 7
        %s832 = scalar_select %p831, %s20, 7
        %s833 = scalar_lea.vmem %s8, %s832
        %p834 = scmp.lt.s32.totalorder %s20, 7
        %s835 = scalar_select %p834, %s20, 7
        %s836 = scalar_lea.vmem %s9, %s835
        %v838 = vld [vmem:[%s748] sm:$0xff]
        %v839 = vld [vmem:[%s748 + $0x8] sm:$0xff]
        %v840 = vld [vmem:[%s748 + $0x10] sm:$0xff]
        %v841 = vld [vmem:[%s748 + $0x18] sm:$0xff]
        %v842 = vld [vmem:[%s748 + $0x20] sm:$0xff]
        %v843 = vld [vmem:[%s748 + $0x28] sm:$0xff]
        %v844 = vld [vmem:[%s748 + $0x30] sm:$0xff]
        %v845 = vld [vmem:[%s748 + $0x38] sm:$0xff]
        %v846 = vld [vmem:[%s748 + $0x40] sm:$0xff]
        %v847 = vld [vmem:[%s748 + $0x48] sm:$0xff]
        %v848 = vld [vmem:[%s748 + $0x50] sm:$0xff]
        %v849 = vld [vmem:[%s748 + $0x58] sm:$0xff]
        %v850 = vld [vmem:[%s748 + $0x60] sm:$0xff]
        %v851 = vld [vmem:[%s748 + $0x68] sm:$0xff]
        %v852 = vld [vmem:[%s748 + $0x70] sm:$0xff]
        %v853 = vld [vmem:[%s748 + $0x78] sm:$0xff]
        %v854 = vld [vmem:[%s748 + $0x80] sm:$0xff]
        %v855 = vld [vmem:[%s748 + $0x88] sm:$0xff]
        %v856 = vld [vmem:[%s748 + $0x90] sm:$0xff]
        %v857 = vld [vmem:[%s748 + $0x98] sm:$0xff]
        %v858 = vld [vmem:[%s748 + $0xa0] sm:$0xff]
        %v859 = vld [vmem:[%s748 + $0xa8] sm:$0xff]
        %v860 = vld [vmem:[%s748 + $0xb0] sm:$0xff]
        %v861 = vld [vmem:[%s748 + $0xb8] sm:$0xff]
        %v862 = vld [vmem:[%s748 + $0xc0] sm:$0xff]
        %v863 = vld [vmem:[%s748 + $0xc8] sm:$0xff]
        %v864 = vld [vmem:[%s748 + $0xd0] sm:$0xff]
        %v865 = vld [vmem:[%s748 + $0xd8] sm:$0xff]
        %v866 = vld [vmem:[%s748 + $0xe0] sm:$0xff]
        %v867 = vld [vmem:[%s748 + $0xe8] sm:$0xff]
        %v868 = vld [vmem:[%s748 + $0xf0] sm:$0xff]
        %v869 = vld [vmem:[%s748 + $0xf8] sm:$0xff]
        %v870 = vld [vmem:[%s748 + $0x100] sm:$0xff]
        %v871 = vld [vmem:[%s748 + $0x108] sm:$0xff]
        %v872 = vld [vmem:[%s748 + $0x110] sm:$0xff]
        %v873 = vld [vmem:[%s748 + $0x118] sm:$0xff]
        %v874 = vld [vmem:[%s748 + $0x120] sm:$0xff]
        %v875 = vld [vmem:[%s748 + $0x128] sm:$0xff]
        %v876 = vld [vmem:[%s748 + $0x130] sm:$0xff]
        %v877 = vld [vmem:[%s748 + $0x138] sm:$0xff]
        %v878 = vld [vmem:[%s748 + $0x140] sm:$0xff]
        %v879 = vld [vmem:[%s748 + $0x148] sm:$0xff]
        %v880 = vld [vmem:[%s748 + $0x150] sm:$0xff]
        %v881 = vld [vmem:[%s748 + $0x158] sm:$0xff]
        %v882 = vld [vmem:[%s748 + $0x160] sm:$0xff]
        %v883 = vld [vmem:[%s748 + $0x168] sm:$0xff]
        %v884 = vld [vmem:[%s748 + $0x170] sm:$0xff]
        %v885 = vld [vmem:[%s748 + $0x178] sm:$0xff]
        %v886 = vld [vmem:[%s748 + $0x180] sm:$0xff]
        %v887 = vld [vmem:[%s748 + $0x188] sm:$0xff]
        %v888 = vld [vmem:[%s748 + $0x190] sm:$0xff]
        %v889 = vld [vmem:[%s748 + $0x198] sm:$0xff]
        %v890 = vld [vmem:[%s748 + $0x1a0] sm:$0xff]
        %v891 = vld [vmem:[%s748 + $0x1a8] sm:$0xff]
        %v892 = vld [vmem:[%s748 + $0x1b0] sm:$0xff]
        %v893 = vld [vmem:[%s748 + $0x1b8] sm:$0xff]
        %v894 = vld [vmem:[%s748 + $0x1c0] sm:$0xff]
        %v895 = vld [vmem:[%s748 + $0x1c8] sm:$0xff]
        %v896 = vld [vmem:[%s748 + $0x1d0] sm:$0xff]
        %v897 = vld [vmem:[%s748 + $0x1d8] sm:$0xff]
        %v898 = vld [vmem:[%s748 + $0x1e0] sm:$0xff]
        %v899 = vld [vmem:[%s748 + $0x1e8] sm:$0xff]
        %v900 = vld [vmem:[%s748 + $0x1f0] sm:$0xff]
        %v901 = vld [vmem:[%s748 + $0x1f8] sm:$0xff]
        %v902 = vld [vmem:[%s748 + $0x200] sm:$0xff]
        %v903 = vld [vmem:[%s748 + $0x208] sm:$0xff]
        %v904 = vld [vmem:[%s748 + $0x210] sm:$0xff]
        %v905 = vld [vmem:[%s748 + $0x218] sm:$0xff]
        %v906 = vld [vmem:[%s748 + $0x220] sm:$0xff]
        %v907 = vld [vmem:[%s748 + $0x228] sm:$0xff]
        %v908 = vld [vmem:[%s748 + $0x230] sm:$0xff]
        %v909 = vld [vmem:[%s748 + $0x238] sm:$0xff]
        %v910 = vld [vmem:[%s748 + $0x240] sm:$0xff]
        %v911 = vld [vmem:[%s748 + $0x248] sm:$0xff]
        %v912 = vld [vmem:[%s748 + $0x250] sm:$0xff]
        %v913 = vld [vmem:[%s748 + $0x258] sm:$0xff]
        %v914 = vld [vmem:[%s748 + $0x260] sm:$0xff]
        %v915 = vld [vmem:[%s748 + $0x268] sm:$0xff]
        %v916 = vld [vmem:[%s748 + $0x270] sm:$0xff]
        %v917 = vld [vmem:[%s748 + $0x278] sm:$0xff]
        %v918 = vld [vmem:[%s748 + $0x280] sm:$0xff]
        %v919 = vld [vmem:[%s748 + $0x288] sm:$0xff]
        %v920 = vld [vmem:[%s748 + $0x290] sm:$0xff]
        %v921 = vld [vmem:[%s748 + $0x298] sm:$0xff]
        %v922 = vld [vmem:[%s748 + $0x2a0] sm:$0xff]
        %v923 = vld [vmem:[%s748 + $0x2a8] sm:$0xff]
        %v924 = vld [vmem:[%s748 + $0x2b0] sm:$0xff]
        %v925 = vld [vmem:[%s748 + $0x2b8] sm:$0xff]
        %v926 = vld [vmem:[%s748 + $0x2c0] sm:$0xff]
        %v927 = vld [vmem:[%s748 + $0x2c8] sm:$0xff]
        %v928 = vunpack.c.l.s8.bf16 %v838
        %v929 = vunpack.c.l.s8.bf16 %v839
        %v930 = vunpack.c.l.s8.bf16 %v840
        %v931 = vunpack.c.h.s8.bf16 %v838
        %v932 = vunpack.c.h.s8.bf16 %v839
        %v933 = vunpack.c.h.s8.bf16 %v840
        %v934 = vunpack.c.l.s8.bf16 %v841
        %v935 = vunpack.c.l.s8.bf16 %v842
        %v936 = vunpack.c.l.s8.bf16 %v843
        %v937 = vunpack.c.h.s8.bf16 %v841
        %v938 = vunpack.c.h.s8.bf16 %v842
        %v939 = vunpack.c.h.s8.bf16 %v843
        %v940 = vunpack.c.l.s8.bf16 %v844
        %v941 = vunpack.c.l.s8.bf16 %v845
        %v942 = vunpack.c.l.s8.bf16 %v846
        %v943 = vunpack.c.h.s8.bf16 %v844
        %v944 = vunpack.c.h.s8.bf16 %v845
        %v945 = vunpack.c.h.s8.bf16 %v846
        %v946 = vunpack.c.l.s8.bf16 %v847
        %v947 = vunpack.c.l.s8.bf16 %v848
        %v948 = vunpack.c.l.s8.bf16 %v849
        %v949 = vunpack.c.h.s8.bf16 %v847
        %v950 = vunpack.c.h.s8.bf16 %v848
        %v951 = vunpack.c.h.s8.bf16 %v849
        %v952 = vunpack.c.l.s8.bf16 %v850
        %v953 = vunpack.c.l.s8.bf16 %v851
        %v954 = vunpack.c.l.s8.bf16 %v852
        %v955 = vunpack.c.h.s8.bf16 %v850
        %v956 = vunpack.c.h.s8.bf16 %v851
        %v957 = vunpack.c.h.s8.bf16 %v852
        %v958 = vunpack.c.l.s8.bf16 %v853
        %v959 = vunpack.c.l.s8.bf16 %v854
        %v960 = vunpack.c.l.s8.bf16 %v855
        %v961 = vunpack.c.h.s8.bf16 %v853
        %v962 = vunpack.c.h.s8.bf16 %v854
        %v963 = vunpack.c.h.s8.bf16 %v855
        %v964 = vunpack.c.l.s8.bf16 %v856
        %v965 = vunpack.c.l.s8.bf16 %v857
        %v966 = vunpack.c.l.s8.bf16 %v858
        %v967 = vunpack.c.h.s8.bf16 %v856
        %v968 = vunpack.c.h.s8.bf16 %v857
        %v969 = vunpack.c.h.s8.bf16 %v858
        %v970 = vunpack.c.l.s8.bf16 %v859
        %v971 = vunpack.c.l.s8.bf16 %v860
        %v972 = vunpack.c.l.s8.bf16 %v861
        %v973 = vunpack.c.h.s8.bf16 %v859
        %v974 = vunpack.c.h.s8.bf16 %v860
        %v975 = vunpack.c.h.s8.bf16 %v861
        %v976 = vunpack.c.l.s8.bf16 %v862
        %v977 = vunpack.c.l.s8.bf16 %v863
        %v978 = vunpack.c.l.s8.bf16 %v864
        %v979 = vunpack.c.h.s8.bf16 %v862
        %v980 = vunpack.c.h.s8.bf16 %v863
        %v981 = vunpack.c.h.s8.bf16 %v864
        %v982 = vunpack.c.l.s8.bf16 %v865
        %v983 = vunpack.c.l.s8.bf16 %v866
        %v984 = vunpack.c.l.s8.bf16 %v867
        %v985 = vunpack.c.h.s8.bf16 %v865
        %v986 = vunpack.c.h.s8.bf16 %v866
        %v987 = vunpack.c.h.s8.bf16 %v867
        %v988 = vunpack.c.l.s8.bf16 %v868
        %v989 = vunpack.c.l.s8.bf16 %v869
        %v990 = vunpack.c.l.s8.bf16 %v870
        %v991 = vunpack.c.h.s8.bf16 %v868
        %v992 = vunpack.c.h.s8.bf16 %v869
        %v993 = vunpack.c.h.s8.bf16 %v870
        %v994 = vunpack.c.l.s8.bf16 %v871
        %v995 = vunpack.c.l.s8.bf16 %v872
        %v996 = vunpack.c.l.s8.bf16 %v873
        %v997 = vunpack.c.h.s8.bf16 %v871
        %v998 = vunpack.c.h.s8.bf16 %v872
        %v999 = vunpack.c.h.s8.bf16 %v873
        %v1000 = vunpack.c.l.s8.bf16 %v874
        %v1001 = vunpack.c.l.s8.bf16 %v875
        %v1002 = vunpack.c.l.s8.bf16 %v876
        %v1003 = vunpack.c.h.s8.bf16 %v874
        %v1004 = vunpack.c.h.s8.bf16 %v875
        %v1005 = vunpack.c.h.s8.bf16 %v876
        %v1006 = vunpack.c.l.s8.bf16 %v877
        %v1007 = vunpack.c.l.s8.bf16 %v878
        %v1008 = vunpack.c.l.s8.bf16 %v879
        %v1009 = vunpack.c.h.s8.bf16 %v877
        %v1010 = vunpack.c.h.s8.bf16 %v878
        %v1011 = vunpack.c.h.s8.bf16 %v879
        %v1012 = vunpack.c.l.s8.bf16 %v880
        %v1013 = vunpack.c.l.s8.bf16 %v881
        %v1014 = vunpack.c.l.s8.bf16 %v882
        %v1015 = vunpack.c.h.s8.bf16 %v880
        %v1016 = vunpack.c.h.s8.bf16 %v881
        %v1017 = vunpack.c.h.s8.bf16 %v882
        %v1018 = vunpack.c.l.s8.bf16 %v883
        %v1019 = vunpack.c.l.s8.bf16 %v884
        %v1020 = vunpack.c.l.s8.bf16 %v885
        %v1021 = vunpack.c.h.s8.bf16 %v883
        %v1022 = vunpack.c.h.s8.bf16 %v884
        %v1023 = vunpack.c.h.s8.bf16 %v885
        %v1024 = vunpack.c.l.s8.bf16 %v886
        %v1025 = vunpack.c.l.s8.bf16 %v887
        %v1026 = vunpack.c.l.s8.bf16 %v888
        %v1027 = vunpack.c.h.s8.bf16 %v886
        %v1028 = vunpack.c.h.s8.bf16 %v887
        %v1029 = vunpack.c.h.s8.bf16 %v888
        %v1030 = vunpack.c.l.s8.bf16 %v889
        %v1031 = vunpack.c.l.s8.bf16 %v890
        %v1032 = vunpack.c.l.s8.bf16 %v891
        %v1033 = vunpack.c.h.s8.bf16 %v889
        %v1034 = vunpack.c.h.s8.bf16 %v890
        %v1035 = vunpack.c.h.s8.bf16 %v891
        %v1036 = vunpack.c.l.s8.bf16 %v892
        %v1037 = vunpack.c.l.s8.bf16 %v893
        %v1038 = vunpack.c.l.s8.bf16 %v894
        %v1039 = vunpack.c.h.s8.bf16 %v892
        %v1040 = vunpack.c.h.s8.bf16 %v893
        %v1041 = vunpack.c.h.s8.bf16 %v894
        %v1042 = vunpack.c.l.s8.bf16 %v895
        %v1043 = vunpack.c.l.s8.bf16 %v896
        %v1044 = vunpack.c.l.s8.bf16 %v897
        %v1045 = vunpack.c.h.s8.bf16 %v895
        %v1046 = vunpack.c.h.s8.bf16 %v896
        %v1047 = vunpack.c.h.s8.bf16 %v897
        %v1048 = vunpack.c.l.s8.bf16 %v898
        %v1049 = vunpack.c.l.s8.bf16 %v899
        %v1050 = vunpack.c.l.s8.bf16 %v900
        %v1051 = vunpack.c.h.s8.bf16 %v898
        %v1052 = vunpack.c.h.s8.bf16 %v899
        %v1053 = vunpack.c.h.s8.bf16 %v900
        %v1054 = vunpack.c.l.s8.bf16 %v901
        %v1055 = vunpack.c.l.s8.bf16 %v902
        %v1056 = vunpack.c.l.s8.bf16 %v903
        %v1057 = vunpack.c.h.s8.bf16 %v901
        %v1058 = vunpack.c.h.s8.bf16 %v902
        %v1059 = vunpack.c.h.s8.bf16 %v903
        %v1060 = vunpack.c.l.s8.bf16 %v904
        %v1061 = vunpack.c.l.s8.bf16 %v905
        %v1062 = vunpack.c.l.s8.bf16 %v906
        %v1063 = vunpack.c.h.s8.bf16 %v904
        %v1064 = vunpack.c.h.s8.bf16 %v905
        %v1065 = vunpack.c.h.s8.bf16 %v906
        %v1066 = vunpack.c.l.s8.bf16 %v907
        %v1067 = vunpack.c.l.s8.bf16 %v908
        %v1068 = vunpack.c.l.s8.bf16 %v909
        %v1069 = vunpack.c.h.s8.bf16 %v907
        %v1070 = vunpack.c.h.s8.bf16 %v908
        %v1071 = vunpack.c.h.s8.bf16 %v909
        %v1072 = vunpack.c.l.s8.bf16 %v910
        %v1073 = vunpack.c.l.s8.bf16 %v911
        %v1074 = vunpack.c.l.s8.bf16 %v912
        %v1075 = vunpack.c.h.s8.bf16 %v910
        %v1076 = vunpack.c.h.s8.bf16 %v911
        %v1077 = vunpack.c.h.s8.bf16 %v912
        %v1078 = vunpack.c.l.s8.bf16 %v913
        %v1079 = vunpack.c.l.s8.bf16 %v914
        %v1080 = vunpack.c.l.s8.bf16 %v915
        %v1081 = vunpack.c.h.s8.bf16 %v913
        %v1082 = vunpack.c.h.s8.bf16 %v914
        %v1083 = vunpack.c.h.s8.bf16 %v915
        %v1084 = vunpack.c.l.s8.bf16 %v916
        %v1085 = vunpack.c.l.s8.bf16 %v917
        %v1086 = vunpack.c.l.s8.bf16 %v918
        %v1087 = vunpack.c.h.s8.bf16 %v916
        %v1088 = vunpack.c.h.s8.bf16 %v917
        %v1089 = vunpack.c.h.s8.bf16 %v918
        %v1090 = vunpack.c.l.s8.bf16 %v919
        %v1091 = vunpack.c.l.s8.bf16 %v920
        %v1092 = vunpack.c.l.s8.bf16 %v921
        %v1093 = vunpack.c.h.s8.bf16 %v919
        %v1094 = vunpack.c.h.s8.bf16 %v920
        %v1095 = vunpack.c.h.s8.bf16 %v921
        %v1096 = vunpack.c.l.s8.bf16 %v922
        %v1097 = vunpack.c.l.s8.bf16 %v923
        %v1098 = vunpack.c.l.s8.bf16 %v924
        %v1099 = vunpack.c.h.s8.bf16 %v922
        %v1100 = vunpack.c.h.s8.bf16 %v923
        %v1101 = vunpack.c.h.s8.bf16 %v924
        %v1102 = vunpack.c.l.s8.bf16 %v925
        %v1103 = vunpack.c.l.s8.bf16 %v926
        %v1104 = vunpack.c.l.s8.bf16 %v927
        %v1105 = vunpack.c.h.s8.bf16 %v925
        %v1106 = vunpack.c.h.s8.bf16 %v926
        %v1107 = vunpack.c.h.s8.bf16 %v927
        %v1108 = vld [vmem:[%s755] sm:$0xff]
        %v1109 = vld [vmem:[%s755 + $0x8] sm:$0xff]
        %v1110 = vld [vmem:[%s755 + $0x10] sm:$0xff]
        %v1111 = vld [vmem:[%s755 + $0x18] sm:$0xff]
        %v1112 = vld [vmem:[%s755 + $0x20] sm:$0xff]
        %v1113 = vld [vmem:[%s755 + $0x28] sm:$0xff]
        %v1114 = vld [vmem:[%s755 + $0x30] sm:$0xff]
        %v1115 = vld [vmem:[%s755 + $0x38] sm:$0xff]
        %v1116 = vld [vmem:[%s755 + $0x40] sm:$0xff]
        %v1117 = vld [vmem:[%s755 + $0x48] sm:$0xff]
        %v1118 = vld [vmem:[%s755 + $0x50] sm:$0xff]
        %v1119 = vld [vmem:[%s755 + $0x58] sm:$0xff]
        %v1120 = vld [vmem:[%s755 + $0x60] sm:$0xff]
        %v1121 = vld [vmem:[%s755 + $0x68] sm:$0xff]
        %v1122 = vld [vmem:[%s755 + $0x70] sm:$0xff]
        %v1123 = vld [vmem:[%s755 + $0x78] sm:$0xff]
        %v1124 = vld [vmem:[%s755 + $0x80] sm:$0xff]
        %v1125 = vld [vmem:[%s755 + $0x88] sm:$0xff]
        %v1126 = vld [vmem:[%s755 + $0x90] sm:$0xff]
        %v1127 = vld [vmem:[%s755 + $0x98] sm:$0xff]
        %v1128 = vld [vmem:[%s755 + $0xa0] sm:$0xff]
        %v1129 = vld [vmem:[%s755 + $0xa8] sm:$0xff]
        %v1130 = vld [vmem:[%s755 + $0xb0] sm:$0xff]
        %v1131 = vld [vmem:[%s755 + $0xb8] sm:$0xff]
        %v1132 = vld [vmem:[%s755 + $0xc0] sm:$0xff]
        %v1133 = vld [vmem:[%s755 + $0xc8] sm:$0xff]
        %v1134 = vld [vmem:[%s755 + $0xd0] sm:$0xff]
        %v1135 = vld [vmem:[%s755 + $0xd8] sm:$0xff]
        %v1136 = vld [vmem:[%s755 + $0xe0] sm:$0xff]
        %v1137 = vld [vmem:[%s755 + $0xe8] sm:$0xff]
        %v1138 = vld [vmem:[%s755 + $0xf0] sm:$0xff]
        %v1139 = vld [vmem:[%s755 + $0xf8] sm:$0xff]
        %v1140 = vld [vmem:[%s755 + $0x100] sm:$0xff]
        %v1141 = vld [vmem:[%s755 + $0x108] sm:$0xff]
        %v1142 = vld [vmem:[%s755 + $0x110] sm:$0xff]
        %v1143 = vld [vmem:[%s755 + $0x118] sm:$0xff]
        %v1144 = vld [vmem:[%s755 + $0x120] sm:$0xff]
        %v1145 = vld [vmem:[%s755 + $0x128] sm:$0xff]
        %v1146 = vld [vmem:[%s755 + $0x130] sm:$0xff]
        %v1147 = vld [vmem:[%s755 + $0x138] sm:$0xff]
        %v1148 = vld [vmem:[%s755 + $0x140] sm:$0xff]
        %v1149 = vld [vmem:[%s755 + $0x148] sm:$0xff]
        %v1150 = vld [vmem:[%s755 + $0x150] sm:$0xff]
        %v1151 = vld [vmem:[%s755 + $0x158] sm:$0xff]
        %v1152 = vld [vmem:[%s755 + $0x160] sm:$0xff]
        %v1153 = vld [vmem:[%s755 + $0x168] sm:$0xff]
        %v1154 = vld [vmem:[%s755 + $0x170] sm:$0xff]
        %v1155 = vld [vmem:[%s755 + $0x178] sm:$0xff]
        %v1156 = vld [vmem:[%s755 + $0x180] sm:$0xff]
        %v1157 = vld [vmem:[%s755 + $0x188] sm:$0xff]
        %v1158 = vld [vmem:[%s755 + $0x190] sm:$0xff]
        %v1159 = vld [vmem:[%s755 + $0x198] sm:$0xff]
        %v1160 = vld [vmem:[%s755 + $0x1a0] sm:$0xff]
        %v1161 = vld [vmem:[%s755 + $0x1a8] sm:$0xff]
        %v1162 = vld [vmem:[%s755 + $0x1b0] sm:$0xff]
        %v1163 = vld [vmem:[%s755 + $0x1b8] sm:$0xff]
        %v1164 = vld [vmem:[%s755 + $0x1c0] sm:$0xff]
        %v1165 = vld [vmem:[%s755 + $0x1c8] sm:$0xff]
        %v1166 = vld [vmem:[%s755 + $0x1d0] sm:$0xff]
        %v1167 = vld [vmem:[%s755 + $0x1d8] sm:$0xff]
        %v1168 = vld [vmem:[%s755 + $0x1e0] sm:$0xff]
        %v1169 = vld [vmem:[%s755 + $0x1e8] sm:$0xff]
        %v1170 = vld [vmem:[%s755 + $0x1f0] sm:$0xff]
        %v1171 = vld [vmem:[%s755 + $0x1f8] sm:$0xff]
        %v1172 = vld [vmem:[%s755 + $0x200] sm:$0xff]
        %v1173 = vld [vmem:[%s755 + $0x208] sm:$0xff]
        %v1174 = vld [vmem:[%s755 + $0x210] sm:$0xff]
        %v1175 = vld [vmem:[%s755 + $0x218] sm:$0xff]
        %v1176 = vld [vmem:[%s755 + $0x220] sm:$0xff]
        %v1177 = vld [vmem:[%s755 + $0x228] sm:$0xff]
        %v1178 = vld [vmem:[%s755 + $0x230] sm:$0xff]
        %v1179 = vld [vmem:[%s755 + $0x238] sm:$0xff]
        %v1180 = vld [vmem:[%s755 + $0x240] sm:$0xff]
        %v1181 = vld [vmem:[%s755 + $0x248] sm:$0xff]
        %v1182 = vld [vmem:[%s755 + $0x250] sm:$0xff]
        %v1183 = vld [vmem:[%s755 + $0x258] sm:$0xff]
        %v1184 = vld [vmem:[%s755 + $0x260] sm:$0xff]
        %v1185 = vld [vmem:[%s755 + $0x268] sm:$0xff]
        %v1186 = vld [vmem:[%s755 + $0x270] sm:$0xff]
        %v1187 = vld [vmem:[%s755 + $0x278] sm:$0xff]
        %v1188 = vld [vmem:[%s755 + $0x280] sm:$0xff]
        %v1189 = vld [vmem:[%s755 + $0x288] sm:$0xff]
        %v1190 = vld [vmem:[%s755 + $0x290] sm:$0xff]
        %v1191 = vld [vmem:[%s755 + $0x298] sm:$0xff]
        %v1192 = vld [vmem:[%s755 + $0x2a0] sm:$0xff]
        %v1193 = vld [vmem:[%s755 + $0x2a8] sm:$0xff]
        %v1194 = vld [vmem:[%s755 + $0x2b0] sm:$0xff]
        %v1195 = vld [vmem:[%s755 + $0x2b8] sm:$0xff]
        %v1196 = vld [vmem:[%s755 + $0x2c0] sm:$0xff]
        %v1197 = vld [vmem:[%s755 + $0x2c8] sm:$0xff]
        %v1198 = vunpack.c.l.s8.bf16 %v1108
        %v1199 = vunpack.c.l.s8.bf16 %v1109
        %v1200 = vunpack.c.l.s8.bf16 %v1110
        %v1201 = vunpack.c.h.s8.bf16 %v1108
        %v1202 = vunpack.c.h.s8.bf16 %v1109
        %v1203 = vunpack.c.h.s8.bf16 %v1110
        %v1204 = vunpack.c.l.s8.bf16 %v1111
        %v1205 = vunpack.c.l.s8.bf16 %v1112
        %v1206 = vunpack.c.l.s8.bf16 %v1113
        %v1207 = vunpack.c.h.s8.bf16 %v1111
        %v1208 = vunpack.c.h.s8.bf16 %v1112
        %v1209 = vunpack.c.h.s8.bf16 %v1113
        %v1210 = vunpack.c.l.s8.bf16 %v1114
        %v1211 = vunpack.c.l.s8.bf16 %v1115
        %v1212 = vunpack.c.l.s8.bf16 %v1116
        %v1213 = vunpack.c.h.s8.bf16 %v1114
        %v1214 = vunpack.c.h.s8.bf16 %v1115
        %v1215 = vunpack.c.h.s8.bf16 %v1116
        %v1216 = vunpack.c.l.s8.bf16 %v1117
        %v1217 = vunpack.c.l.s8.bf16 %v1118
        %v1218 = vunpack.c.l.s8.bf16 %v1119
        %v1219 = vunpack.c.h.s8.bf16 %v1117
        %v1220 = vunpack.c.h.s8.bf16 %v1118
        %v1221 = vunpack.c.h.s8.bf16 %v1119
        %v1222 = vunpack.c.l.s8.bf16 %v1120
        %v1223 = vunpack.c.l.s8.bf16 %v1121
        %v1224 = vunpack.c.l.s8.bf16 %v1122
        %v1225 = vunpack.c.h.s8.bf16 %v1120
        %v1226 = vunpack.c.h.s8.bf16 %v1121
        %v1227 = vunpack.c.h.s8.bf16 %v1122
        %v1228 = vunpack.c.l.s8.bf16 %v1123
        %v1229 = vunpack.c.l.s8.bf16 %v1124
        %v1230 = vunpack.c.l.s8.bf16 %v1125
        %v1231 = vunpack.c.h.s8.bf16 %v1123
        %v1232 = vunpack.c.h.s8.bf16 %v1124
        %v1233 = vunpack.c.h.s8.bf16 %v1125
        %v1234 = vunpack.c.l.s8.bf16 %v1126
        %v1235 = vunpack.c.l.s8.bf16 %v1127
        %v1236 = vunpack.c.l.s8.bf16 %v1128
        %v1237 = vunpack.c.h.s8.bf16 %v1126
        %v1238 = vunpack.c.h.s8.bf16 %v1127
        %v1239 = vunpack.c.h.s8.bf16 %v1128
        %v1240 = vunpack.c.l.s8.bf16 %v1129
        %v1241 = vunpack.c.l.s8.bf16 %v1130
        %v1242 = vunpack.c.l.s8.bf16 %v1131
        %v1243 = vunpack.c.h.s8.bf16 %v1129
        %v1244 = vunpack.c.h.s8.bf16 %v1130
        %v1245 = vunpack.c.h.s8.bf16 %v1131
        %v1246 = vunpack.c.l.s8.bf16 %v1132
        %v1247 = vunpack.c.l.s8.bf16 %v1133
        %v1248 = vunpack.c.l.s8.bf16 %v1134
        %v1249 = vunpack.c.h.s8.bf16 %v1132
        %v1250 = vunpack.c.h.s8.bf16 %v1133
        %v1251 = vunpack.c.h.s8.bf16 %v1134
        %v1252 = vunpack.c.l.s8.bf16 %v1135
        %v1253 = vunpack.c.l.s8.bf16 %v1136
        %v1254 = vunpack.c.l.s8.bf16 %v1137
        %v1255 = vunpack.c.h.s8.bf16 %v1135
        %v1256 = vunpack.c.h.s8.bf16 %v1136
        %v1257 = vunpack.c.h.s8.bf16 %v1137
        %v1258 = vunpack.c.l.s8.bf16 %v1138
        %v1259 = vunpack.c.l.s8.bf16 %v1139
        %v1260 = vunpack.c.l.s8.bf16 %v1140
        %v1261 = vunpack.c.h.s8.bf16 %v1138
        %v1262 = vunpack.c.h.s8.bf16 %v1139
        %v1263 = vunpack.c.h.s8.bf16 %v1140
        %v1264 = vunpack.c.l.s8.bf16 %v1141
        %v1265 = vunpack.c.l.s8.bf16 %v1142
        %v1266 = vunpack.c.l.s8.bf16 %v1143
        %v1267 = vunpack.c.h.s8.bf16 %v1141
        %v1268 = vunpack.c.h.s8.bf16 %v1142
        %v1269 = vunpack.c.h.s8.bf16 %v1143
        %v1270 = vunpack.c.l.s8.bf16 %v1144
        %v1271 = vunpack.c.l.s8.bf16 %v1145
        %v1272 = vunpack.c.l.s8.bf16 %v1146
        %v1273 = vunpack.c.h.s8.bf16 %v1144
        %v1274 = vunpack.c.h.s8.bf16 %v1145
        %v1275 = vunpack.c.h.s8.bf16 %v1146
        %v1276 = vunpack.c.l.s8.bf16 %v1147
        %v1277 = vunpack.c.l.s8.bf16 %v1148
        %v1278 = vunpack.c.l.s8.bf16 %v1149
        %v1279 = vunpack.c.h.s8.bf16 %v1147
        %v1280 = vunpack.c.h.s8.bf16 %v1148
        %v1281 = vunpack.c.h.s8.bf16 %v1149
        %v1282 = vunpack.c.l.s8.bf16 %v1150
        %v1283 = vunpack.c.l.s8.bf16 %v1151
        %v1284 = vunpack.c.l.s8.bf16 %v1152
        %v1285 = vunpack.c.h.s8.bf16 %v1150
        %v1286 = vunpack.c.h.s8.bf16 %v1151
        %v1287 = vunpack.c.h.s8.bf16 %v1152
        %v1288 = vunpack.c.l.s8.bf16 %v1153
        %v1289 = vunpack.c.l.s8.bf16 %v1154
        %v1290 = vunpack.c.l.s8.bf16 %v1155
        %v1291 = vunpack.c.h.s8.bf16 %v1153
        %v1292 = vunpack.c.h.s8.bf16 %v1154
        %v1293 = vunpack.c.h.s8.bf16 %v1155
        %v1294 = vunpack.c.l.s8.bf16 %v1156
        %v1295 = vunpack.c.l.s8.bf16 %v1157
        %v1296 = vunpack.c.l.s8.bf16 %v1158
        %v1297 = vunpack.c.h.s8.bf16 %v1156
        %v1298 = vunpack.c.h.s8.bf16 %v1157
        %v1299 = vunpack.c.h.s8.bf16 %v1158
        %v1300 = vunpack.c.l.s8.bf16 %v1159
        %v1301 = vunpack.c.l.s8.bf16 %v1160
        %v1302 = vunpack.c.l.s8.bf16 %v1161
        %v1303 = vunpack.c.h.s8.bf16 %v1159
        %v1304 = vunpack.c.h.s8.bf16 %v1160
        %v1305 = vunpack.c.h.s8.bf16 %v1161
        %v1306 = vunpack.c.l.s8.bf16 %v1162
        %v1307 = vunpack.c.l.s8.bf16 %v1163
        %v1308 = vunpack.c.l.s8.bf16 %v1164
        %v1309 = vunpack.c.h.s8.bf16 %v1162
        %v1310 = vunpack.c.h.s8.bf16 %v1163
        %v1311 = vunpack.c.h.s8.bf16 %v1164
        %v1312 = vunpack.c.l.s8.bf16 %v1165
        %v1313 = vunpack.c.l.s8.bf16 %v1166
        %v1314 = vunpack.c.l.s8.bf16 %v1167
        %v1315 = vunpack.c.h.s8.bf16 %v1165
        %v1316 = vunpack.c.h.s8.bf16 %v1166
        %v1317 = vunpack.c.h.s8.bf16 %v1167
        %v1318 = vunpack.c.l.s8.bf16 %v1168
        %v1319 = vunpack.c.l.s8.bf16 %v1169
        %v1320 = vunpack.c.l.s8.bf16 %v1170
        %v1321 = vunpack.c.h.s8.bf16 %v1168
        %v1322 = vunpack.c.h.s8.bf16 %v1169
        %v1323 = vunpack.c.h.s8.bf16 %v1170
        %v1324 = vunpack.c.l.s8.bf16 %v1171
        %v1325 = vunpack.c.l.s8.bf16 %v1172
        %v1326 = vunpack.c.l.s8.bf16 %v1173
        %v1327 = vunpack.c.h.s8.bf16 %v1171
        %v1328 = vunpack.c.h.s8.bf16 %v1172
        %v1329 = vunpack.c.h.s8.bf16 %v1173
        %v1330 = vunpack.c.l.s8.bf16 %v1174
        %v1331 = vunpack.c.l.s8.bf16 %v1175
        %v1332 = vunpack.c.l.s8.bf16 %v1176
        %v1333 = vunpack.c.h.s8.bf16 %v1174
        %v1334 = vunpack.c.h.s8.bf16 %v1175
        %v1335 = vunpack.c.h.s8.bf16 %v1176
        %v1336 = vunpack.c.l.s8.bf16 %v1177
        %v1337 = vunpack.c.l.s8.bf16 %v1178
        %v1338 = vunpack.c.l.s8.bf16 %v1179
        %v1339 = vunpack.c.h.s8.bf16 %v1177
        %v1340 = vunpack.c.h.s8.bf16 %v1178
        %v1341 = vunpack.c.h.s8.bf16 %v1179
        %v1342 = vunpack.c.l.s8.bf16 %v1180
        %v1343 = vunpack.c.l.s8.bf16 %v1181
        %v1344 = vunpack.c.l.s8.bf16 %v1182
        %v1345 = vunpack.c.h.s8.bf16 %v1180
        %v1346 = vunpack.c.h.s8.bf16 %v1181
        %v1347 = vunpack.c.h.s8.bf16 %v1182
        %v1348 = vunpack.c.l.s8.bf16 %v1183
        %v1349 = vunpack.c.l.s8.bf16 %v1184
        %v1350 = vunpack.c.l.s8.bf16 %v1185
        %v1351 = vunpack.c.h.s8.bf16 %v1183
        %v1352 = vunpack.c.h.s8.bf16 %v1184
        %v1353 = vunpack.c.h.s8.bf16 %v1185
        %v1354 = vunpack.c.l.s8.bf16 %v1186
        %v1355 = vunpack.c.l.s8.bf16 %v1187
        %v1356 = vunpack.c.l.s8.bf16 %v1188
        %v1357 = vunpack.c.h.s8.bf16 %v1186
        %v1358 = vunpack.c.h.s8.bf16 %v1187
        %v1359 = vunpack.c.h.s8.bf16 %v1188
        %v1360 = vunpack.c.l.s8.bf16 %v1189
        %v1361 = vunpack.c.l.s8.bf16 %v1190
        %v1362 = vunpack.c.l.s8.bf16 %v1191
        %v1363 = vunpack.c.h.s8.bf16 %v1189
        %v1364 = vunpack.c.h.s8.bf16 %v1190
        %v1365 = vunpack.c.h.s8.bf16 %v1191
        %v1366 = vunpack.c.l.s8.bf16 %v1192
        %v1367 = vunpack.c.l.s8.bf16 %v1193
        %v1368 = vunpack.c.l.s8.bf16 %v1194
        %v1369 = vunpack.c.h.s8.bf16 %v1192
        %v1370 = vunpack.c.h.s8.bf16 %v1193
        %v1371 = vunpack.c.h.s8.bf16 %v1194
        %v1372 = vunpack.c.l.s8.bf16 %v1195
        %v1373 = vunpack.c.l.s8.bf16 %v1196
        %v1374 = vunpack.c.l.s8.bf16 %v1197
        %v1375 = vunpack.c.h.s8.bf16 %v1195
        %v1376 = vunpack.c.h.s8.bf16 %v1196
        %v1377 = vunpack.c.h.s8.bf16 %v1197
        %v1378 = vld [vmem:[%s0] sm:$0xff]
        %v1380 = vcombine.high %v1378, %v1378
        %v1382 = vunpack.c.l.s4 1966171168
        %v1383 = vunpack.c.0.s8 %v1382
        %v1384 = vlaneseq
        %v1385 = vshrl.u32 %v1384, 7
        %v1386 = vsub.s32 %v1383, %v1385
        %v1387 = vrot.slane %v1378, %v1386
        %v1389 = vunpack.c.l.s4 1966171168
        %v1390 = vunpack.c.0.s8 %v1389
        %v1391 = vlaneseq
        %v1392 = vshrl.u32 %v1391, 7
        %v1393 = vsub.s32 %v1390, %v1392
        %v1394 = vrot.slane %v1380, %v1393
        %v1395 = vcombine.high %v1387, %v1387
        %v1396 = vcombine.high %v1394, %v1394
        %v1398 = vunpack.c.l.s4 1966171168
        %v1399 = vunpack.c.0.s8 %v1398
        %v1400 = vlaneseq
        %v1401 = vshrl.u32 %v1400, 7
        %v1402 = vsub.s32 %v1399, %v1401
        %v1403 = vrot.slane %v1387, %v1402
        %v1405 = vunpack.c.l.s4 1966171168
        %v1406 = vunpack.c.0.s8 %v1405
        %v1407 = vlaneseq
        %v1408 = vshrl.u32 %v1407, 7
        %v1409 = vsub.s32 %v1406, %v1408
        %v1410 = vrot.slane %v1394, %v1409
        %v1412 = vunpack.c.l.s4 1966171168
        %v1413 = vunpack.c.0.s8 %v1412
        %v1414 = vlaneseq
        %v1415 = vshrl.u32 %v1414, 7
        %v1416 = vsub.s32 %v1413, %v1415
        %v1417 = vrot.slane %v1395, %v1416
        %v1419 = vunpack.c.l.s4 1966171168
        %v1420 = vunpack.c.0.s8 %v1419
        %v1421 = vlaneseq
        %v1422 = vshrl.u32 %v1421, 7
        %v1423 = vsub.s32 %v1420, %v1422
        %v1424 = vrot.slane %v1396, %v1423
        %v1425 = vcombine.high %v1403, %v1403
        %v1426 = vcombine.high %v1410, %v1410
        %v1427 = vcombine.high %v1417, %v1417
        %v1428 = vcombine.high %v1424, %v1424
        %vm1436 = vcmask 523264
        %v1438 = vsel %vm1436, %v1428, 0
        %1440 = vmatprep.subr.bf16.mxu0 %v950
        %1441 = vmatpush1.bf16.msra.mxu0 %v949
        %1442 = vmatprep.subr.bf16.mxu0 %v947
        %1443 = vmatpush1.bf16.msra.mxu0 %v946
        %1444 = vmatprep.subr.bf16.mxu0 %v944
        %1445 = vmatpush1.bf16.msra.mxu0 %v943
        %1446 = vmatprep.subr.bf16.mxu0 %v941
        %1447 = vmatpush1.bf16.msra.mxu0 %v940
        %1448 = vmatprep.subr.bf16.mxu0 %v938
        %1449 = vmatpush1.bf16.msra.mxu0 %v937
        %1450 = vmatprep.subr.bf16.mxu0 %v935
        %1451 = vmatpush1.bf16.msra.mxu0 %v934
        %1452 = vmatprep.subr.bf16.mxu0 %v932
        %1453 = vmatpush1.bf16.msra.mxu0 %v931
        %1454 = vmatprep.subr.bf16.mxu0 %v929
        %1455 = vmatpush1.bf16.msra.mxu0 %v928
        %1456 = vmatprep.subr.bf16.mxu0 %v974
        %1457 = vmatpush2.bf16.msra.mxu0 %v973
        %1458 = vmatprep.subr.bf16.mxu0 %v971
        %1459 = vmatpush2.bf16.msra.mxu0 %v970
        %1460 = vmatprep.subr.bf16.mxu0 %v968
        %1461 = vmatpush2.bf16.msra.mxu0 %v967
        %1462 = vmatprep.subr.bf16.mxu0 %v965
        %1463 = vmatpush2.bf16.msra.mxu0 %v964
        %1464 = vmatprep.subr.bf16.mxu0 %v962
        %1465 = vmatpush2.bf16.msra.mxu0 %v961
        %1466 = vmatprep.subr.bf16.mxu0 %v959
        %1467 = vmatpush2.bf16.msra.mxu0 %v958
        %1468 = vmatprep.subr.bf16.mxu0 %v956
        %1469 = vmatpush2.bf16.msra.mxu0 %v955
        %1470 = vmatprep.subr.bf16.mxu0 %v953
        %1471 = vmatpush2.bf16.msra.mxu0 %v952
        %1472 = vmatprep.mubr.bf16.mxu0 %v1417
        %1473 = vmatmul.mubr.bf16.gmra.mxu0 %v1403
        %v1474 = vpop.f32.mrf.mxu0
        %v1475 = vadd.f32 0.0, %v1474
        %v1476 = vpop.f32.mrf.mxu0
        %v1477 = vadd.f32 0.0, %v1476
        %v1478 = vpop.f32.mrf.mxu0
        %v1479 = vpop.f32.mrf.mxu0
        %1480 = vdwg.mxu0
        %1481 = vmatprep.subr.bf16.mxu0 %v998
        %1482 = vmatpush1.bf16.msra.mxu0 %v997
        %1483 = vmatprep.subr.bf16.mxu0 %v995
        %1484 = vmatpush1.bf16.msra.mxu0 %v994
        %1485 = vmatprep.subr.bf16.mxu0 %v992
        %1486 = vmatpush1.bf16.msra.mxu0 %v991
        %1487 = vmatprep.subr.bf16.mxu0 %v989
        %1488 = vmatpush1.bf16.msra.mxu0 %v988
        %1489 = vmatprep.subr.bf16.mxu0 %v986
        %1490 = vmatpush1.bf16.msra.mxu0 %v985
        %1491 = vmatprep.subr.bf16.mxu0 %v983
        %1492 = vmatpush1.bf16.msra.mxu0 %v982
        %1493 = vmatprep.subr.bf16.mxu0 %v980
        %1494 = vmatpush1.bf16.msra.mxu0 %v979
        %1495 = vmatprep.subr.bf16.mxu0 %v977
        %1496 = vmatpush1.bf16.msra.mxu0 %v976
        %1497 = vmatprep.subr.bf16.mxu0 %v1022
        %1498 = vmatpush2.bf16.msra.mxu0 %v1021
        %1499 = vmatprep.subr.bf16.mxu0 %v1019
        %1500 = vmatpush2.bf16.msra.mxu0 %v1018
        %1501 = vmatprep.subr.bf16.mxu0 %v1016
        %1502 = vmatpush2.bf16.msra.mxu0 %v1015
        %1503 = vmatprep.subr.bf16.mxu0 %v1013
        %1504 = vmatpush2.bf16.msra.mxu0 %v1012
        %1505 = vmatprep.subr.bf16.mxu0 %v1010
        %1506 = vmatpush2.bf16.msra.mxu0 %v1009
        %1507 = vmatprep.subr.bf16.mxu0 %v1007
        %1508 = vmatpush2.bf16.msra.mxu0 %v1006
        %1509 = vmatprep.subr.bf16.mxu0 %v1004
        %1510 = vmatpush2.bf16.msra.mxu0 %v1003
        %1511 = vmatprep.subr.bf16.mxu0 %v1001
        %1512 = vmatpush2.bf16.msra.mxu0 %v1000
        %1513 = vmatprep.mubr.bf16.mxu0 %v1427
        %1514 = vmatmul.mubr.bf16.gmra.mxu0 %v1425
        %v1515 = vpop.f32.mrf.mxu0
        %v1516 = vadd.f32 %v1475, %v1515
        %v1517 = vpop.f32.mrf.mxu0
        %v1518 = vadd.f32 %v1477, %v1517
        %v1519 = vpop.f32.mrf.mxu0
        %v1520 = vpop.f32.mrf.mxu0
        %1521 = vdwg.mxu0
        %1522 = vmatprep.subr.bf16.mxu0 %v1046
        %1523 = vmatpush1.bf16.msra.mxu0 %v1045
        %1524 = vmatprep.subr.bf16.mxu0 %v1043
        %1525 = vmatpush1.bf16.msra.mxu0 %v1042
        %1526 = vmatprep.subr.bf16.mxu0 %v1040
        %1527 = vmatpush1.bf16.msra.mxu0 %v1039
        %1528 = vmatprep.subr.bf16.mxu0 %v1037
        %1529 = vmatpush1.bf16.msra.mxu0 %v1036
        %1530 = vmatprep.subr.bf16.mxu0 %v1034
        %1531 = vmatpush1.bf16.msra.mxu0 %v1033
        %1532 = vmatprep.subr.bf16.mxu0 %v1031
        %1533 = vmatpush1.bf16.msra.mxu0 %v1030
        %1534 = vmatprep.subr.bf16.mxu0 %v1028
        %1535 = vmatpush1.bf16.msra.mxu0 %v1027
        %1536 = vmatprep.subr.bf16.mxu0 %v1025
        %1537 = vmatpush1.bf16.msra.mxu0 %v1024
        %1538 = vmatprep.subr.bf16.mxu0 %v1070
        %1539 = vmatpush2.bf16.msra.mxu0 %v1069
        %1540 = vmatprep.subr.bf16.mxu0 %v1067
        %1541 = vmatpush2.bf16.msra.mxu0 %v1066
        %1542 = vmatprep.subr.bf16.mxu0 %v1064
        %1543 = vmatpush2.bf16.msra.mxu0 %v1063
        %1544 = vmatprep.subr.bf16.mxu0 %v1061
        %1545 = vmatpush2.bf16.msra.mxu0 %v1060
        %1546 = vmatprep.subr.bf16.mxu0 %v1058
        %1547 = vmatpush2.bf16.msra.mxu0 %v1057
        %1548 = vmatprep.subr.bf16.mxu0 %v1055
        %1549 = vmatpush2.bf16.msra.mxu0 %v1054
        %1550 = vmatprep.subr.bf16.mxu0 %v1052
        %1551 = vmatpush2.bf16.msra.mxu0 %v1051
        %1552 = vmatprep.subr.bf16.mxu0 %v1049
        %1553 = vmatpush2.bf16.msra.mxu0 %v1048
        %1554 = vmatprep.mubr.bf16.mxu0 %v1424
        %1555 = vmatmul.mubr.bf16.gmra.mxu0 %v1410
        %v1556 = vpop.f32.mrf.mxu0
        %v1557 = vadd.f32 %v1516, %v1556
        %v1558 = vpop.f32.mrf.mxu0
        %v1559 = vadd.f32 %v1518, %v1558
        %v1560 = vpop.f32.mrf.mxu0
        %v1561 = vpop.f32.mrf.mxu0
        %1562 = vdwg.mxu0
        %1563 = vmatprep.subr.bf16.mxu0 %v1094
        %1564 = vmatpush1.bf16.msra.mxu0 %v1093
        %1565 = vmatprep.subr.bf16.mxu0 %v1091
        %1566 = vmatpush1.bf16.msra.mxu0 %v1090
        %1567 = vmatprep.subr.bf16.mxu0 %v1088
        %1568 = vmatpush1.bf16.msra.mxu0 %v1087
        %1569 = vmatprep.subr.bf16.mxu0 %v1085
        %1570 = vmatpush1.bf16.msra.mxu0 %v1084
        %1571 = vmatprep.subr.bf16.mxu0 %v1082
        %1572 = vmatpush1.bf16.msra.mxu0 %v1081
        %1573 = vmatprep.subr.bf16.mxu0 %v1079
        %1574 = vmatpush1.bf16.msra.mxu0 %v1078
        %1575 = vmatprep.subr.bf16.mxu0 %v1076
        %1576 = vmatpush1.bf16.msra.mxu0 %v1075
        %1577 = vmatprep.subr.bf16.mxu0 %v1073
        %1578 = vmatpush1.bf16.msra.mxu0 %v1072
        %1579 = vmatprep.subr.bf16.mxu0 0
        %1580 = vmatpush2.bf16.msra.mxu0 0
        %1581 = vmatprep.subr.bf16.mxu0 0
        %1582 = vmatpush2.bf16.msra.mxu0 0
        %1583 = vmatprep.subr.bf16.mxu0 0
        %1584 = vmatpush2.bf16.msra.mxu0 0
        %1585 = vmatprep.subr.bf16.mxu0 0
        %1586 = vmatpush2.bf16.msra.mxu0 0
        %1587 = vmatprep.subr.bf16.mxu0 %v1106
        %1588 = vmatpush2.bf16.msra.mxu0 %v1105
        %1589 = vmatprep.subr.bf16.mxu0 %v1103
        %1590 = vmatpush2.bf16.msra.mxu0 %v1102
        %1591 = vmatprep.subr.bf16.mxu0 %v1100
        %1592 = vmatpush2.bf16.msra.mxu0 %v1099
        %1593 = vmatprep.subr.bf16.mxu0 %v1097
        %1594 = vmatpush2.bf16.msra.mxu0 %v1096
        %1595 = vmatprep.mubr.bf16.mxu0 %v1438
        %1596 = vmatmul.mubr.bf16.gmra.mxu0 %v1426
        %v1597 = vpop.f32.mrf.mxu0
        %v1598 = vadd.f32 %v1557, %v1597
        %v1599 = vpop.f32.mrf.mxu0
        %v1600 = vadd.f32 %v1559, %v1599
        %v1601 = vpop.f32.mrf.mxu0
        %v1602 = vpop.f32.mrf.mxu0
        %1603 = vdwg.mxu0
        %1604 = vmatprep.subr.bf16.mxu0 0
        %1605 = vmatpush1.bf16.msra.mxu0 %v951
        %1606 = vmatprep.subr.bf16.mxu0 0
        %1607 = vmatpush1.bf16.msra.mxu0 %v948
        %1608 = vmatprep.subr.bf16.mxu0 0
        %1609 = vmatpush1.bf16.msra.mxu0 %v945
        %1610 = vmatprep.subr.bf16.mxu0 0
        %1611 = vmatpush1.bf16.msra.mxu0 %v942
        %1612 = vmatprep.subr.bf16.mxu0 0
        %1613 = vmatpush1.bf16.msra.mxu0 %v939
        %1614 = vmatprep.subr.bf16.mxu0 0
        %1615 = vmatpush1.bf16.msra.mxu0 %v936
        %1616 = vmatprep.subr.bf16.mxu0 0
        %1617 = vmatpush1.bf16.msra.mxu0 %v933
        %1618 = vmatprep.subr.bf16.mxu0 0
        %1619 = vmatpush1.bf16.msra.mxu0 %v930
        %1620 = vmatprep.subr.bf16.mxu0 0
        %1621 = vmatpush2.bf16.msra.mxu0 %v975
        %1622 = vmatprep.subr.bf16.mxu0 0
        %1623 = vmatpush2.bf16.msra.mxu0 %v972
        %1624 = vmatprep.subr.bf16.mxu0 0
        %1625 = vmatpush2.bf16.msra.mxu0 %v969
        %1626 = vmatprep.subr.bf16.mxu0 0
        %1627 = vmatpush2.bf16.msra.mxu0 %v966
        %1628 = vmatprep.subr.bf16.mxu0 0
        %1629 = vmatpush2.bf16.msra.mxu0 %v963
        %1630 = vmatprep.subr.bf16.mxu0 0
        %1631 = vmatpush2.bf16.msra.mxu0 %v960
        %1632 = vmatprep.subr.bf16.mxu0 0
        %1633 = vmatpush2.bf16.msra.mxu0 %v957
        %1634 = vmatprep.subr.bf16.mxu0 0
        %1635 = vmatpush2.bf16.msra.mxu0 %v954
        %1636 = vmatprep.mubr.bf16.mxu0 %v1417
        %1637 = vmatmul.mubr.bf16.gmra.mxu0 %v1403
        %v1638 = vpop.f32.mrf.mxu0
        %v1639 = vadd.f32 0.0, %v1638
        %v1640 = vpop.f32.mrf.mxu0
        %v1641 = vpop.f32.mrf.mxu0
        %v1642 = vpop.f32.mrf.mxu0
        %1643 = vdwg.mxu0
        %1644 = vmatprep.subr.bf16.mxu0 0
        %1645 = vmatpush1.bf16.msra.mxu0 %v999
        %1646 = vmatprep.subr.bf16.mxu0 0
        %1647 = vmatpush1.bf16.msra.mxu0 %v996
        %1648 = vmatprep.subr.bf16.mxu0 0
        %1649 = vmatpush1.bf16.msra.mxu0 %v993
        %1650 = vmatprep.subr.bf16.mxu0 0
        %1651 = vmatpush1.bf16.msra.mxu0 %v990
        %1652 = vmatprep.subr.bf16.mxu0 0
        %1653 = vmatpush1.bf16.msra.mxu0 %v987
        %1654 = vmatprep.subr.bf16.mxu0 0
        %1655 = vmatpush1.bf16.msra.mxu0 %v984
        %1656 = vmatprep.subr.bf16.mxu0 0
        %1657 = vmatpush1.bf16.msra.mxu0 %v981
        %1658 = vmatprep.subr.bf16.mxu0 0
        %1659 = vmatpush1.bf16.msra.mxu0 %v978
        %1660 = vmatprep.subr.bf16.mxu0 0
        %1661 = vmatpush2.bf16.msra.mxu0 %v1023
        %1662 = vmatprep.subr.bf16.mxu0 0
        %1663 = vmatpush2.bf16.msra.mxu0 %v1020
        %1664 = vmatprep.subr.bf16.mxu0 0
        %1665 = vmatpush2.bf16.msra.mxu0 %v1017
        %1666 = vmatprep.subr.bf16.mxu0 0
        %1667 = vmatpush2.bf16.msra.mxu0 %v1014
        %1668 = vmatprep.subr.bf16.mxu0 0
        %1669 = vmatpush2.bf16.msra.mxu0 %v1011
        %1670 = vmatprep.subr.bf16.mxu0 0
        %1671 = vmatpush2.bf16.msra.mxu0 %v1008
        %1672 = vmatprep.subr.bf16.mxu0 0
        %1673 = vmatpush2.bf16.msra.mxu0 %v1005
        %1674 = vmatprep.subr.bf16.mxu0 0
        %1675 = vmatpush2.bf16.msra.mxu0 %v1002
        %1676 = vmatprep.mubr.bf16.mxu0 %v1427
        %1677 = vmatmul.mubr.bf16.gmra.mxu0 %v1425
        %v1678 = vpop.f32.mrf.mxu0
        %v1679 = vadd.f32 %v1639, %v1678
        %v1680 = vpop.f32.mrf.mxu0
        %v1681 = vpop.f32.mrf.mxu0
        %v1682 = vpop.f32.mrf.mxu0
        %1683 = vdwg.mxu0
        %1684 = vmatprep.subr.bf16.mxu0 0
        %1685 = vmatpush1.bf16.msra.mxu0 %v1047
        %1686 = vmatprep.subr.bf16.mxu0 0
        %1687 = vmatpush1.bf16.msra.mxu0 %v1044
        %1688 = vmatprep.subr.bf16.mxu0 0
        %1689 = vmatpush1.bf16.msra.mxu0 %v1041
        %1690 = vmatprep.subr.bf16.mxu0 0
        %1691 = vmatpush1.bf16.msra.mxu0 %v1038
        %1692 = vmatprep.subr.bf16.mxu0 0
        %1693 = vmatpush1.bf16.msra.mxu0 %v1035
        %1694 = vmatprep.subr.bf16.mxu0 0
        %1695 = vmatpush1.bf16.msra.mxu0 %v1032
        %1696 = vmatprep.subr.bf16.mxu0 0
        %1697 = vmatpush1.bf16.msra.mxu0 %v1029
        %1698 = vmatprep.subr.bf16.mxu0 0
        %1699 = vmatpush1.bf16.msra.mxu0 %v1026
        %1700 = vmatprep.subr.bf16.mxu0 0
        %1701 = vmatpush2.bf16.msra.mxu0 %v1071
        %1702 = vmatprep.subr.bf16.mxu0 0
        %1703 = vmatpush2.bf16.msra.mxu0 %v1068
        %1704 = vmatprep.subr.bf16.mxu0 0
        %1705 = vmatpush2.bf16.msra.mxu0 %v1065
        %1706 = vmatprep.subr.bf16.mxu0 0
        %1707 = vmatpush2.bf16.msra.mxu0 %v1062
        %1708 = vmatprep.subr.bf16.mxu0 0
        %1709 = vmatpush2.bf16.msra.mxu0 %v1059
        %1710 = vmatprep.subr.bf16.mxu0 0
        %1711 = vmatpush2.bf16.msra.mxu0 %v1056
        %1712 = vmatprep.subr.bf16.mxu0 0
        %1713 = vmatpush2.bf16.msra.mxu0 %v1053
        %1714 = vmatprep.subr.bf16.mxu0 0
        %1715 = vmatpush2.bf16.msra.mxu0 %v1050
        %1716 = vmatprep.mubr.bf16.mxu0 %v1424
        %1717 = vmatmul.mubr.bf16.gmra.mxu0 %v1410
        %v1718 = vpop.f32.mrf.mxu0
        %v1719 = vadd.f32 %v1679, %v1718
        %v1720 = vpop.f32.mrf.mxu0
        %v1721 = vpop.f32.mrf.mxu0
        %v1722 = vpop.f32.mrf.mxu0
        %1723 = vdwg.mxu0
        %1724 = vmatprep.subr.bf16.mxu0 0
        %1725 = vmatpush1.bf16.msra.mxu0 %v1095
        %1726 = vmatprep.subr.bf16.mxu0 0
        %1727 = vmatpush1.bf16.msra.mxu0 %v1092
        %1728 = vmatprep.subr.bf16.mxu0 0
        %1729 = vmatpush1.bf16.msra.mxu0 %v1089
        %1730 = vmatprep.subr.bf16.mxu0 0
        %1731 = vmatpush1.bf16.msra.mxu0 %v1086
        %1732 = vmatprep.subr.bf16.mxu0 0
        %1733 = vmatpush1.bf16.msra.mxu0 %v1083
        %1734 = vmatprep.subr.bf16.mxu0 0
        %1735 = vmatpush1.bf16.msra.mxu0 %v1080
        %1736 = vmatprep.subr.bf16.mxu0 0
        %1737 = vmatpush1.bf16.msra.mxu0 %v1077
        %1738 = vmatprep.subr.bf16.mxu0 0
        %1739 = vmatpush1.bf16.msra.mxu0 %v1074
        %1740 = vmatprep.subr.bf16.mxu0 0
        %1741 = vmatpush2.bf16.msra.mxu0 0
        %1742 = vmatprep.subr.bf16.mxu0 0
        %1743 = vmatpush2.bf16.msra.mxu0 0
        %1744 = vmatprep.subr.bf16.mxu0 0
        %1745 = vmatpush2.bf16.msra.mxu0 0
        %1746 = vmatprep.subr.bf16.mxu0 0
        %1747 = vmatpush2.bf16.msra.mxu0 0
        %1748 = vmatprep.subr.bf16.mxu0 0
        %1749 = vmatpush2.bf16.msra.mxu0 %v1107
        %1750 = vmatprep.subr.bf16.mxu0 0
        %1751 = vmatpush2.bf16.msra.mxu0 %v1104
        %1752 = vmatprep.subr.bf16.mxu0 0
        %1753 = vmatpush2.bf16.msra.mxu0 %v1101
        %1754 = vmatprep.subr.bf16.mxu0 0
        %1755 = vmatpush2.bf16.msra.mxu0 %v1098
        %1756 = vmatprep.mubr.bf16.mxu0 %v1438
        %1757 = vmatmul.mubr.bf16.gmra.mxu0 %v1426
        %v1758 = vpop.f32.mrf.mxu0
        %v1759 = vadd.f32 %v1719, %v1758
        %v1760 = vpop.f32.mrf.mxu0
        %v1761 = vpop.f32.mrf.mxu0
        %v1762 = vpop.f32.mrf.mxu0
        %1763 = vdwg.mxu0
        %v1764 = vld [vmem:[%s814] sm:$0x7]
        %v1766 = vlaneseq
        %v1767 = vshrl.u32 %v1766, 7
        %v1768 = vsub.s32 0, %v1767
        %v1769 = vrot.slane %v1764, %v1768
        %v1770 = vlaneseq
        %v1771 = vshrl.u32 %v1770, 7
        %v1772 = vsub.s32 1, %v1771
        %v1773 = vrot.slane %v1764, %v1772
        %v1774 = vlaneseq
        %v1775 = vshrl.u32 %v1774, 7
        %v1776 = vsub.s32 2, %v1775
        %v1777 = vrot.slane %v1764, %v1776
        %v1781 = vmul.f32 %v1598, %v1769
        %v1782 = vmul.f32 %v1600, %v1773
        %v1783 = vmul.f32 %v1759, %v1777
        %v1784 = vld [vmem:[%s824] sm:$0x7]
        %v1786 = vlaneseq
        %v1787 = vshrl.u32 %v1786, 7
        %v1788 = vsub.s32 0, %v1787
        %v1789 = vrot.slane %v1784, %v1788
        %v1790 = vlaneseq
        %v1791 = vshrl.u32 %v1790, 7
        %v1792 = vsub.s32 1, %v1791
        %v1793 = vrot.slane %v1784, %v1792
        %v1794 = vlaneseq
        %v1795 = vshrl.u32 %v1794, 7
        %v1796 = vsub.s32 2, %v1795
        %v1797 = vrot.slane %v1784, %v1796
        %v1801 = vadd.f32 %v1781, %v1789
        %v1802 = vadd.f32 %v1782, %v1793
        %v1803 = vadd.f32 %v1783, %v1797
        %v1804 = vld [vmem:[%s1] sm:$0xff]
        %v1806 = vcombine.high %v1804, %v1804
        %v1808 = vunpack.c.l.s4 1966171168
        %v1809 = vunpack.c.0.s8 %v1808
        %v1810 = vlaneseq
        %v1811 = vshrl.u32 %v1810, 7
        %v1812 = vsub.s32 %v1809, %v1811
        %v1813 = vrot.slane %v1804, %v1812
        %v1815 = vunpack.c.l.s4 1966171168
        %v1816 = vunpack.c.0.s8 %v1815
        %v1817 = vlaneseq
        %v1818 = vshrl.u32 %v1817, 7
        %v1819 = vsub.s32 %v1816, %v1818
        %v1820 = vrot.slane %v1806, %v1819
        %v1821 = vcombine.high %v1813, %v1813
        %v1822 = vcombine.high %v1820, %v1820
        %v1824 = vunpack.c.l.s4 1966171168
        %v1825 = vunpack.c.0.s8 %v1824
        %v1826 = vlaneseq
        %v1827 = vshrl.u32 %v1826, 7
        %v1828 = vsub.s32 %v1825, %v1827
        %v1829 = vrot.slane %v1813, %v1828
        %v1831 = vunpack.c.l.s4 1966171168
        %v1832 = vunpack.c.0.s8 %v1831
        %v1833 = vlaneseq
        %v1834 = vshrl.u32 %v1833, 7
        %v1835 = vsub.s32 %v1832, %v1834
        %v1836 = vrot.slane %v1820, %v1835
        %v1838 = vunpack.c.l.s4 1966171168
        %v1839 = vunpack.c.0.s8 %v1838
        %v1840 = vlaneseq
        %v1841 = vshrl.u32 %v1840, 7
        %v1842 = vsub.s32 %v1839, %v1841
        %v1843 = vrot.slane %v1821, %v1842
        %v1845 = vunpack.c.l.s4 1966171168
        %v1846 = vunpack.c.0.s8 %v1845
        %v1847 = vlaneseq
        %v1848 = vshrl.u32 %v1847, 7
        %v1849 = vsub.s32 %v1846, %v1848
        %v1850 = vrot.slane %v1822, %v1849
        %v1851 = vcombine.high %v1829, %v1829
        %v1852 = vcombine.high %v1836, %v1836
        %v1853 = vcombine.high %v1843, %v1843
        %v1854 = vcombine.high %v1850, %v1850
        %v1863 = vsel %vm1436, %v1854, 0
        %1865 = vmatprep.subr.bf16.mxu0 %v1220
        %1866 = vmatpush1.bf16.msra.mxu0 %v1219
        %1867 = vmatprep.subr.bf16.mxu0 %v1217
        %1868 = vmatpush1.bf16.msra.mxu0 %v1216
        %1869 = vmatprep.subr.bf16.mxu0 %v1214
        %1870 = vmatpush1.bf16.msra.mxu0 %v1213
        %1871 = vmatprep.subr.bf16.mxu0 %v1211
        %1872 = vmatpush1.bf16.msra.mxu0 %v1210
        %1873 = vmatprep.subr.bf16.mxu0 %v1208
        %1874 = vmatpush1.bf16.msra.mxu0 %v1207
        %1875 = vmatprep.subr.bf16.mxu0 %v1205
        %1876 = vmatpush1.bf16.msra.mxu0 %v1204
        %1877 = vmatprep.subr.bf16.mxu0 %v1202
        %1878 = vmatpush1.bf16.msra.mxu0 %v1201
        %1879 = vmatprep.subr.bf16.mxu0 %v1199
        %1880 = vmatpush1.bf16.msra.mxu0 %v1198
        %1881 = vmatprep.subr.bf16.mxu0 %v1244
        %1882 = vmatpush2.bf16.msra.mxu0 %v1243
        %1883 = vmatprep.subr.bf16.mxu0 %v1241
        %1884 = vmatpush2.bf16.msra.mxu0 %v1240
        %1885 = vmatprep.subr.bf16.mxu0 %v1238
        %1886 = vmatpush2.bf16.msra.mxu0 %v1237
        %1887 = vmatprep.subr.bf16.mxu0 %v1235
        %1888 = vmatpush2.bf16.msra.mxu0 %v1234
        %1889 = vmatprep.subr.bf16.mxu0 %v1232
        %1890 = vmatpush2.bf16.msra.mxu0 %v1231
        %1891 = vmatprep.subr.bf16.mxu0 %v1229
        %1892 = vmatpush2.bf16.msra.mxu0 %v1228
        %1893 = vmatprep.subr.bf16.mxu0 %v1226
        %1894 = vmatpush2.bf16.msra.mxu0 %v1225
        %1895 = vmatprep.subr.bf16.mxu0 %v1223
        %1896 = vmatpush2.bf16.msra.mxu0 %v1222
        %1897 = vmatprep.mubr.bf16.mxu0 %v1843
        %1898 = vmatmul.mubr.bf16.gmra.mxu0 %v1829
        %v1899 = vpop.f32.mrf.mxu0
        %v1900 = vadd.f32 0.0, %v1899
        %v1901 = vpop.f32.mrf.mxu0
        %v1902 = vadd.f32 0.0, %v1901
        %v1903 = vpop.f32.mrf.mxu0
        %v1904 = vpop.f32.mrf.mxu0
        %1905 = vdwg.mxu0
        %1906 = vmatprep.subr.bf16.mxu0 %v1268
        %1907 = vmatpush1.bf16.msra.mxu0 %v1267
        %1908 = vmatprep.subr.bf16.mxu0 %v1265
        %1909 = vmatpush1.bf16.msra.mxu0 %v1264
        %1910 = vmatprep.subr.bf16.mxu0 %v1262
        %1911 = vmatpush1.bf16.msra.mxu0 %v1261
        %1912 = vmatprep.subr.bf16.mxu0 %v1259
        %1913 = vmatpush1.bf16.msra.mxu0 %v1258
        %1914 = vmatprep.subr.bf16.mxu0 %v1256
        %1915 = vmatpush1.bf16.msra.mxu0 %v1255
        %1916 = vmatprep.subr.bf16.mxu0 %v1253
        %1917 = vmatpush1.bf16.msra.mxu0 %v1252
        %1918 = vmatprep.subr.bf16.mxu0 %v1250
        %1919 = vmatpush1.bf16.msra.mxu0 %v1249
        %1920 = vmatprep.subr.bf16.mxu0 %v1247
        %1921 = vmatpush1.bf16.msra.mxu0 %v1246
        %1922 = vmatprep.subr.bf16.mxu0 %v1292
        %1923 = vmatpush2.bf16.msra.mxu0 %v1291
        %1924 = vmatprep.subr.bf16.mxu0 %v1289
        %1925 = vmatpush2.bf16.msra.mxu0 %v1288
        %1926 = vmatprep.subr.bf16.mxu0 %v1286
        %1927 = vmatpush2.bf16.msra.mxu0 %v1285
        %1928 = vmatprep.subr.bf16.mxu0 %v1283
        %1929 = vmatpush2.bf16.msra.mxu0 %v1282
        %1930 = vmatprep.subr.bf16.mxu0 %v1280
        %1931 = vmatpush2.bf16.msra.mxu0 %v1279
        %1932 = vmatprep.subr.bf16.mxu0 %v1277
        %1933 = vmatpush2.bf16.msra.mxu0 %v1276
        %1934 = vmatprep.subr.bf16.mxu0 %v1274
        %1935 = vmatpush2.bf16.msra.mxu0 %v1273
        %1936 = vmatprep.subr.bf16.mxu0 %v1271
        %1937 = vmatpush2.bf16.msra.mxu0 %v1270
        %1938 = vmatprep.mubr.bf16.mxu0 %v1853
        %1939 = vmatmul.mubr.bf16.gmra.mxu0 %v1851
        %v1940 = vpop.f32.mrf.mxu0
        %v1941 = vadd.f32 %v1900, %v1940
        %v1942 = vpop.f32.mrf.mxu0
        %v1943 = vadd.f32 %v1902, %v1942
        %v1944 = vpop.f32.mrf.mxu0
        %v1945 = vpop.f32.mrf.mxu0
        %1946 = vdwg.mxu0
        %1947 = vmatprep.subr.bf16.mxu0 %v1316
        %1948 = vmatpush1.bf16.msra.mxu0 %v1315
        %1949 = vmatprep.subr.bf16.mxu0 %v1313
        %1950 = vmatpush1.bf16.msra.mxu0 %v1312
        %1951 = vmatprep.subr.bf16.mxu0 %v1310
        %1952 = vmatpush1.bf16.msra.mxu0 %v1309
        %1953 = vmatprep.subr.bf16.mxu0 %v1307
        %1954 = vmatpush1.bf16.msra.mxu0 %v1306
        %1955 = vmatprep.subr.bf16.mxu0 %v1304
        %1956 = vmatpush1.bf16.msra.mxu0 %v1303
        %1957 = vmatprep.subr.bf16.mxu0 %v1301
        %1958 = vmatpush1.bf16.msra.mxu0 %v1300
        %1959 = vmatprep.subr.bf16.mxu0 %v1298
        %1960 = vmatpush1.bf16.msra.mxu0 %v1297
        %1961 = vmatprep.subr.bf16.mxu0 %v1295
        %1962 = vmatpush1.bf16.msra.mxu0 %v1294
        %1963 = vmatprep.subr.bf16.mxu0 %v1340
        %1964 = vmatpush2.bf16.msra.mxu0 %v1339
        %1965 = vmatprep.subr.bf16.mxu0 %v1337
        %1966 = vmatpush2.bf16.msra.mxu0 %v1336
        %1967 = vmatprep.subr.bf16.mxu0 %v1334
        %1968 = vmatpush2.bf16.msra.mxu0 %v1333
        %1969 = vmatprep.subr.bf16.mxu0 %v1331
        %1970 = vmatpush2.bf16.msra.mxu0 %v1330
        %1971 = vmatprep.subr.bf16.mxu0 %v1328
        %1972 = vmatpush2.bf16.msra.mxu0 %v1327
        %1973 = vmatprep.subr.bf16.mxu0 %v1325
        %1974 = vmatpush2.bf16.msra.mxu0 %v1324
        %1975 = vmatprep.subr.bf16.mxu0 %v1322
        %1976 = vmatpush2.bf16.msra.mxu0 %v1321
        %1977 = vmatprep.subr.bf16.mxu0 %v1319
        %1978 = vmatpush2.bf16.msra.mxu0 %v1318
        %1979 = vmatprep.mubr.bf16.mxu0 %v1850
        %1980 = vmatmul.mubr.bf16.gmra.mxu0 %v1836
        %v1981 = vpop.f32.mrf.mxu0
        %v1982 = vadd.f32 %v1941, %v1981
        %v1983 = vpop.f32.mrf.mxu0
        %v1984 = vadd.f32 %v1943, %v1983
        %v1985 = vpop.f32.mrf.mxu0
        %v1986 = vpop.f32.mrf.mxu0
        %1987 = vdwg.mxu0
        %1988 = vmatprep.subr.bf16.mxu0 %v1364
        %1989 = vmatpush1.bf16.msra.mxu0 %v1363
        %1990 = vmatprep.subr.bf16.mxu0 %v1361
        %1991 = vmatpush1.bf16.msra.mxu0 %v1360
        %1992 = vmatprep.subr.bf16.mxu0 %v1358
        %1993 = vmatpush1.bf16.msra.mxu0 %v1357
        %1994 = vmatprep.subr.bf16.mxu0 %v1355
        %1995 = vmatpush1.bf16.msra.mxu0 %v1354
        %1996 = vmatprep.subr.bf16.mxu0 %v1352
        %1997 = vmatpush1.bf16.msra.mxu0 %v1351
        %1998 = vmatprep.subr.bf16.mxu0 %v1349
        %1999 = vmatpush1.bf16.msra.mxu0 %v1348
        %2000 = vmatprep.subr.bf16.mxu0 %v1346
        %2001 = vmatpush1.bf16.msra.mxu0 %v1345
        %2002 = vmatprep.subr.bf16.mxu0 %v1343
        %2003 = vmatpush1.bf16.msra.mxu0 %v1342
        %2004 = vmatprep.subr.bf16.mxu0 0
        %2005 = vmatpush2.bf16.msra.mxu0 0
        %2006 = vmatprep.subr.bf16.mxu0 0
        %2007 = vmatpush2.bf16.msra.mxu0 0
        %2008 = vmatprep.subr.bf16.mxu0 0
        %2009 = vmatpush2.bf16.msra.mxu0 0
        %2010 = vmatprep.subr.bf16.mxu0 0
        %2011 = vmatpush2.bf16.msra.mxu0 0
        %2012 = vmatprep.subr.bf16.mxu0 %v1376
        %2013 = vmatpush2.bf16.msra.mxu0 %v1375
        %2014 = vmatprep.subr.bf16.mxu0 %v1373
        %2015 = vmatpush2.bf16.msra.mxu0 %v1372
        %2016 = vmatprep.subr.bf16.mxu0 %v1370
        %2017 = vmatpush2.bf16.msra.mxu0 %v1369
        %2018 = vmatprep.subr.bf16.mxu0 %v1367
        %2019 = vmatpush2.bf16.msra.mxu0 %v1366
        %2020 = vmatprep.mubr.bf16.mxu0 %v1863
        %2021 = vmatmul.mubr.bf16.gmra.mxu0 %v1852
        %v2022 = vpop.f32.mrf.mxu0
        %v2023 = vadd.f32 %v1982, %v2022
        %v2024 = vpop.f32.mrf.mxu0
        %v2025 = vadd.f32 %v1984, %v2024
        %v2026 = vpop.f32.mrf.mxu0
        %v2027 = vpop.f32.mrf.mxu0
        %2028 = vdwg.mxu0
        %2029 = vmatprep.subr.bf16.mxu0 0
        %2030 = vmatpush1.bf16.msra.mxu0 %v1221
        %2031 = vmatprep.subr.bf16.mxu0 0
        %2032 = vmatpush1.bf16.msra.mxu0 %v1218
        %2033 = vmatprep.subr.bf16.mxu0 0
        %2034 = vmatpush1.bf16.msra.mxu0 %v1215
        %2035 = vmatprep.subr.bf16.mxu0 0
        %2036 = vmatpush1.bf16.msra.mxu0 %v1212
        %2037 = vmatprep.subr.bf16.mxu0 0
        %2038 = vmatpush1.bf16.msra.mxu0 %v1209
        %2039 = vmatprep.subr.bf16.mxu0 0
        %2040 = vmatpush1.bf16.msra.mxu0 %v1206
        %2041 = vmatprep.subr.bf16.mxu0 0
        %2042 = vmatpush1.bf16.msra.mxu0 %v1203
        %2043 = vmatprep.subr.bf16.mxu0 0
        %2044 = vmatpush1.bf16.msra.mxu0 %v1200
        %2045 = vmatprep.subr.bf16.mxu0 0
        %2046 = vmatpush2.bf16.msra.mxu0 %v1245
        %2047 = vmatprep.subr.bf16.mxu0 0
        %2048 = vmatpush2.bf16.msra.mxu0 %v1242
        %2049 = vmatprep.subr.bf16.mxu0 0
        %2050 = vmatpush2.bf16.msra.mxu0 %v1239
        %2051 = vmatprep.subr.bf16.mxu0 0
        %2052 = vmatpush2.bf16.msra.mxu0 %v1236
        %2053 = vmatprep.subr.bf16.mxu0 0
        %2054 = vmatpush2.bf16.msra.mxu0 %v1233
        %2055 = vmatprep.subr.bf16.mxu0 0
        %2056 = vmatpush2.bf16.msra.mxu0 %v1230
        %2057 = vmatprep.subr.bf16.mxu0 0
        %2058 = vmatpush2.bf16.msra.mxu0 %v1227
        %2059 = vmatprep.subr.bf16.mxu0 0
        %2060 = vmatpush2.bf16.msra.mxu0 %v1224
        %2061 = vmatprep.mubr.bf16.mxu0 %v1843
        %2062 = vmatmul.mubr.bf16.gmra.mxu0 %v1829
        %v2063 = vpop.f32.mrf.mxu0
        %v2064 = vadd.f32 0.0, %v2063
        %v2065 = vpop.f32.mrf.mxu0
        %v2066 = vpop.f32.mrf.mxu0
        %v2067 = vpop.f32.mrf.mxu0
        %2068 = vdwg.mxu0
        %2069 = vmatprep.subr.bf16.mxu0 0
        %2070 = vmatpush1.bf16.msra.mxu0 %v1269
        %2071 = vmatprep.subr.bf16.mxu0 0
        %2072 = vmatpush1.bf16.msra.mxu0 %v1266
        %2073 = vmatprep.subr.bf16.mxu0 0
        %2074 = vmatpush1.bf16.msra.mxu0 %v1263
        %2075 = vmatprep.subr.bf16.mxu0 0
        %2076 = vmatpush1.bf16.msra.mxu0 %v1260
        %2077 = vmatprep.subr.bf16.mxu0 0
        %2078 = vmatpush1.bf16.msra.mxu0 %v1257
        %2079 = vmatprep.subr.bf16.mxu0 0
        %2080 = vmatpush1.bf16.msra.mxu0 %v1254
        %2081 = vmatprep.subr.bf16.mxu0 0
        %2082 = vmatpush1.bf16.msra.mxu0 %v1251
        %2083 = vmatprep.subr.bf16.mxu0 0
        %2084 = vmatpush1.bf16.msra.mxu0 %v1248
        %2085 = vmatprep.subr.bf16.mxu0 0
        %2086 = vmatpush2.bf16.msra.mxu0 %v1293
        %2087 = vmatprep.subr.bf16.mxu0 0
        %2088 = vmatpush2.bf16.msra.mxu0 %v1290
        %2089 = vmatprep.subr.bf16.mxu0 0
        %2090 = vmatpush2.bf16.msra.mxu0 %v1287
        %2091 = vmatprep.subr.bf16.mxu0 0
        %2092 = vmatpush2.bf16.msra.mxu0 %v1284
        %2093 = vmatprep.subr.bf16.mxu0 0
        %2094 = vmatpush2.bf16.msra.mxu0 %v1281
        %2095 = vmatprep.subr.bf16.mxu0 0
        %2096 = vmatpush2.bf16.msra.mxu0 %v1278
        %2097 = vmatprep.subr.bf16.mxu0 0
        %2098 = vmatpush2.bf16.msra.mxu0 %v1275
        %2099 = vmatprep.subr.bf16.mxu0 0
        %2100 = vmatpush2.bf16.msra.mxu0 %v1272
        %2101 = vmatprep.mubr.bf16.mxu0 %v1853
        %2102 = vmatmul.mubr.bf16.gmra.mxu0 %v1851
        %v2103 = vpop.f32.mrf.mxu0
        %v2104 = vadd.f32 %v2064, %v2103
        %v2105 = vpop.f32.mrf.mxu0
        %v2106 = vpop.f32.mrf.mxu0
        %v2107 = vpop.f32.mrf.mxu0
        %2108 = vdwg.mxu0
        %2109 = vmatprep.subr.bf16.mxu0 0
        %2110 = vmatpush1.bf16.msra.mxu0 %v1317
        %2111 = vmatprep.subr.bf16.mxu0 0
        %2112 = vmatpush1.bf16.msra.mxu0 %v1314
        %2113 = vmatprep.subr.bf16.mxu0 0
        %2114 = vmatpush1.bf16.msra.mxu0 %v1311
        %2115 = vmatprep.subr.bf16.mxu0 0
        %2116 = vmatpush1.bf16.msra.mxu0 %v1308
        %2117 = vmatprep.subr.bf16.mxu0 0
        %2118 = vmatpush1.bf16.msra.mxu0 %v1305
        %2119 = vmatprep.subr.bf16.mxu0 0
        %2120 = vmatpush1.bf16.msra.mxu0 %v1302
        %2121 = vmatprep.subr.bf16.mxu0 0
        %2122 = vmatpush1.bf16.msra.mxu0 %v1299
        %2123 = vmatprep.subr.bf16.mxu0 0
        %2124 = vmatpush1.bf16.msra.mxu0 %v1296
        %2125 = vmatprep.subr.bf16.mxu0 0
        %2126 = vmatpush2.bf16.msra.mxu0 %v1341
        %2127 = vmatprep.subr.bf16.mxu0 0
        %2128 = vmatpush2.bf16.msra.mxu0 %v1338
        %2129 = vmatprep.subr.bf16.mxu0 0
        %2130 = vmatpush2.bf16.msra.mxu0 %v1335
        %2131 = vmatprep.subr.bf16.mxu0 0
        %2132 = vmatpush2.bf16.msra.mxu0 %v1332
        %2133 = vmatprep.subr.bf16.mxu0 0
        %2134 = vmatpush2.bf16.msra.mxu0 %v1329
        %2135 = vmatprep.subr.bf16.mxu0 0
        %2136 = vmatpush2.bf16.msra.mxu0 %v1326
        %2137 = vmatprep.subr.bf16.mxu0 0
        %2138 = vmatpush2.bf16.msra.mxu0 %v1323
        %2139 = vmatprep.subr.bf16.mxu0 0
        %2140 = vmatpush2.bf16.msra.mxu0 %v1320
        %2141 = vmatprep.mubr.bf16.mxu0 %v1850
        %2142 = vmatmul.mubr.bf16.gmra.mxu0 %v1836
        %v2143 = vpop.f32.mrf.mxu0
        %v2144 = vadd.f32 %v2104, %v2143
        %v2145 = vpop.f32.mrf.mxu0
        %v2146 = vpop.f32.mrf.mxu0
        %v2147 = vpop.f32.mrf.mxu0
        %2148 = vdwg.mxu0
        %2149 = vmatprep.subr.bf16.mxu0 0
        %2150 = vmatpush1.bf16.msra.mxu0 %v1365
        %2151 = vmatprep.subr.bf16.mxu0 0
        %2152 = vmatpush1.bf16.msra.mxu0 %v1362
        %2153 = vmatprep.subr.bf16.mxu0 0
        %2154 = vmatpush1.bf16.msra.mxu0 %v1359
        %2155 = vmatprep.subr.bf16.mxu0 0
        %2156 = vmatpush1.bf16.msra.mxu0 %v1356
        %2157 = vmatprep.subr.bf16.mxu0 0
        %2158 = vmatpush1.bf16.msra.mxu0 %v1353
        %2159 = vmatprep.subr.bf16.mxu0 0
        %2160 = vmatpush1.bf16.msra.mxu0 %v1350
        %2161 = vmatprep.subr.bf16.mxu0 0
        %2162 = vmatpush1.bf16.msra.mxu0 %v1347
        %2163 = vmatprep.subr.bf16.mxu0 0
        %2164 = vmatpush1.bf16.msra.mxu0 %v1344
        %2165 = vmatprep.subr.bf16.mxu0 0
        %2166 = vmatpush2.bf16.msra.mxu0 0
        %2167 = vmatprep.subr.bf16.mxu0 0
        %2168 = vmatpush2.bf16.msra.mxu0 0
        %2169 = vmatprep.subr.bf16.mxu0 0
        %2170 = vmatpush2.bf16.msra.mxu0 0
        %2171 = vmatprep.subr.bf16.mxu0 0
        %2172 = vmatpush2.bf16.msra.mxu0 0
        %2173 = vmatprep.subr.bf16.mxu0 0
        %2174 = vmatpush2.bf16.msra.mxu0 %v1377
        %2175 = vmatprep.subr.bf16.mxu0 0
        %2176 = vmatpush2.bf16.msra.mxu0 %v1374
        %2177 = vmatprep.subr.bf16.mxu0 0
        %2178 = vmatpush2.bf16.msra.mxu0 %v1371
        %2179 = vmatprep.subr.bf16.mxu0 0
        %2180 = vmatpush2.bf16.msra.mxu0 %v1368
        %2181 = vmatprep.mubr.bf16.mxu0 %v1863
        %2182 = vmatmul.mubr.bf16.gmra.mxu0 %v1852
        %v2183 = vpop.f32.mrf.mxu0
        %v2184 = vadd.f32 %v2144, %v2183
        %v2185 = vpop.f32.mrf.mxu0
        %v2186 = vpop.f32.mrf.mxu0
        %v2187 = vpop.f32.mrf.mxu0
        %2188 = vdwg.mxu0
        %v2189 = vld [vmem:[%s819] sm:$0x7]
        %v2191 = vlaneseq
        %v2192 = vshrl.u32 %v2191, 7
        %v2193 = vsub.s32 0, %v2192
        %v2194 = vrot.slane %v2189, %v2193
        %v2195 = vlaneseq
        %v2196 = vshrl.u32 %v2195, 7
        %v2197 = vsub.s32 1, %v2196
        %v2198 = vrot.slane %v2189, %v2197
        %v2199 = vlaneseq
        %v2200 = vshrl.u32 %v2199, 7
        %v2201 = vsub.s32 2, %v2200
        %v2202 = vrot.slane %v2189, %v2201
        %v2206 = vmul.f32 %v2023, %v2194
        %v2207 = vmul.f32 %v2025, %v2198
        %v2208 = vmul.f32 %v2184, %v2202
        %v2209 = vld [vmem:[%s829] sm:$0x7]
        %v2211 = vlaneseq
        %v2212 = vshrl.u32 %v2211, 7
        %v2213 = vsub.s32 0, %v2212
        %v2214 = vrot.slane %v2209, %v2213
        %v2215 = vlaneseq
        %v2216 = vshrl.u32 %v2215, 7
        %v2217 = vsub.s32 1, %v2216
        %v2218 = vrot.slane %v2209, %v2217
        %v2219 = vlaneseq
        %v2220 = vshrl.u32 %v2219, 7
        %v2221 = vsub.s32 2, %v2220
        %v2222 = vrot.slane %v2209, %v2221
        %v2226 = vadd.f32 %v2206, %v2214
        %v2227 = vadd.f32 %v2207, %v2218
        %v2228 = vadd.f32 %v2208, %v2222
        %v2229 = vadd.f32 %v1801, %v2226
        %v2230 = vxor.u32 %v2229, 2147483648
        %v2231 = vmul.f32 %v2230, 1.442695
        %v2232 = vpow.pop %v2231
        %v2233 = vadd.f32 %v2232, 1.0
        %v2234 = vrcp.pop %v2233
        %v2235 = vmul.f32 1.0, %v2234
        %v2236 = vadd.f32 %v1802, %v2227
        %v2237 = vxor.u32 %v2236, 2147483648
        %v2238 = vmul.f32 %v2237, 1.442695
        %v2239 = vpow.pop %v2238
        %v2240 = vadd.f32 %v2239, 1.0
        %v2241 = vrcp.pop %v2240
        %v2242 = vmul.f32 1.0, %v2241
        %v2243 = vmul.f32 %v2235, %v2228
        %v2244 = vadd.f32 %v1803, %v2243
        %v2245 = vtanh.pop %v2244
        %v2246 = vsub.f32 1.0, %v2242
        %v2247 = vmul.f32 %v2246, %v2245
        %v2248 = vld [vmem:[%s833] sm:$0x1]
        %v2249 = vmul.f32 %v2242, %v2248
        %v2250 = vadd.f32 %v2247, %v2249
        %2251 = vst [vmem:[%s836] sm:$0x1] %v2250
        %p2252 = scmp.lt.s32.totalorder %s20, 7
        %s2253 = scalar_select %p2252, %s20, 7
        %s2254 = scalar_lea.vmem %s9, %s2253
        // Predicated region
        $region103: #{online_gcrn_forward.13} parent=93 // pred_check
          %p2255 = pneg %p262
        $region104: #{online_gcrn_forward.13} parent=93 // pred_check_branch
          %2257 = sbr.rel (%p2255) target = $region106
        $region105: #{online_gcrn_forward.13} parent=93 // pred_region
          _
        $region106: #{online_gcrn_forward.13} parent=93 // pred_fallthru
          _
      $region94: #{online_gcrn_forward.13} parent=5 // pred_fallthru
        _
      %p2258 = scmp.le.s32.totalorder 2, %s15
      // Predicated region
      $region107: #{online_gcrn_forward.13} parent=5 // pred_check
        %p2259 = pneg %p2258
      $region108: #{online_gcrn_forward.13} parent=5 // pred_check_branch
        %2261 = sbr.rel (%p2259) target = $region110
      $region109: #{online_gcrn_forward.13} parent=5 // pred_region
        %s2262 = ssub.s32 %s15, 2
        // Predicated region
        $region111: #{online_gcrn_forward.13} parent=109 // pred_check
          %p2263 = pneg %p268
        $region112: #{online_gcrn_forward.13} parent=109 // pred_check_branch
          %2265 = sbr.rel (%p2263) target = $region114
        $region113: #{online_gcrn_forward.13} parent=109 // pred_region
          %p2266 = scmp.lt.s32.totalorder %s21, 7
          %s2267 = scalar_select %p2266, %s21, 7
          %s2268 = scalar_lea.vmem %s9, %s2267
        $region114: #{online_gcrn_forward.13} parent=109 // pred_fallthru
          _
      $region110: #{online_gcrn_forward.13} parent=5 // pred_fallthru
        _
    $region6: #{online_gcrn_forward.13} parent=1 // loop_footer
      %s19 = sadd.s32 1, %s15
    $region7: #{online_gcrn_forward.13} parent=1 // loop_footer_branch
      %14 = sbr.rel target = $region3
    $region8: #{online_gcrn_forward.13} parent=1 // loop_exit
      _

// kernel: online_gcrn_forward.14
$region0: #{online_gcrn_forward.14}
  #allocation0 [shape = 'u32[]', space=smem, size = 0x4, offset = 0x4, fixed_abs, tag = 'smem constant byte address 0x4 - core index']
  #allocation1 [shape = 'u32[144,128]{1,0:T(1,128)}', space=vmem, size = 0x12000, scoped, tag = 'internal scratch']
  %s0 = inlined_call_operand.vmem [shape: bf16[2,512,128], index: 0, kind: input, shape index: {}]
  %s1 = inlined_call_operand.vmem [shape: bf16[2,256,512], index: 1, kind: input, shape index: {}]
  %s2 = inlined_call_operand.vmem [shape: f32[2,256,1], index: 2, kind: input, shape index: {}]
  %s3 = inlined_call_operand.vmem [shape: bf16[2,128,128], index: 3, kind: output, shape index: {}]
  %s4 = sld [smem:[#allocation0]]
  $region45: #{online_gcrn_forward.14} parent=0
    _
  %s6 = ssub.s32 1, %s4
  %s7 = scalar_select 0, %s6, %s4
  loop: start=0, step=1, limit=4
  $region2: #{online_gcrn_forward.14} parent=0 // loop_pre_header
    _
  $region3: #{online_gcrn_forward.14} parent=0 // loop_header
    %s9 = sphi 0, %s13
    %p10 = scmp.ge.s32.totalorder %s9, 4
    %s19 = sphi 0, %s21
    %s22 = sphi 0, %s19
    %s23 = sphi 0, %s22
    %s39 = sphi 0, %s23
    %s45 = sphi 0, %s47
    %s48 = sphi 0, %s45
    %s49 = sphi 0, %s48
    %s65 = sphi 0, %s49
    %s71 = sphi 0, %s73
    %s74 = sphi 0, %s71
    %s75 = sphi 0, %s74
    %s91 = sphi 0, %s75
    %s97 = sphi 0, %s99
    %s100 = sphi 0, %s97
    %s101 = sphi 0, %s100
    %s117 = sphi 0, %s101
  $region4: #{online_gcrn_forward.14} parent=0 // loop_header_branch
    %12 = sbr.rel (%p10) target = $region8
  $region5: #{online_gcrn_forward.14} parent=0 // loop_body
    %s14 = ssub.s32 %s9, 1
    %s15 = ssub.s32 %s9, 2
    %s16 = sadd.s32 %s9, 1
    %s17 = ssub.s32 %s9, %s16
    %p18 = scmp.eq.s32.totalorder %s17, 0
    %s20 = sadd.s32 %s19, 1
    %s21 = scalar_select %p18, %s19, %s20
    %p24 = pneg %p18
    %p25 = scmp.eq.s32.totalorder %s9, 1
    %p26 = por %p24, %p25
    %p27 = scmp.ne.s32.totalorder %s19, %s22
    %p28 = scmp.eq.s32.totalorder %s9, 0
    %p29 = por %p27, %p28
    %p30 = scmp.ne.s32.totalorder %s19, %s22
    %p31 = scmp.eq.s32.totalorder %s14, 1
    %p32 = por %p30, %p31
    %p33 = scmp.ne.s32.totalorder %s22, %s23
    %p34 = scmp.eq.s32.totalorder %s14, 0
    %p35 = por %p33, %p34
    %p36 = scmp.ne.s32.totalorder %s22, %s23
    %p37 = scmp.eq.s32.totalorder %s15, 1
    %p38 = por %p36, %p37
    %p40 = scmp.ne.s32.totalorder %s23, %s39
    %p41 = scmp.eq.s32.totalorder %s15, 0
    %p42 = por %p40, %p41
    %s43 = ssub.s32 %s9, %s16
    %p44 = scmp.eq.s32.totalorder %s43, 0
    %s46 = sadd.s32 %s45, 1
    %s47 = scalar_select %p44, %s45, %s46
    %p50 = pneg %p44
    %p51 = scmp.eq.s32.totalorder %s9, 1
    %p52 = por %p50, %p51
    %p53 = scmp.ne.s32.totalorder %s45, %s48
    %p54 = scmp.eq.s32.totalorder %s9, 0
    %p55 = por %p53, %p54
    %p56 = scmp.ne.s32.totalorder %s45, %s48
    %p57 = scmp.eq.s32.totalorder %s14, 1
    %p58 = por %p56, %p57
    %p59 = scmp.ne.s32.totalorder %s48, %s49
    %p60 = scmp.eq.s32.totalorder %s14, 0
    %p61 = por %p59, %p60
    %p62 = scmp.ne.s32.totalorder %s48, %s49
    %p63 = scmp.eq.s32.totalorder %s15, 1
    %p64 = por %p62, %p63
    %p66 = scmp.ne.s32.totalorder %s49, %s65
    %p67 = scmp.eq.s32.totalorder %s15, 0
    %p68 = por %p66, %p67
    %s69 = ssub.s32 %s9, %s16
    %p70 = scmp.eq.s32.totalorder %s69, 0
    %s72 = sadd.s32 %s71, 1
    %s73 = scalar_select %p70, %s71, %s72
    %p76 = pneg %p70
    %p77 = scmp.eq.s32.totalorder %s9, 1
    %p78 = por %p76, %p77
    %p79 = scmp.ne.s32.totalorder %s71, %s74
    %p80 = scmp.eq.s32.totalorder %s9, 0
    %p81 = por %p79, %p80
    %p82 = scmp.ne.s32.totalorder %s71, %s74
    %p83 = scmp.eq.s32.totalorder %s14, 1
    %p84 = por %p82, %p83
    %p85 = scmp.ne.s32.totalorder %s74, %s75
    %p86 = scmp.eq.s32.totalorder %s14, 0
    %p87 = por %p85, %p86
    %p88 = scmp.ne.s32.totalorder %s74, %s75
    %p89 = scmp.eq.s32.totalorder %s15, 1
    %p90 = por %p88, %p89
    %p92 = scmp.ne.s32.totalorder %s75, %s91
    %p93 = scmp.eq.s32.totalorder %s15, 0
    %p94 = por %p92, %p93
    %s95 = ssub.s32 %s9, %s16
    %p96 = scmp.eq.s32.totalorder %s95, 0
    %s98 = sadd.s32 %s97, 1
    %s99 = scalar_select %p96, %s97, %s98
    %p102 = pneg %p96
    %p103 = scmp.eq.s32.totalorder %s9, 1
    %p104 = por %p102, %p103
    %p105 = scmp.ne.s32.totalorder %s97, %s100
    %p106 = scmp.eq.s32.totalorder %s9, 0
    %p107 = por %p105, %p106
    %p108 = scmp.ne.s32.totalorder %s97, %s100
    %p109 = scmp.eq.s32.totalorder %s14, 1
    %p110 = por %p108, %p109
    %p111 = scmp.ne.s32.totalorder %s100, %s101
    %p112 = scmp.eq.s32.totalorder %s14, 0
    %p113 = por %p111, %p112
    %p114 = scmp.ne.s32.totalorder %s100, %s101
    %p115 = scmp.eq.s32.totalorder %s15, 1
    %p116 = por %p114, %p115
    %p118 = scmp.ne.s32.totalorder %s101, %s117
    %p119 = scmp.eq.s32.totalorder %s15, 0
    %p120 = por %p118, %p119
    %p121 = scmp.le.s32.totalorder 1, %s9
    %p122 = scmp.lt.s32.totalorder %s9, 3
    %p123 = pnand %p121, %p122
    %p124 = pneg %p123
    // Predicated region
    $region9: #{online_gcrn_forward.14} parent=5 // pred_check
      _
    $region10: #{online_gcrn_forward.14} parent=5 // pred_check_branch
      %126 = sbr.rel (%p123) target = $region12
    $region11: #{online_gcrn_forward.14} parent=5 // pred_region
      %s127 = ssub.s32 %s9, 1
    $region12: #{online_gcrn_forward.14} parent=5 // pred_fallthru
      _
    %p128 = scmp.lt.s32.totalorder %s9, 2
    // Predicated region
    $region13: #{online_gcrn_forward.14} parent=5 // pred_check
      %p129 = pneg %p128
    $region14: #{online_gcrn_forward.14} parent=5 // pred_check_branch
      %131 = sbr.rel (%p129) target = $region16
    $region15: #{online_gcrn_forward.14} parent=5 // pred_region
      // Predicated region
      $region17: #{online_gcrn_forward.14} parent=15 // pred_check
        %p132 = pneg %p29
      $region18: #{online_gcrn_forward.14} parent=15 // pred_check_branch
        %134 = sbr.rel (%p132) target = $region20
      $region19: #{online_gcrn_forward.14} parent=15 // pred_region
        %p135 = scmp.lt.s32.totalorder %s9, 1
        %s136 = scalar_select %p135, %s9, 1
        %s137 = smul.addr %s136, 64
        %s138 = smul.addr %s137, 4
        %s139 = scalar_lea.vmem %s0, %s138
      $region20: #{online_gcrn_forward.14} parent=15 // pred_fallthru
        _
      // Predicated region
      $region21: #{online_gcrn_forward.14} parent=15 // pred_check
        %p140 = pneg %p55
      $region22: #{online_gcrn_forward.14} parent=15 // pred_check_branch
        %142 = sbr.rel (%p140) target = $region24
      $region23: #{online_gcrn_forward.14} parent=15 // pred_region
        %p143 = scmp.lt.s32.totalorder %s9, 1
        %s144 = scalar_select %p143, %s9, 1
        %s145 = smul.addr %s144, 128
        %s146 = smul.addr %s145, 4
        %s147 = scalar_lea.vmem %s1, %s146
      $region24: #{online_gcrn_forward.14} parent=15 // pred_fallthru
        _
      // Predicated region
      $region25: #{online_gcrn_forward.14} parent=15 // pred_check
        %p148 = pneg %p81
      $region26: #{online_gcrn_forward.14} parent=15 // pred_check_branch
        %150 = sbr.rel (%p148) target = $region28
      $region27: #{online_gcrn_forward.14} parent=15 // pred_region
        %p151 = scmp.lt.s32.totalorder %s9, 1
        %s152 = scalar_select %p151, %s9, 1
        %s153 = smul.addr %s152, 32
        %s154 = smul.addr %s153, 8
        %s155 = scalar_lea.vmem %s2, %s154
      $region28: #{online_gcrn_forward.14} parent=15 // pred_fallthru
        _
    $region16: #{online_gcrn_forward.14} parent=5 // pred_fallthru
      _
    %p156 = scmp.le.s32.totalorder 1, %s9
    %p157 = scmp.lt.s32.totalorder %s9, 3
    %p158 = pnand %p156, %p157
    %p159 = pneg %p158
    // Predicated region
    $region29: #{online_gcrn_forward.14} parent=5 // pred_check
      _
    $region30: #{online_gcrn_forward.14} parent=5 // pred_check_branch
      %161 = sbr.rel (%p158) target = $region32
    $region31: #{online_gcrn_forward.14} parent=5 // pred_region
      %s162 = ssub.s32 %s9, 1
      %p163 = scmp.lt.s32.totalorder %s14, 1
      %s164 = scalar_select %p163, %s14, 1
      %s165 = smul.addr %s164, 64
      %s166 = smul.addr %s165, 4
      %s167 = scalar_lea.vmem %s0, %s166
      %p168 = pneg %p35
      %p169 = pneg %p32
      %p170 = scmp.lt.s32.totalorder %s14, 1
      %s171 = scalar_select %p170, %s14, 1
      %s172 = smul.addr %s171, 128
      %s173 = smul.addr %s172, 4
      %s174 = scalar_lea.vmem %s1, %s173
      %p175 = pneg %p61
      %p176 = pneg %p58
      %p177 = scmp.lt.s32.totalorder %s14, 1
      %s178 = scalar_select %p177, %s14, 1
      %s179 = smul.addr %s178, 32
      %s180 = smul.addr %s179, 8
      %s181 = scalar_lea.vmem %s2, %s180
      %p182 = pneg %p87
      %p183 = pneg %p84
      %p184 = pneg %p113
      %p185 = pneg %p110
      %p186 = scmp.lt.s32.totalorder %s14, 1
      %s187 = scalar_select %p186, %s14, 1
      %s188 = smul.addr %s187, 16
      %s189 = smul.addr %s188, 4
      %s190 = scalar_lea.vmem %s3, %s189
      %p191 = scmp.lt.s32.totalorder %s14, 1
      %s192 = scalar_select %p191, %s14, 1
      %s193 = smul.addr %s192, 64
      %s194 = smul.addr %s193, 4
      %s195 = scalar_lea.vmem %s0, %s194
      %p196 = scmp.lt.s32.totalorder %s14, 1
      %s197 = scalar_select %p196, %s14, 1
      %s198 = smul.addr %s197, 128
      %s199 = smul.addr %s198, 4
      %s200 = scalar_lea.vmem %s1, %s199
      %p201 = scmp.lt.s32.totalorder %s14, 1
      %s202 = scalar_select %p201, %s14, 1
      %s203 = smul.addr %s202, 32
      %s204 = smul.addr %s203, 8
      %s205 = scalar_lea.vmem %s2, %s204
      %p206 = scmp.lt.s32.totalorder %s14, 1
      %s207 = scalar_select %p206, %s14, 1
      %s208 = smul.addr %s207, 16
      %s209 = smul.addr %s208, 4
      %s210 = scalar_lea.vmem %s3, %s209
      %v212 = vld [vmem:[%s200] sm:$0xff]
      %v213 = vld [vmem:[%s200 + $0x8] sm:$0xff]
      %v214 = vld [vmem:[%s200 + $0x10] sm:$0xff]
      %v215 = vld [vmem:[%s200 + $0x18] sm:$0xff]
      %v216 = vld [vmem:[%s200 + $0x20] sm:$0xff]
      %v217 = vld [vmem:[%s200 + $0x28] sm:$0xff]
      %v218 = vld [vmem:[%s200 + $0x30] sm:$0xff]
      %v219 = vld [vmem:[%s200 + $0x38] sm:$0xff]
      %v220 = vld [vmem:[%s200 + $0x40] sm:$0xff]
      %v221 = vld [vmem:[%s200 + $0x48] sm:$0xff]
      %v222 = vld [vmem:[%s200 + $0x50] sm:$0xff]
      %v223 = vld [vmem:[%s200 + $0x58] sm:$0xff]
      %v224 = vld [vmem:[%s200 + $0x60] sm:$0xff]
      %v225 = vld [vmem:[%s200 + $0x68] sm:$0xff]
      %v226 = vld [vmem:[%s200 + $0x70] sm:$0xff]
      %v227 = vld [vmem:[%s200 + $0x78] sm:$0xff]
      %v228 = vld [vmem:[%s200 + $0x80] sm:$0xff]
      %v229 = vld [vmem:[%s200 + $0x88] sm:$0xff]
      %v230 = vld [vmem:[%s200 + $0x90] sm:$0xff]
      %v231 = vld [vmem:[%s200 + $0x98] sm:$0xff]
      %v232 = vld [vmem:[%s200 + $0xa0] sm:$0xff]
      %v233 = vld [vmem:[%s200 + $0xa8] sm:$0xff]
      %v234 = vld [vmem:[%s200 + $0xb0] sm:$0xff]
      %v235 = vld [vmem:[%s200 + $0xb8] sm:$0xff]
      %v236 = vld [vmem:[%s200 + $0xc0] sm:$0xff]
      %v237 = vld [vmem:[%s200 + $0xc8] sm:$0xff]
      %v238 = vld [vmem:[%s200 + $0xd0] sm:$0xff]
      %v239 = vld [vmem:[%s200 + $0xd8] sm:$0xff]
      %v240 = vld [vmem:[%s200 + $0xe0] sm:$0xff]
      %v241 = vld [vmem:[%s200 + $0xe8] sm:$0xff]
      %v242 = vld [vmem:[%s200 + $0xf0] sm:$0xff]
      %v243 = vld [vmem:[%s200 + $0xf8] sm:$0xff]
      %v244 = vld [vmem:[%s200 + $0x100] sm:$0xff]
      %v245 = vld [vmem:[%s200 + $0x108] sm:$0xff]
      %v246 = vld [vmem:[%s200 + $0x110] sm:$0xff]
      %v247 = vld [vmem:[%s200 + $0x118] sm:$0xff]
      %v248 = vld [vmem:[%s200 + $0x120] sm:$0xff]
      %v249 = vld [vmem:[%s200 + $0x128] sm:$0xff]
      %v250 = vld [vmem:[%s200 + $0x130] sm:$0xff]
      %v251 = vld [vmem:[%s200 + $0x138] sm:$0xff]
      %v252 = vld [vmem:[%s200 + $0x140] sm:$0xff]
      %v253 = vld [vmem:[%s200 + $0x148] sm:$0xff]
      %v254 = vld [vmem:[%s200 + $0x150] sm:$0xff]
      %v255 = vld [vmem:[%s200 + $0x158] sm:$0xff]
      %v256 = vld [vmem:[%s200 + $0x160] sm:$0xff]
      %v257 = vld [vmem:[%s200 + $0x168] sm:$0xff]
      %v258 = vld [vmem:[%s200 + $0x170] sm:$0xff]
      %v259 = vld [vmem:[%s200 + $0x178] sm:$0xff]
      %v260 = vld [vmem:[%s200 + $0x180] sm:$0xff]
      %v261 = vld [vmem:[%s200 + $0x188] sm:$0xff]
      %v262 = vld [vmem:[%s200 + $0x190] sm:$0xff]
      %v263 = vld [vmem:[%s200 + $0x198] sm:$0xff]
      %v264 = vld [vmem:[%s200 + $0x1a0] sm:$0xff]
      %v265 = vld [vmem:[%s200 + $0x1a8] sm:$0xff]
      %v266 = vld [vmem:[%s200 + $0x1b0] sm:$0xff]
      %v267 = vld [vmem:[%s200 + $0x1b8] sm:$0xff]
      %v268 = vld [vmem:[%s200 + $0x1c0] sm:$0xff]
      %v269 = vld [vmem:[%s200 + $0x1c8] sm:$0xff]
      %v270 = vld [vmem:[%s200 + $0x1d0] sm:$0xff]
      %v271 = vld [vmem:[%s200 + $0x1d8] sm:$0xff]
      %v272 = vld [vmem:[%s200 + $0x1e0] sm:$0xff]
      %v273 = vld [vmem:[%s200 + $0x1e8] sm:$0xff]
      %v274 = vld [vmem:[%s200 + $0x1f0] sm:$0xff]
      %v275 = vld [vmem:[%s200 + $0x1f8] sm:$0xff]
      %v276 = vld [vmem:[%s195] sm:$0xf]
      %v277 = vld [vmem:[%s195 + $0x4] sm:$0xf]
      %v278 = vld [vmem:[%s195 + $0x8] sm:$0xf]
      %v279 = vld [vmem:[%s195 + $0xc] sm:$0xf]
      %v280 = vld [vmem:[%s195 + $0x10] sm:$0xf]
      %v281 = vld [vmem:[%s195 + $0x14] sm:$0xf]
      %v282 = vld [vmem:[%s195 + $0x18] sm:$0xf]
      %v283 = vld [vmem:[%s195 + $0x1c] sm:$0xf]
      %v284 = vld [vmem:[%s195 + $0x20] sm:$0xf]
      %v285 = vld [vmem:[%s195 + $0x24] sm:$0xf]
      %v286 = vld [vmem:[%s195 + $0x28] sm:$0xf]
      %v287 = vld [vmem:[%s195 + $0x2c] sm:$0xf]
      %v288 = vld [vmem:[%s195 + $0x30] sm:$0xf]
      %v289 = vld [vmem:[%s195 + $0x34] sm:$0xf]
      %v290 = vld [vmem:[%s195 + $0x38] sm:$0xf]
      %v291 = vld [vmem:[%s195 + $0x3c] sm:$0xf]
      %v292 = vld [vmem:[%s195 + $0x40] sm:$0xf]
      %v293 = vld [vmem:[%s195 + $0x44] sm:$0xf]
      %v294 = vld [vmem:[%s195 + $0x48] sm:$0xf]
      %v295 = vld [vmem:[%s195 + $0x4c] sm:$0xf]
      %v296 = vld [vmem:[%s195 + $0x50] sm:$0xf]
      %v297 = vld [vmem:[%s195 + $0x54] sm:$0xf]
      %v298 = vld [vmem:[%s195 + $0x58] sm:$0xf]
      %v299 = vld [vmem:[%s195 + $0x5c] sm:$0xf]
      %v300 = vld [vmem:[%s195 + $0x60] sm:$0xf]
      %v301 = vld [vmem:[%s195 + $0x64] sm:$0xf]
      %v302 = vld [vmem:[%s195 + $0x68] sm:$0xf]
      %v303 = vld [vmem:[%s195 + $0x6c] sm:$0xf]
      %v304 = vld [vmem:[%s195 + $0x70] sm:$0xf]
      %v305 = vld [vmem:[%s195 + $0x74] sm:$0xf]
      %v306 = vld [vmem:[%s195 + $0x78] sm:$0xf]
      %v307 = vld [vmem:[%s195 + $0x7c] sm:$0xf]
      %v308 = vld [vmem:[%s195 + $0x80] sm:$0xf]
      %v309 = vld [vmem:[%s195 + $0x84] sm:$0xf]
      %v310 = vld [vmem:[%s195 + $0x88] sm:$0xf]
      %v311 = vld [vmem:[%s195 + $0x8c] sm:$0xf]
      %v312 = vld [vmem:[%s195 + $0x90] sm:$0xf]
      %v313 = vld [vmem:[%s195 + $0x94] sm:$0xf]
      %v314 = vld [vmem:[%s195 + $0x98] sm:$0xf]
      %v315 = vld [vmem:[%s195 + $0x9c] sm:$0xf]
      %v316 = vld [vmem:[%s195 + $0xa0] sm:$0xf]
      %v317 = vld [vmem:[%s195 + $0xa4] sm:$0xf]
      %v318 = vld [vmem:[%s195 + $0xa8] sm:$0xf]
      %v319 = vld [vmem:[%s195 + $0xac] sm:$0xf]
      %v320 = vld [vmem:[%s195 + $0xb0] sm:$0xf]
      %v321 = vld [vmem:[%s195 + $0xb4] sm:$0xf]
      %v322 = vld [vmem:[%s195 + $0xb8] sm:$0xf]
      %v323 = vld [vmem:[%s195 + $0xbc] sm:$0xf]
      %v324 = vld [vmem:[%s195 + $0xc0] sm:$0xf]
      %v325 = vld [vmem:[%s195 + $0xc4] sm:$0xf]
      %v326 = vld [vmem:[%s195 + $0xc8] sm:$0xf]
      %v327 = vld [vmem:[%s195 + $0xcc] sm:$0xf]
      %v328 = vld [vmem:[%s195 + $0xd0] sm:$0xf]
      %v329 = vld [vmem:[%s195 + $0xd4] sm:$0xf]
      %v330 = vld [vmem:[%s195 + $0xd8] sm:$0xf]
      %v331 = vld [vmem:[%s195 + $0xdc] sm:$0xf]
      %v332 = vld [vmem:[%s195 + $0xe0] sm:$0xf]
      %v333 = vld [vmem:[%s195 + $0xe4] sm:$0xf]
      %v334 = vld [vmem:[%s195 + $0xe8] sm:$0xf]
      %v335 = vld [vmem:[%s195 + $0xec] sm:$0xf]
      %v336 = vld [vmem:[%s195 + $0xf0] sm:$0xf]
      %v337 = vld [vmem:[%s195 + $0xf4] sm:$0xf]
      %v338 = vld [vmem:[%s195 + $0xf8] sm:$0xf]
      %v339 = vld [vmem:[%s195 + $0xfc] sm:$0xf]
      %v340 = vld [vmem:[%s205] sm:$0xff]
      %v341 = vld [vmem:[%s205 + $0x8] sm:$0xff]
      %v342 = vld [vmem:[%s205 + $0x10] sm:$0xff]
      %v343 = vld [vmem:[%s205 + $0x18] sm:$0xff]
      %v344 = vld [vmem:[%s205 + $0x20] sm:$0xff]
      %v345 = vld [vmem:[%s205 + $0x28] sm:$0xff]
      %v346 = vld [vmem:[%s205 + $0x30] sm:$0xff]
      %v347 = vld [vmem:[%s205 + $0x38] sm:$0xff]
      %v348 = vld [vmem:[%s205 + $0x40] sm:$0xff]
      %v349 = vld [vmem:[%s205 + $0x48] sm:$0xff]
      %v350 = vld [vmem:[%s205 + $0x50] sm:$0xff]
      %v351 = vld [vmem:[%s205 + $0x58] sm:$0xff]
      %v352 = vld [vmem:[%s205 + $0x60] sm:$0xff]
      %v353 = vld [vmem:[%s205 + $0x68] sm:$0xff]
      %v354 = vld [vmem:[%s205 + $0x70] sm:$0xff]
      %v355 = vld [vmem:[%s205 + $0x78] sm:$0xff]
      %v356 = vld [vmem:[%s205 + $0x80] sm:$0xff]
      %v357 = vld [vmem:[%s205 + $0x88] sm:$0xff]
      %v358 = vld [vmem:[%s205 + $0x90] sm:$0xff]
      %v359 = vld [vmem:[%s205 + $0x98] sm:$0xff]
      %v360 = vld [vmem:[%s205 + $0xa0] sm:$0xff]
      %v361 = vld [vmem:[%s205 + $0xa8] sm:$0xff]
      %v362 = vld [vmem:[%s205 + $0xb0] sm:$0xff]
      %v363 = vld [vmem:[%s205 + $0xb8] sm:$0xff]
      %v364 = vld [vmem:[%s205 + $0xc0] sm:$0xff]
      %v365 = vld [vmem:[%s205 + $0xc8] sm:$0xff]
      %v366 = vld [vmem:[%s205 + $0xd0] sm:$0xff]
      %v367 = vld [vmem:[%s205 + $0xd8] sm:$0xff]
      %v368 = vld [vmem:[%s205 + $0xe0] sm:$0xff]
      %v369 = vld [vmem:[%s205 + $0xe8] sm:$0xff]
      %v370 = vld [vmem:[%s205 + $0xf0] sm:$0xff]
      %v371 = vld [vmem:[%s205 + $0xf8] sm:$0xff]
      %373 = vset.pattern.permute.xlu0 0
      %374 = vperm.xlu0 %373, %v340
      %v375 = vpop.permute.xlu0 %374
      %378 = vset.pattern.permute.xlu0 0
      %379 = vperm.xlu0 %378, %v341
      %v380 = vpop.permute.xlu0 %379
      %383 = vset.pattern.permute.xlu0 0
      %384 = vperm.xlu0 %383, %v342
      %v385 = vpop.permute.xlu0 %384
      %388 = vset.pattern.permute.xlu0 0
      %389 = vperm.xlu0 %388, %v343
      %v390 = vpop.permute.xlu0 %389
      %393 = vset.pattern.permute.xlu0 0
      %394 = vperm.xlu0 %393, %v344
      %v395 = vpop.permute.xlu0 %394
      %398 = vset.pattern.permute.xlu0 0
      %399 = vperm.xlu0 %398, %v345
      %v400 = vpop.permute.xlu0 %399
      %403 = vset.pattern.permute.xlu0 0
      %404 = vperm.xlu0 %403, %v346
      %v405 = vpop.permute.xlu0 %404
      %408 = vset.pattern.permute.xlu0 0
      %409 = vperm.xlu0 %408, %v347
      %v410 = vpop.permute.xlu0 %409
      %413 = vset.pattern.permute.xlu0 0
      %414 = vperm.xlu0 %413, %v348
      %v415 = vpop.permute.xlu0 %414
      %418 = vset.pattern.permute.xlu0 0
      %419 = vperm.xlu0 %418, %v349
      %v420 = vpop.permute.xlu0 %419
      %423 = vset.pattern.permute.xlu0 0
      %424 = vperm.xlu0 %423, %v350
      %v425 = vpop.permute.xlu0 %424
      %428 = vset.pattern.permute.xlu0 0
      %429 = vperm.xlu0 %428, %v351
      %v430 = vpop.permute.xlu0 %429
      %433 = vset.pattern.permute.xlu0 0
      %434 = vperm.xlu0 %433, %v352
      %v435 = vpop.permute.xlu0 %434
      %438 = vset.pattern.permute.xlu0 0
      %439 = vperm.xlu0 %438, %v353
      %v440 = vpop.permute.xlu0 %439
      %443 = vset.pattern.permute.xlu0 0
      %444 = vperm.xlu0 %443, %v354
      %v445 = vpop.permute.xlu0 %444
      %448 = vset.pattern.permute.xlu0 0
      %449 = vperm.xlu0 %448, %v355
      %v450 = vpop.permute.xlu0 %449
      %453 = vset.pattern.permute.xlu0 0
      %454 = vperm.xlu0 %453, %v356
      %v455 = vpop.permute.xlu0 %454
      %458 = vset.pattern.permute.xlu0 0
      %459 = vperm.xlu0 %458, %v357
      %v460 = vpop.permute.xlu0 %459
      %463 = vset.pattern.permute.xlu0 0
      %464 = vperm.xlu0 %463, %v358
      %v465 = vpop.permute.xlu0 %464
      %468 = vset.pattern.permute.xlu0 0
      %469 = vperm.xlu0 %468, %v359
      %v470 = vpop.permute.xlu0 %469
      %473 = vset.pattern.permute.xlu0 0
      %474 = vperm.xlu0 %473, %v360
      %v475 = vpop.permute.xlu0 %474
      %478 = vset.pattern.permute.xlu0 0
      %479 = vperm.xlu0 %478, %v361
      %v480 = vpop.permute.xlu0 %479
      %483 = vset.pattern.permute.xlu0 0
      %484 = vperm.xlu0 %483, %v362
      %v485 = vpop.permute.xlu0 %484
      %488 = vset.pattern.permute.xlu0 0
      %489 = vperm.xlu0 %488, %v363
      %v490 = vpop.permute.xlu0 %489
      %493 = vset.pattern.permute.xlu0 0
      %494 = vperm.xlu0 %493, %v364
      %v495 = vpop.permute.xlu0 %494
      %498 = vset.pattern.permute.xlu0 0
      %499 = vperm.xlu0 %498, %v365
      %v500 = vpop.permute.xlu0 %499
      %503 = vset.pattern.permute.xlu0 0
      %504 = vperm.xlu0 %503, %v366
      %v505 = vpop.permute.xlu0 %504
      %508 = vset.pattern.permute.xlu0 0
      %509 = vperm.xlu0 %508, %v367
      %v510 = vpop.permute.xlu0 %509
      %513 = vset.pattern.permute.xlu0 0
      %514 = vperm.xlu0 %513, %v368
      %v515 = vpop.permute.xlu0 %514
      %518 = vset.pattern.permute.xlu0 0
      %519 = vperm.xlu0 %518, %v369
      %v520 = vpop.permute.xlu0 %519
      %523 = vset.pattern.permute.xlu0 0
      %524 = vperm.xlu0 %523, %v370
      %v525 = vpop.permute.xlu0 %524
      %528 = vset.pattern.permute.xlu0 0
      %529 = vperm.xlu0 %528, %v371
      %v530 = vpop.permute.xlu0 %529
      %v596 = vunpack.c.l.b16 %v212
      %v597 = vunpack.c.h.b16 %v212
      %v598 = vunpack.c.l.b16 %v213
      %v599 = vunpack.c.h.b16 %v213
      %v600 = vunpack.c.l.b16 %v214
      %v601 = vunpack.c.h.b16 %v214
      %v602 = vunpack.c.l.b16 %v215
      %v603 = vunpack.c.h.b16 %v215
      %v604 = vunpack.c.l.b16 %v216
      %v605 = vunpack.c.h.b16 %v216
      %v606 = vunpack.c.l.b16 %v217
      %v607 = vunpack.c.h.b16 %v217
      %v608 = vunpack.c.l.b16 %v218
      %v609 = vunpack.c.h.b16 %v218
      %v610 = vunpack.c.l.b16 %v219
      %v611 = vunpack.c.h.b16 %v219
      %v612 = vunpack.c.l.b16 %v220
      %v613 = vunpack.c.h.b16 %v220
      %v614 = vunpack.c.l.b16 %v221
      %v615 = vunpack.c.h.b16 %v221
      %v616 = vunpack.c.l.b16 %v222
      %v617 = vunpack.c.h.b16 %v222
      %v618 = vunpack.c.l.b16 %v223
      %v619 = vunpack.c.h.b16 %v223
      %v620 = vunpack.c.l.b16 %v224
      %v621 = vunpack.c.h.b16 %v224
      %v622 = vunpack.c.l.b16 %v225
      %v623 = vunpack.c.h.b16 %v225
      %v624 = vunpack.c.l.b16 %v226
      %v625 = vunpack.c.h.b16 %v226
      %v626 = vunpack.c.l.b16 %v227
      %v627 = vunpack.c.h.b16 %v227
      %v628 = vunpack.c.l.b16 %v228
      %v629 = vunpack.c.h.b16 %v228
      %v630 = vunpack.c.l.b16 %v229
      %v631 = vunpack.c.h.b16 %v229
      %v632 = vunpack.c.l.b16 %v230
      %v633 = vunpack.c.h.b16 %v230
      %v634 = vunpack.c.l.b16 %v231
      %v635 = vunpack.c.h.b16 %v231
      %v636 = vunpack.c.l.b16 %v232
      %v637 = vunpack.c.h.b16 %v232
      %v638 = vunpack.c.l.b16 %v233
      %v639 = vunpack.c.h.b16 %v233
      %v640 = vunpack.c.l.b16 %v234
      %v641 = vunpack.c.h.b16 %v234
      %v642 = vunpack.c.l.b16 %v235
      %v643 = vunpack.c.h.b16 %v235
      %v644 = vunpack.c.l.b16 %v236
      %v645 = vunpack.c.h.b16 %v236
      %v646 = vunpack.c.l.b16 %v237
      %v647 = vunpack.c.h.b16 %v237
      %v648 = vunpack.c.l.b16 %v238
      %v649 = vunpack.c.h.b16 %v238
      %v650 = vunpack.c.l.b16 %v239
      %v651 = vunpack.c.h.b16 %v239
      %v652 = vunpack.c.l.b16 %v240
      %v653 = vunpack.c.h.b16 %v240
      %v654 = vunpack.c.l.b16 %v241
      %v655 = vunpack.c.h.b16 %v241
      %v656 = vunpack.c.l.b16 %v242
      %v657 = vunpack.c.h.b16 %v242
      %v658 = vunpack.c.l.b16 %v243
      %v659 = vunpack.c.h.b16 %v243
      %v660 = vunpack.c.l.b16 %v244
      %v661 = vunpack.c.h.b16 %v244
      %v662 = vunpack.c.l.b16 %v245
      %v663 = vunpack.c.h.b16 %v245
      %v664 = vunpack.c.l.b16 %v246
      %v665 = vunpack.c.h.b16 %v246
      %v666 = vunpack.c.l.b16 %v247
      %v667 = vunpack.c.h.b16 %v247
      %v668 = vunpack.c.l.b16 %v248
      %v669 = vunpack.c.h.b16 %v248
      %v670 = vunpack.c.l.b16 %v249
      %v671 = vunpack.c.h.b16 %v249
      %v672 = vunpack.c.l.b16 %v250
      %v673 = vunpack.c.h.b16 %v250
      %v674 = vunpack.c.l.b16 %v251
      %v675 = vunpack.c.h.b16 %v251
      %v676 = vunpack.c.l.b16 %v252
      %v677 = vunpack.c.h.b16 %v252
      %v678 = vunpack.c.l.b16 %v253
      %v679 = vunpack.c.h.b16 %v253
      %v680 = vunpack.c.l.b16 %v254
      %v681 = vunpack.c.h.b16 %v254
      %v682 = vunpack.c.l.b16 %v255
      %v683 = vunpack.c.h.b16 %v255
      %v684 = vunpack.c.l.b16 %v256
      %v685 = vunpack.c.h.b16 %v256
      %v686 = vunpack.c.l.b16 %v257
      %v687 = vunpack.c.h.b16 %v257
      %v688 = vunpack.c.l.b16 %v258
      %v689 = vunpack.c.h.b16 %v258
      %v690 = vunpack.c.l.b16 %v259
      %v691 = vunpack.c.h.b16 %v259
      %v692 = vunpack.c.l.b16 %v260
      %v693 = vunpack.c.h.b16 %v260
      %v694 = vunpack.c.l.b16 %v261
      %v695 = vunpack.c.h.b16 %v261
      %v696 = vunpack.c.l.b16 %v262
      %v697 = vunpack.c.h.b16 %v262
      %v698 = vunpack.c.l.b16 %v263
      %v699 = vunpack.c.h.b16 %v263
      %v700 = vunpack.c.l.b16 %v264
      %v701 = vunpack.c.h.b16 %v264
      %v702 = vunpack.c.l.b16 %v265
      %v703 = vunpack.c.h.b16 %v265
      %v704 = vunpack.c.l.b16 %v266
      %v705 = vunpack.c.h.b16 %v266
      %v706 = vunpack.c.l.b16 %v267
      %v707 = vunpack.c.h.b16 %v267
      %v708 = vunpack.c.l.b16 %v268
      %v709 = vunpack.c.h.b16 %v268
      %v710 = vunpack.c.l.b16 %v269
      %v711 = vunpack.c.h.b16 %v269
      %v712 = vunpack.c.l.b16 %v270
      %v713 = vunpack.c.h.b16 %v270
      %v714 = vunpack.c.l.b16 %v271
      %v715 = vunpack.c.h.b16 %v271
      %v716 = vunpack.c.l.b16 %v272
      %v717 = vunpack.c.h.b16 %v272
      %v718 = vunpack.c.l.b16 %v273
      %v719 = vunpack.c.h.b16 %v273
      %v720 = vunpack.c.l.b16 %v274
      %v721 = vunpack.c.h.b16 %v274
      %v722 = vunpack.c.l.b16 %v275
      %v723 = vunpack.c.h.b16 %v275
      %v724 = vpack.c.b16 %v600, %v596
      %v725 = vpack.c.b16 %v601, %v597
      %v726 = vpack.c.b16 %v602, %v598
      %v727 = vpack.c.b16 %v603, %v599
      %v728 = vpack.c.b16 %v608, %v604
      %v729 = vpack.c.b16 %v609, %v605
      %v730 = vpack.c.b16 %v610, %v606
      %v731 = vpack.c.b16 %v611, %v607
      %v732 = vpack.c.b16 %v616, %v612
      %v733 = vpack.c.b16 %v617, %v613
      %v734 = vpack.c.b16 %v618, %v614
      %v735 = vpack.c.b16 %v619, %v615
      %v736 = vpack.c.b16 %v624, %v620
      %v737 = vpack.c.b16 %v625, %v621
      %v738 = vpack.c.b16 %v626, %v622
      %v739 = vpack.c.b16 %v627, %v623
      %v740 = vpack.c.b16 %v632, %v628
      %v741 = vpack.c.b16 %v633, %v629
      %v742 = vpack.c.b16 %v634, %v630
      %v743 = vpack.c.b16 %v635, %v631
      %v744 = vpack.c.b16 %v640, %v636
      %v745 = vpack.c.b16 %v641, %v637
      %v746 = vpack.c.b16 %v642, %v638
      %v747 = vpack.c.b16 %v643, %v639
      %v748 = vpack.c.b16 %v648, %v644
      %v749 = vpack.c.b16 %v649, %v645
      %v750 = vpack.c.b16 %v650, %v646
      %v751 = vpack.c.b16 %v651, %v647
      %v752 = vpack.c.b16 %v656, %v652
      %v753 = vpack.c.b16 %v657, %v653
      %v754 = vpack.c.b16 %v658, %v654
      %v755 = vpack.c.b16 %v659, %v655
      %v756 = vpack.c.b16 %v664, %v660
      %v757 = vpack.c.b16 %v665, %v661
      %v758 = vpack.c.b16 %v666, %v662
      %v759 = vpack.c.b16 %v667, %v663
      %v760 = vpack.c.b16 %v672, %v668
      %v761 = vpack.c.b16 %v673, %v669
      %v762 = vpack.c.b16 %v674, %v670
      %v763 = vpack.c.b16 %v675, %v671
      %v764 = vpack.c.b16 %v680, %v676
      %v765 = vpack.c.b16 %v681, %v677
      %v766 = vpack.c.b16 %v682, %v678
      %v767 = vpack.c.b16 %v683, %v679
      %v768 = vpack.c.b16 %v688, %v684
      %v769 = vpack.c.b16 %v689, %v685
      %v770 = vpack.c.b16 %v690, %v686
      %v771 = vpack.c.b16 %v691, %v687
      %v772 = vpack.c.b16 %v696, %v692
      %v773 = vpack.c.b16 %v697, %v693
      %v774 = vpack.c.b16 %v698, %v694
      %v775 = vpack.c.b16 %v699, %v695
      %v776 = vpack.c.b16 %v704, %v700
      %v777 = vpack.c.b16 %v705, %v701
      %v778 = vpack.c.b16 %v706, %v702
      %v779 = vpack.c.b16 %v707, %v703
      %v780 = vpack.c.b16 %v712, %v708
      %v781 = vpack.c.b16 %v713, %v709
      %v782 = vpack.c.b16 %v714, %v710
      %v783 = vpack.c.b16 %v715, %v711
      %v784 = vpack.c.b16 %v720, %v716
      %v785 = vpack.c.b16 %v721, %v717
      %v786 = vpack.c.b16 %v722, %v718
      %v787 = vpack.c.b16 %v723, %v719
      %v916 = vunpack.c.l.b16 %v276
      %v917 = vunpack.c.l.b16 %v277
      %v918 = vunpack.c.l.b16 %v278
      %v919 = vunpack.c.l.b16 %v279
      %v920 = vunpack.c.l.b16 %v280
      %v921 = vunpack.c.l.b16 %v281
      %v922 = vunpack.c.l.b16 %v282
      %v923 = vunpack.c.l.b16 %v283
      %v924 = vunpack.c.l.b16 %v284
      %v925 = vunpack.c.l.b16 %v285
      %v926 = vunpack.c.l.b16 %v286
      %v927 = vunpack.c.l.b16 %v287
      %v928 = vunpack.c.l.b16 %v288
      %v929 = vunpack.c.l.b16 %v289
      %v930 = vunpack.c.l.b16 %v290
      %v931 = vunpack.c.l.b16 %v291
      %v932 = vunpack.c.l.b16 %v292
      %v933 = vunpack.c.l.b16 %v293
      %v934 = vunpack.c.l.b16 %v294
      %v935 = vunpack.c.l.b16 %v295
      %v936 = vunpack.c.l.b16 %v296
      %v937 = vunpack.c.l.b16 %v297
      %v938 = vunpack.c.l.b16 %v298
      %v939 = vunpack.c.l.b16 %v299
      %v940 = vunpack.c.l.b16 %v300
      %v941 = vunpack.c.l.b16 %v301
      %v942 = vunpack.c.l.b16 %v302
      %v943 = vunpack.c.l.b16 %v303
      %v944 = vunpack.c.l.b16 %v304
      %v945 = vunpack.c.l.b16 %v305
      %v946 = vunpack.c.l.b16 %v306
      %v947 = vunpack.c.l.b16 %v307
      %v948 = vunpack.c.l.b16 %v308
      %v949 = vunpack.c.l.b16 %v309
      %v950 = vunpack.c.l.b16 %v310
      %v951 = vunpack.c.l.b16 %v311
      %v952 = vunpack.c.l.b16 %v312
      %v953 = vunpack.c.l.b16 %v313
      %v954 = vunpack.c.l.b16 %v314
      %v955 = vunpack.c.l.b16 %v315
      %v956 = vunpack.c.l.b16 %v316
      %v957 = vunpack.c.l.b16 %v317
      %v958 = vunpack.c.l.b16 %v318
      %v959 = vunpack.c.l.b16 %v319
      %v960 = vunpack.c.l.b16 %v320
      %v961 = vunpack.c.l.b16 %v321
      %v962 = vunpack.c.l.b16 %v322
      %v963 = vunpack.c.l.b16 %v323
      %v964 = vunpack.c.l.b16 %v324
      %v965 = vunpack.c.l.b16 %v325
      %v966 = vunpack.c.l.b16 %v326
      %v967 = vunpack.c.l.b16 %v327
      %v968 = vunpack.c.l.b16 %v328
      %v969 = vunpack.c.l.b16 %v329
      %v970 = vunpack.c.l.b16 %v330
      %v971 = vunpack.c.l.b16 %v331
      %v972 = vunpack.c.l.b16 %v332
      %v973 = vunpack.c.l.b16 %v333
      %v974 = vunpack.c.l.b16 %v334
      %v975 = vunpack.c.l.b16 %v335
      %v976 = vunpack.c.l.b16 %v336
      %v977 = vunpack.c.l.b16 %v337
      %v978 = vunpack.c.l.b16 %v338
      %v979 = vunpack.c.l.b16 %v339
      %v980 = vpack.c.b16 %v917, %v916
      %v981 = vpack.c.b16 %v919, %v918
      %v982 = vpack.c.b16 %v921, %v920
      %v983 = vpack.c.b16 %v923, %v922
      %v984 = vpack.c.b16 %v925, %v924
      %v985 = vpack.c.b16 %v927, %v926
      %v986 = vpack.c.b16 %v929, %v928
      %v987 = vpack.c.b16 %v931, %v930
      %v988 = vpack.c.b16 %v933, %v932
      %v989 = vpack.c.b16 %v935, %v934
      %v990 = vpack.c.b16 %v937, %v936
      %v991 = vpack.c.b16 %v939, %v938
      %v992 = vpack.c.b16 %v941, %v940
      %v993 = vpack.c.b16 %v943, %v942
      %v994 = vpack.c.b16 %v945, %v944
      %v995 = vpack.c.b16 %v947, %v946
      %v996 = vpack.c.b16 %v949, %v948
      %v997 = vpack.c.b16 %v951, %v950
      %v998 = vpack.c.b16 %v953, %v952
      %v999 = vpack.c.b16 %v955, %v954
      %v1000 = vpack.c.b16 %v957, %v956
      %v1001 = vpack.c.b16 %v959, %v958
      %v1002 = vpack.c.b16 %v961, %v960
      %v1003 = vpack.c.b16 %v963, %v962
      %v1004 = vpack.c.b16 %v965, %v964
      %v1005 = vpack.c.b16 %v967, %v966
      %v1006 = vpack.c.b16 %v969, %v968
      %v1007 = vpack.c.b16 %v971, %v970
      %v1008 = vpack.c.b16 %v973, %v972
      %v1009 = vpack.c.b16 %v975, %v974
      %v1010 = vpack.c.b16 %v977, %v976
      %v1011 = vpack.c.b16 %v979, %v978
      %1044 = vmatprep.subr.bf16.mxu0 0
      %1045 = vmatpush1.bf16.msra.mxu0 %v987
      %1046 = vmatprep.subr.bf16.mxu0 0
      %1047 = vmatpush1.bf16.msra.mxu0 %v986
      %1048 = vmatprep.subr.bf16.mxu0 0
      %1049 = vmatpush1.bf16.msra.mxu0 %v985
      %1050 = vmatprep.subr.bf16.mxu0 0
      %1051 = vmatpush1.bf16.msra.mxu0 %v984
      %1052 = vmatprep.subr.bf16.mxu0 0
      %1053 = vmatpush1.bf16.msra.mxu0 %v983
      %1054 = vmatprep.subr.bf16.mxu0 0
      %1055 = vmatpush1.bf16.msra.mxu0 %v982
      %1056 = vmatprep.subr.bf16.mxu0 0
      %1057 = vmatpush1.bf16.msra.mxu0 %v981
      %1058 = vmatprep.subr.bf16.mxu0 0
      %1059 = vmatpush1.bf16.msra.mxu0 %v980
      %1060 = vmatprep.subr.bf16.mxu0 0
      %1061 = vmatpush2.bf16.msra.mxu0 %v995
      %1062 = vmatprep.subr.bf16.mxu0 0
      %1063 = vmatpush2.bf16.msra.mxu0 %v994
      %1064 = vmatprep.subr.bf16.mxu0 0
      %1065 = vmatpush2.bf16.msra.mxu0 %v993
      %1066 = vmatprep.subr.bf16.mxu0 0
      %1067 = vmatpush2.bf16.msra.mxu0 %v992
      %1068 = vmatprep.subr.bf16.mxu0 0
      %1069 = vmatpush2.bf16.msra.mxu0 %v991
      %1070 = vmatprep.subr.bf16.mxu0 0
      %1071 = vmatpush2.bf16.msra.mxu0 %v990
      %1072 = vmatprep.subr.bf16.mxu0 0
      %1073 = vmatpush2.bf16.msra.mxu0 %v989
      %1074 = vmatprep.subr.bf16.mxu0 0
      %1075 = vmatpush2.bf16.msra.mxu0 %v988
      %1076 = vmatprep.mubr.bf16.mxu0 %v725
      %1077 = vmatmul.mubr.bf16.gmra.mxu0 %v724
      %v1078 = vpop.f32.mrf.mxu0
      %v1079 = vadd.f32 %v375, %v1078
      %v1080 = vpop.f32.mrf.mxu0
      %v1081 = vpop.f32.mrf.mxu0
      %v1082 = vadd.f32 %v380, %v1081
      %v1083 = vpop.f32.mrf.mxu0
      %1084 = vmatprep.mubr.bf16.mxu0 %v729
      %1085 = vmatmul.mubr.bf16.gmra.mxu0 %v728
      %v1086 = vpop.f32.mrf.mxu0
      %v1087 = vadd.f32 %v385, %v1086
      %v1088 = vpop.f32.mrf.mxu0
      %v1089 = vpop.f32.mrf.mxu0
      %v1090 = vadd.f32 %v390, %v1089
      %v1091 = vpop.f32.mrf.mxu0
      %1092 = vmatprep.mubr.bf16.mxu0 %v733
      %1093 = vmatmul.mubr.bf16.gmra.mxu0 %v732
      %v1094 = vpop.f32.mrf.mxu0
      %v1095 = vadd.f32 %v395, %v1094
      %v1096 = vpop.f32.mrf.mxu0
      %v1097 = vpop.f32.mrf.mxu0
      %v1098 = vadd.f32 %v400, %v1097
      %v1099 = vpop.f32.mrf.mxu0
      %1100 = vmatprep.mubr.bf16.mxu0 %v737
      %1101 = vmatmul.mubr.bf16.gmra.mxu0 %v736
      %v1102 = vpop.f32.mrf.mxu0
      %v1103 = vadd.f32 %v405, %v1102
      %v1104 = vpop.f32.mrf.mxu0
      %v1105 = vpop.f32.mrf.mxu0
      %v1106 = vadd.f32 %v410, %v1105
      %v1107 = vpop.f32.mrf.mxu0
      %1108 = vmatprep.mubr.bf16.mxu0 %v741
      %1109 = vmatmul.mubr.bf16.gmra.mxu0 %v740
      %v1110 = vpop.f32.mrf.mxu0
      %v1111 = vadd.f32 %v415, %v1110
      %v1112 = vpop.f32.mrf.mxu0
      %v1113 = vpop.f32.mrf.mxu0
      %v1114 = vadd.f32 %v420, %v1113
      %v1115 = vpop.f32.mrf.mxu0
      %1116 = vmatprep.mubr.bf16.mxu0 %v745
      %1117 = vmatmul.mubr.bf16.gmra.mxu0 %v744
      %v1118 = vpop.f32.mrf.mxu0
      %v1119 = vadd.f32 %v425, %v1118
      %v1120 = vpop.f32.mrf.mxu0
      %v1121 = vpop.f32.mrf.mxu0
      %v1122 = vadd.f32 %v430, %v1121
      %v1123 = vpop.f32.mrf.mxu0
      %1124 = vmatprep.mubr.bf16.mxu0 %v749
      %1125 = vmatmul.mubr.bf16.gmra.mxu0 %v748
      %v1126 = vpop.f32.mrf.mxu0
      %v1127 = vadd.f32 %v435, %v1126
      %v1128 = vpop.f32.mrf.mxu0
      %v1129 = vpop.f32.mrf.mxu0
      %v1130 = vadd.f32 %v440, %v1129
      %v1131 = vpop.f32.mrf.mxu0
      %1132 = vmatprep.mubr.bf16.mxu0 %v753
      %1133 = vmatmul.mubr.bf16.gmra.mxu0 %v752
      %v1134 = vpop.f32.mrf.mxu0
      %v1135 = vadd.f32 %v445, %v1134
      %v1136 = vpop.f32.mrf.mxu0
      %v1137 = vpop.f32.mrf.mxu0
      %v1138 = vadd.f32 %v450, %v1137
      %v1139 = vpop.f32.mrf.mxu0
      %1140 = vmatprep.mubr.bf16.mxu0 %v757
      %1141 = vmatmul.mubr.bf16.gmra.mxu0 %v756
      %v1142 = vpop.f32.mrf.mxu0
      %v1143 = vadd.f32 %v455, %v1142
      %v1144 = vpop.f32.mrf.mxu0
      %v1145 = vpop.f32.mrf.mxu0
      %v1146 = vadd.f32 %v460, %v1145
      %v1147 = vpop.f32.mrf.mxu0
      %1148 = vmatprep.mubr.bf16.mxu0 %v761
      %1149 = vmatmul.mubr.bf16.gmra.mxu0 %v760
      %v1150 = vpop.f32.mrf.mxu0
      %v1151 = vadd.f32 %v465, %v1150
      %v1152 = vpop.f32.mrf.mxu0
      %v1153 = vpop.f32.mrf.mxu0
      %v1154 = vadd.f32 %v470, %v1153
      %v1155 = vpop.f32.mrf.mxu0
      %1156 = vmatprep.mubr.bf16.mxu0 %v765
      %1157 = vmatmul.mubr.bf16.gmra.mxu0 %v764
      %v1158 = vpop.f32.mrf.mxu0
      %v1159 = vadd.f32 %v475, %v1158
      %v1160 = vpop.f32.mrf.mxu0
      %v1161 = vpop.f32.mrf.mxu0
      %v1162 = vadd.f32 %v480, %v1161
      %v1163 = vpop.f32.mrf.mxu0
      %1164 = vmatprep.mubr.bf16.mxu0 %v769
      %1165 = vmatmul.mubr.bf16.gmra.mxu0 %v768
      %v1166 = vpop.f32.mrf.mxu0
      %v1167 = vadd.f32 %v485, %v1166
      %v1168 = vpop.f32.mrf.mxu0
      %v1169 = vpop.f32.mrf.mxu0
      %v1170 = vadd.f32 %v490, %v1169
      %v1171 = vpop.f32.mrf.mxu0
      %1172 = vmatprep.mubr.bf16.mxu0 %v773
      %1173 = vmatmul.mubr.bf16.gmra.mxu0 %v772
      %v1174 = vpop.f32.mrf.mxu0
      %v1175 = vadd.f32 %v495, %v1174
      %v1176 = vpop.f32.mrf.mxu0
      %v1177 = vpop.f32.mrf.mxu0
      %v1178 = vadd.f32 %v500, %v1177
      %v1179 = vpop.f32.mrf.mxu0
      %1180 = vmatprep.mubr.bf16.mxu0 %v777
      %1181 = vmatmul.mubr.bf16.gmra.mxu0 %v776
      %v1182 = vpop.f32.mrf.mxu0
      %v1183 = vadd.f32 %v505, %v1182
      %v1184 = vpop.f32.mrf.mxu0
      %v1185 = vpop.f32.mrf.mxu0
      %v1186 = vadd.f32 %v510, %v1185
      %v1187 = vpop.f32.mrf.mxu0
      %1188 = vmatprep.mubr.bf16.mxu0 %v781
      %1189 = vmatmul.mubr.bf16.gmra.mxu0 %v780
      %v1190 = vpop.f32.mrf.mxu0
      %v1191 = vadd.f32 %v515, %v1190
      %v1192 = vpop.f32.mrf.mxu0
      %v1193 = vpop.f32.mrf.mxu0
      %v1194 = vadd.f32 %v520, %v1193
      %v1195 = vpop.f32.mrf.mxu0
      %1196 = vmatprep.mubr.bf16.mxu0 %v785
      %1197 = vmatmul.mubr.bf16.gmra.mxu0 %v784
      %v1198 = vpop.f32.mrf.mxu0
      %v1199 = vadd.f32 %v525, %v1198
      %v1200 = vpop.f32.mrf.mxu0
      %v1201 = vpop.f32.mrf.mxu0
      %v1202 = vadd.f32 %v530, %v1201
      %v1203 = vpop.f32.mrf.mxu0
      %1204 = vdwg.mxu0
      %1205 = vmatprep.subr.bf16.mxu0 0
      %1206 = vmatpush1.bf16.msra.mxu0 %v1003
      %1207 = vmatprep.subr.bf16.mxu0 0
      %1208 = vmatpush1.bf16.msra.mxu0 %v1002
      %1209 = vmatprep.subr.bf16.mxu0 0
      %1210 = vmatpush1.bf16.msra.mxu0 %v1001
      %1211 = vmatprep.subr.bf16.mxu0 0
      %1212 = vmatpush1.bf16.msra.mxu0 %v1000
      %1213 = vmatprep.subr.bf16.mxu0 0
      %1214 = vmatpush1.bf16.msra.mxu0 %v999
      %1215 = vmatprep.subr.bf16.mxu0 0
      %1216 = vmatpush1.bf16.msra.mxu0 %v998
      %1217 = vmatprep.subr.bf16.mxu0 0
      %1218 = vmatpush1.bf16.msra.mxu0 %v997
      %1219 = vmatprep.subr.bf16.mxu0 0
      %1220 = vmatpush1.bf16.msra.mxu0 %v996
      %1221 = vmatprep.subr.bf16.mxu0 0
      %1222 = vmatpush2.bf16.msra.mxu0 %v1011
      %1223 = vmatprep.subr.bf16.mxu0 0
      %1224 = vmatpush2.bf16.msra.mxu0 %v1010
      %1225 = vmatprep.subr.bf16.mxu0 0
      %1226 = vmatpush2.bf16.msra.mxu0 %v1009
      %1227 = vmatprep.subr.bf16.mxu0 0
      %1228 = vmatpush2.bf16.msra.mxu0 %v1008
      %1229 = vmatprep.subr.bf16.mxu0 0
      %1230 = vmatpush2.bf16.msra.mxu0 %v1007
      %1231 = vmatprep.subr.bf16.mxu0 0
      %1232 = vmatpush2.bf16.msra.mxu0 %v1006
      %1233 = vmatprep.subr.bf16.mxu0 0
      %1234 = vmatpush2.bf16.msra.mxu0 %v1005
      %1235 = vmatprep.subr.bf16.mxu0 0
      %1236 = vmatpush2.bf16.msra.mxu0 %v1004
      %1237 = vmatprep.mubr.bf16.mxu0 %v727
      %1238 = vmatmul.mubr.bf16.gmra.mxu0 %v726
      %v1239 = vpop.f32.mrf.mxu0
      %v1240 = vadd.f32 %v1079, %v1239
      %v1241 = vpop.f32.mrf.mxu0
      %v1242 = vpop.f32.mrf.mxu0
      %v1243 = vadd.f32 %v1082, %v1242
      %v1244 = vpop.f32.mrf.mxu0
      %1245 = vmatprep.mubr.bf16.mxu0 %v731
      %1246 = vmatmul.mubr.bf16.gmra.mxu0 %v730
      %v1247 = vpop.f32.mrf.mxu0
      %v1248 = vadd.f32 %v1087, %v1247
      %v1249 = vpop.f32.mrf.mxu0
      %v1250 = vpop.f32.mrf.mxu0
      %v1251 = vadd.f32 %v1090, %v1250
      %v1252 = vpop.f32.mrf.mxu0
      %1253 = vmatprep.mubr.bf16.mxu0 %v735
      %1254 = vmatmul.mubr.bf16.gmra.mxu0 %v734
      %v1255 = vpop.f32.mrf.mxu0
      %v1256 = vadd.f32 %v1095, %v1255
      %v1257 = vpop.f32.mrf.mxu0
      %v1258 = vpop.f32.mrf.mxu0
      %v1259 = vadd.f32 %v1098, %v1258
      %v1260 = vpop.f32.mrf.mxu0
      %1261 = vmatprep.mubr.bf16.mxu0 %v739
      %1262 = vmatmul.mubr.bf16.gmra.mxu0 %v738
      %v1263 = vpop.f32.mrf.mxu0
      %v1264 = vadd.f32 %v1103, %v1263
      %v1265 = vpop.f32.mrf.mxu0
      %v1266 = vpop.f32.mrf.mxu0
      %v1267 = vadd.f32 %v1106, %v1266
      %v1268 = vpop.f32.mrf.mxu0
      %1269 = vmatprep.mubr.bf16.mxu0 %v743
      %1270 = vmatmul.mubr.bf16.gmra.mxu0 %v742
      %v1271 = vpop.f32.mrf.mxu0
      %v1272 = vadd.f32 %v1111, %v1271
      %v1273 = vpop.f32.mrf.mxu0
      %v1274 = vpop.f32.mrf.mxu0
      %v1275 = vadd.f32 %v1114, %v1274
      %v1276 = vpop.f32.mrf.mxu0
      %1277 = vmatprep.mubr.bf16.mxu0 %v747
      %1278 = vmatmul.mubr.bf16.gmra.mxu0 %v746
      %v1279 = vpop.f32.mrf.mxu0
      %v1280 = vadd.f32 %v1119, %v1279
      %v1281 = vpop.f32.mrf.mxu0
      %v1282 = vpop.f32.mrf.mxu0
      %v1283 = vadd.f32 %v1122, %v1282
      %v1284 = vpop.f32.mrf.mxu0
      %1285 = vmatprep.mubr.bf16.mxu0 %v751
      %1286 = vmatmul.mubr.bf16.gmra.mxu0 %v750
      %v1287 = vpop.f32.mrf.mxu0
      %v1288 = vadd.f32 %v1127, %v1287
      %v1289 = vpop.f32.mrf.mxu0
      %v1290 = vpop.f32.mrf.mxu0
      %v1291 = vadd.f32 %v1130, %v1290
      %v1292 = vpop.f32.mrf.mxu0
      %1293 = vmatprep.mubr.bf16.mxu0 %v755
      %1294 = vmatmul.mubr.bf16.gmra.mxu0 %v754
      %v1295 = vpop.f32.mrf.mxu0
      %v1296 = vadd.f32 %v1135, %v1295
      %v1297 = vpop.f32.mrf.mxu0
      %v1298 = vpop.f32.mrf.mxu0
      %v1299 = vadd.f32 %v1138, %v1298
      %v1300 = vpop.f32.mrf.mxu0
      %1301 = vmatprep.mubr.bf16.mxu0 %v759
      %1302 = vmatmul.mubr.bf16.gmra.mxu0 %v758
      %v1303 = vpop.f32.mrf.mxu0
      %v1304 = vadd.f32 %v1143, %v1303
      %v1305 = vpop.f32.mrf.mxu0
      %v1306 = vpop.f32.mrf.mxu0
      %v1307 = vadd.f32 %v1146, %v1306
      %v1308 = vpop.f32.mrf.mxu0
      %1309 = vmatprep.mubr.bf16.mxu0 %v763
      %1310 = vmatmul.mubr.bf16.gmra.mxu0 %v762
      %v1311 = vpop.f32.mrf.mxu0
      %v1312 = vadd.f32 %v1151, %v1311
      %v1313 = vpop.f32.mrf.mxu0
      %v1314 = vpop.f32.mrf.mxu0
      %v1315 = vadd.f32 %v1154, %v1314
      %v1316 = vpop.f32.mrf.mxu0
      %1317 = vmatprep.mubr.bf16.mxu0 %v767
      %1318 = vmatmul.mubr.bf16.gmra.mxu0 %v766
      %v1319 = vpop.f32.mrf.mxu0
      %v1320 = vadd.f32 %v1159, %v1319
      %v1321 = vpop.f32.mrf.mxu0
      %v1322 = vpop.f32.mrf.mxu0
      %v1323 = vadd.f32 %v1162, %v1322
      %v1324 = vpop.f32.mrf.mxu0
      %1325 = vmatprep.mubr.bf16.mxu0 %v771
      %1326 = vmatmul.mubr.bf16.gmra.mxu0 %v770
      %v1327 = vpop.f32.mrf.mxu0
      %v1328 = vadd.f32 %v1167, %v1327
      %v1329 = vpop.f32.mrf.mxu0
      %v1330 = vpop.f32.mrf.mxu0
      %v1331 = vadd.f32 %v1170, %v1330
      %v1332 = vpop.f32.mrf.mxu0
      %1333 = vmatprep.mubr.bf16.mxu0 %v775
      %1334 = vmatmul.mubr.bf16.gmra.mxu0 %v774
      %v1335 = vpop.f32.mrf.mxu0
      %v1336 = vadd.f32 %v1175, %v1335
      %v1337 = vpop.f32.mrf.mxu0
      %v1338 = vpop.f32.mrf.mxu0
      %v1339 = vadd.f32 %v1178, %v1338
      %v1340 = vpop.f32.mrf.mxu0
      %1341 = vmatprep.mubr.bf16.mxu0 %v779
      %1342 = vmatmul.mubr.bf16.gmra.mxu0 %v778
      %v1343 = vpop.f32.mrf.mxu0
      %v1344 = vadd.f32 %v1183, %v1343
      %v1345 = vpop.f32.mrf.mxu0
      %v1346 = vpop.f32.mrf.mxu0
      %v1347 = vadd.f32 %v1186, %v1346
      %v1348 = vpop.f32.mrf.mxu0
      %1349 = vmatprep.mubr.bf16.mxu0 %v783
      %1350 = vmatmul.mubr.bf16.gmra.mxu0 %v782
      %v1351 = vpop.f32.mrf.mxu0
      %v1352 = vadd.f32 %v1191, %v1351
      %v1353 = vpop.f32.mrf.mxu0
      %v1354 = vpop.f32.mrf.mxu0
      %v1355 = vadd.f32 %v1194, %v1354
      %v1356 = vpop.f32.mrf.mxu0
      %1357 = vmatprep.mubr.bf16.mxu0 %v787
      %1358 = vmatmul.mubr.bf16.gmra.mxu0 %v786
      %v1359 = vpop.f32.mrf.mxu0
      %v1360 = vadd.f32 %v1199, %v1359
      %v1361 = vpop.f32.mrf.mxu0
      %v1362 = vpop.f32.mrf.mxu0
      %v1363 = vadd.f32 %v1202, %v1362
      %v1364 = vpop.f32.mrf.mxu0
      %1365 = vdwg.mxu0
      %v1366 = vxor.u32 %v1304, 2147483648
      %v1367 = vxor.u32 %v1307, 2147483648
      %v1368 = vxor.u32 %v1312, 2147483648
      %v1369 = vxor.u32 %v1315, 2147483648
      %v1370 = vxor.u32 %v1320, 2147483648
      %v1371 = vxor.u32 %v1323, 2147483648
      %v1372 = vxor.u32 %v1328, 2147483648
      %v1373 = vxor.u32 %v1331, 2147483648
      %v1374 = vxor.u32 %v1336, 2147483648
      %v1375 = vxor.u32 %v1339, 2147483648
      %v1376 = vxor.u32 %v1344, 2147483648
      %v1377 = vxor.u32 %v1347, 2147483648
      %v1378 = vxor.u32 %v1352, 2147483648
      %v1379 = vxor.u32 %v1355, 2147483648
      %v1380 = vxor.u32 %v1360, 2147483648
      %v1381 = vxor.u32 %v1363, 2147483648
      %v1382 = vmul.f32 %v1366, 1.442695
      %v1383 = vpow.pop %v1382
      %v1384 = vmul.f32 %v1367, 1.442695
      %v1385 = vpow.pop %v1384
      %v1386 = vmul.f32 %v1368, 1.442695
      %v1387 = vpow.pop %v1386
      %v1388 = vmul.f32 %v1369, 1.442695
      %v1389 = vpow.pop %v1388
      %v1390 = vmul.f32 %v1370, 1.442695
      %v1391 = vpow.pop %v1390
      %v1392 = vmul.f32 %v1371, 1.442695
      %v1393 = vpow.pop %v1392
      %v1394 = vmul.f32 %v1372, 1.442695
      %v1395 = vpow.pop %v1394
      %v1396 = vmul.f32 %v1373, 1.442695
      %v1397 = vpow.pop %v1396
      %v1398 = vmul.f32 %v1374, 1.442695
      %v1399 = vpow.pop %v1398
      %v1400 = vmul.f32 %v1375, 1.442695
      %v1401 = vpow.pop %v1400
      %v1402 = vmul.f32 %v1376, 1.442695
      %v1403 = vpow.pop %v1402
      %v1404 = vmul.f32 %v1377, 1.442695
      %v1405 = vpow.pop %v1404
      %v1406 = vmul.f32 %v1378, 1.442695
      %v1407 = vpow.pop %v1406
      %v1408 = vmul.f32 %v1379, 1.442695
      %v1409 = vpow.pop %v1408
      %v1410 = vmul.f32 %v1380, 1.442695
      %v1411 = vpow.pop %v1410
      %v1412 = vmul.f32 %v1381, 1.442695
      %v1413 = vpow.pop %v1412
      %v1414 = vadd.f32 %v1383, 1.0
      %v1415 = vadd.f32 %v1385, 1.0
      %v1416 = vadd.f32 %v1387, 1.0
      %v1417 = vadd.f32 %v1389, 1.0
      %v1418 = vadd.f32 %v1391, 1.0
      %v1419 = vadd.f32 %v1393, 1.0
      %v1420 = vadd.f32 %v1395, 1.0
      %v1421 = vadd.f32 %v1397, 1.0
      %v1422 = vadd.f32 %v1399, 1.0
      %v1423 = vadd.f32 %v1401, 1.0
      %v1424 = vadd.f32 %v1403, 1.0
      %v1425 = vadd.f32 %v1405, 1.0
      %v1426 = vadd.f32 %v1407, 1.0
      %v1427 = vadd.f32 %v1409, 1.0
      %v1428 = vadd.f32 %v1411, 1.0
      %v1429 = vadd.f32 %v1413, 1.0
      %v1430 = vrcp.pop %v1414
      %v1431 = vmul.f32 1.0, %v1430
      %v1432 = vrcp.pop %v1415
      %v1433 = vmul.f32 1.0, %v1432
      %v1434 = vrcp.pop %v1416
      %v1435 = vmul.f32 1.0, %v1434
      %v1436 = vrcp.pop %v1417
      %v1437 = vmul.f32 1.0, %v1436
      %v1438 = vrcp.pop %v1418
      %v1439 = vmul.f32 1.0, %v1438
      %v1440 = vrcp.pop %v1419
      %v1441 = vmul.f32 1.0, %v1440
      %v1442 = vrcp.pop %v1420
      %v1443 = vmul.f32 1.0, %v1442
      %v1444 = vrcp.pop %v1421
      %v1445 = vmul.f32 1.0, %v1444
      %v1446 = vrcp.pop %v1422
      %v1447 = vmul.f32 1.0, %v1446
      %v1448 = vrcp.pop %v1423
      %v1449 = vmul.f32 1.0, %v1448
      %v1450 = vrcp.pop %v1424
      %v1451 = vmul.f32 1.0, %v1450
      %v1452 = vrcp.pop %v1425
      %v1453 = vmul.f32 1.0, %v1452
      %v1454 = vrcp.pop %v1426
      %v1455 = vmul.f32 1.0, %v1454
      %v1456 = vrcp.pop %v1427
      %v1457 = vmul.f32 1.0, %v1456
      %v1458 = vrcp.pop %v1428
      %v1459 = vmul.f32 1.0, %v1458
      %v1460 = vrcp.pop %v1429
      %v1461 = vmul.f32 1.0, %v1460
      %v1462 = vmul.f32 %v1431, %v1240
      %v1463 = vmul.f32 %v1433, %v1243
      %v1464 = vmul.f32 %v1435, %v1248
      %v1465 = vmul.f32 %v1437, %v1251
      %v1466 = vmul.f32 %v1439, %v1256
      %v1467 = vmul.f32 %v1441, %v1259
      %v1468 = vmul.f32 %v1443, %v1264
      %v1469 = vmul.f32 %v1445, %v1267
      %v1470 = vmul.f32 %v1447, %v1272
      %v1471 = vmul.f32 %v1449, %v1275
      %v1472 = vmul.f32 %v1451, %v1280
      %v1473 = vmul.f32 %v1453, %v1283
      %v1474 = vmul.f32 %v1455, %v1288
      %v1475 = vmul.f32 %v1457, %v1291
      %v1476 = vmul.f32 %v1459, %v1296
      %v1477 = vmul.f32 %v1461, %v1299
      %vm1478 = vcmp.gt.f32.partialorder %v1462, 0.0
      %vm1479 = vcmp.gt.f32.partialorder %v1463, 0.0
      %vm1480 = vcmp.gt.f32.partialorder %v1464, 0.0
      %vm1481 = vcmp.gt.f32.partialorder %v1465, 0.0
      %vm1482 = vcmp.gt.f32.partialorder %v1466, 0.0
      %vm1483 = vcmp.gt.f32.partialorder %v1467, 0.0
      %vm1484 = vcmp.gt.f32.partialorder %v1468, 0.0
      %vm1485 = vcmp.gt.f32.partialorder %v1469, 0.0
      %vm1486 = vcmp.gt.f32.partialorder %v1470, 0.0
      %vm1487 = vcmp.gt.f32.partialorder %v1471, 0.0
      %vm1488 = vcmp.gt.f32.partialorder %v1472, 0.0
      %vm1489 = vcmp.gt.f32.partialorder %v1473, 0.0
      %vm1490 = vcmp.gt.f32.partialorder %v1474, 0.0
      %vm1491 = vcmp.gt.f32.partialorder %v1475, 0.0
      %vm1492 = vcmp.gt.f32.partialorder %v1476, 0.0
      %vm1493 = vcmp.gt.f32.partialorder %v1477, 0.0
      %v1494 = vmin.f32 %v1462, 0.0
      %v1495 = vmin.f32 %v1463, 0.0
      %v1496 = vmin.f32 %v1464, 0.0
      %v1497 = vmin.f32 %v1465, 0.0
      %v1498 = vmin.f32 %v1466, 0.0
      %v1499 = vmin.f32 %v1467, 0.0
      %v1500 = vmin.f32 %v1468, 0.0
      %v1501 = vmin.f32 %v1469, 0.0
      %v1502 = vmin.f32 %v1470, 0.0
      %v1503 = vmin.f32 %v1471, 0.0
      %v1504 = vmin.f32 %v1472, 0.0
      %v1505 = vmin.f32 %v1473, 0.0
      %v1506 = vmin.f32 %v1474, 0.0
      %v1507 = vmin.f32 %v1475, 0.0
      %v1508 = vmin.f32 %v1476, 0.0
      %v1509 = vmin.f32 %v1477, 0.0
      %v1510 = vmul.f32 %v1494, 1.442695
      %v1511 = vpow.pop %v1510
      %v1512 = vmul.f32 %v1495, 1.442695
      %v1513 = vpow.pop %v1512
      %v1514 = vmul.f32 %v1496, 1.442695
      %v1515 = vpow.pop %v1514
      %v1516 = vmul.f32 %v1497, 1.442695
      %v1517 = vpow.pop %v1516
      %v1518 = vmul.f32 %v1498, 1.442695
      %v1519 = vpow.pop %v1518
      %v1520 = vmul.f32 %v1499, 1.442695
      %v1521 = vpow.pop %v1520
      %v1522 = vmul.f32 %v1500, 1.442695
      %v1523 = vpow.pop %v1522
      %v1524 = vmul.f32 %v1501, 1.442695
      %v1525 = vpow.pop %v1524
      %v1526 = vmul.f32 %v1502, 1.442695
      %v1527 = vpow.pop %v1526
      %v1528 = vmul.f32 %v1503, 1.442695
      %v1529 = vpow.pop %v1528
      %v1530 = vmul.f32 %v1504, 1.442695
      %v1531 = vpow.pop %v1530
      %v1532 = vmul.f32 %v1505, 1.442695
      %v1533 = vpow.pop %v1532
      %v1534 = vmul.f32 %v1506, 1.442695
      %v1535 = vpow.pop %v1534
      %v1536 = vmul.f32 %v1507, 1.442695
      %v1537 = vpow.pop %v1536
      %v1538 = vmul.f32 %v1508, 1.442695
      %v1539 = vpow.pop %v1538
      %v1540 = vmul.f32 %v1509, 1.442695
      %v1541 = vpow.pop %v1540
      %v1542 = vsub.f32 %v1511, 1.0
      %v1543 = vsub.f32 %v1513, 1.0
      %v1544 = vsub.f32 %v1515, 1.0
      %v1545 = vsub.f32 %v1517, 1.0
      %v1546 = vsub.f32 %v1519, 1.0
      %v1547 = vsub.f32 %v1521, 1.0
      %v1548 = vsub.f32 %v1523, 1.0
      %v1549 = vsub.f32 %v1525, 1.0
      %v1550 = vsub.f32 %v1527, 1.0
      %v1551 = vsub.f32 %v1529, 1.0
      %v1552 = vsub.f32 %v1531, 1.0
      %v1553 = vsub.f32 %v1533, 1.0
      %v1554 = vsub.f32 %v1535, 1.0
      %v1555 = vsub.f32 %v1537, 1.0
      %v1556 = vsub.f32 %v1539, 1.0
      %v1557 = vsub.f32 %v1541, 1.0
      %v1558 = vsel %vm1478, %v1462, %v1542
      %v1559 = vsel %vm1479, %v1463, %v1543
      %v1560 = vsel %vm1480, %v1464, %v1544
      %v1561 = vsel %vm1481, %v1465, %v1545
      %v1562 = vsel %vm1482, %v1466, %v1546
      %v1563 = vsel %vm1483, %v1467, %v1547
      %v1564 = vsel %vm1484, %v1468, %v1548
      %v1565 = vsel %vm1485, %v1469, %v1549
      %v1566 = vsel %vm1486, %v1470, %v1550
      %v1567 = vsel %vm1487, %v1471, %v1551
      %v1568 = vsel %vm1488, %v1472, %v1552
      %v1569 = vsel %vm1489, %v1473, %v1553
      %v1570 = vsel %vm1490, %v1474, %v1554
      %v1571 = vsel %vm1491, %v1475, %v1555
      %v1572 = vsel %vm1492, %v1476, %v1556
      %v1573 = vsel %vm1493, %v1477, %v1557
      %vm1574 = vcmp.gt.f32.partialorder %v1558, 0.0
      %vm1575 = vcmp.gt.f32.partialorder %v1559, 0.0
      %vm1576 = vcmp.gt.f32.partialorder %v1560, 0.0
      %vm1577 = vcmp.gt.f32.partialorder %v1561, 0.0
      %vm1578 = vcmp.gt.f32.partialorder %v1562, 0.0
      %vm1579 = vcmp.gt.f32.partialorder %v1563, 0.0
      %vm1580 = vcmp.gt.f32.partialorder %v1564, 0.0
      %vm1581 = vcmp.gt.f32.partialorder %v1565, 0.0
      %vm1582 = vcmp.gt.f32.partialorder %v1566, 0.0
      %vm1583 = vcmp.gt.f32.partialorder %v1567, 0.0
      %vm1584 = vcmp.gt.f32.partialorder %v1568, 0.0
      %vm1585 = vcmp.gt.f32.partialorder %v1569, 0.0
      %vm1586 = vcmp.gt.f32.partialorder %v1570, 0.0
      %vm1587 = vcmp.gt.f32.partialorder %v1571, 0.0
      %vm1588 = vcmp.gt.f32.partialorder %v1572, 0.0
      %vm1589 = vcmp.gt.f32.partialorder %v1573, 0.0
      %v1590 = vmin.f32 %v1558, 0.0
      %v1591 = vmin.f32 %v1559, 0.0
      %v1592 = vmin.f32 %v1560, 0.0
      %v1593 = vmin.f32 %v1561, 0.0
      %v1594 = vmin.f32 %v1562, 0.0
      %v1595 = vmin.f32 %v1563, 0.0
      %v1596 = vmin.f32 %v1564, 0.0
      %v1597 = vmin.f32 %v1565, 0.0
      %v1598 = vmin.f32 %v1566, 0.0
      %v1599 = vmin.f32 %v1567, 0.0
      %v1600 = vmin.f32 %v1568, 0.0
      %v1601 = vmin.f32 %v1569, 0.0
      %v1602 = vmin.f32 %v1570, 0.0
      %v1603 = vmin.f32 %v1571, 0.0
      %v1604 = vmin.f32 %v1572, 0.0
      %v1605 = vmin.f32 %v1573, 0.0
      %v1606 = vmul.f32 %v1590, 1.442695
      %v1607 = vpow.pop %v1606
      %v1608 = vmul.f32 %v1591, 1.442695
      %v1609 = vpow.pop %v1608
      %v1610 = vmul.f32 %v1592, 1.442695
      %v1611 = vpow.pop %v1610
      %v1612 = vmul.f32 %v1593, 1.442695
      %v1613 = vpow.pop %v1612
      %v1614 = vmul.f32 %v1594, 1.442695
      %v1615 = vpow.pop %v1614
      %v1616 = vmul.f32 %v1595, 1.442695
      %v1617 = vpow.pop %v1616
      %v1618 = vmul.f32 %v1596, 1.442695
      %v1619 = vpow.pop %v1618
      %v1620 = vmul.f32 %v1597, 1.442695
      %v1621 = vpow.pop %v1620
      %v1622 = vmul.f32 %v1598, 1.442695
      %v1623 = vpow.pop %v1622
      %v1624 = vmul.f32 %v1599, 1.442695
      %v1625 = vpow.pop %v1624
      %v1626 = vmul.f32 %v1600, 1.442695
      %v1627 = vpow.pop %v1626
      %v1628 = vmul.f32 %v1601, 1.442695
      %v1629 = vpow.pop %v1628
      %v1630 = vmul.f32 %v1602, 1.442695
      %v1631 = vpow.pop %v1630
      %v1632 = vmul.f32 %v1603, 1.442695
      %v1633 = vpow.pop %v1632
      %v1634 = vmul.f32 %v1604, 1.442695
      %v1635 = vpow.pop %v1634
      %v1636 = vmul.f32 %v1605, 1.442695
      %v1637 = vpow.pop %v1636
      %v1638 = vsub.f32 %v1607, 1.0
      %v1639 = vsub.f32 %v1609, 1.0
      %v1640 = vsub.f32 %v1611, 1.0
      %v1641 = vsub.f32 %v1613, 1.0
      %v1642 = vsub.f32 %v1615, 1.0
      %v1643 = vsub.f32 %v1617, 1.0
      %v1644 = vsub.f32 %v1619, 1.0
      %v1645 = vsub.f32 %v1621, 1.0
      %v1646 = vsub.f32 %v1623, 1.0
      %v1647 = vsub.f32 %v1625, 1.0
      %v1648 = vsub.f32 %v1627, 1.0
      %v1649 = vsub.f32 %v1629, 1.0
      %v1650 = vsub.f32 %v1631, 1.0
      %v1651 = vsub.f32 %v1633, 1.0
      %v1652 = vsub.f32 %v1635, 1.0
      %v1653 = vsub.f32 %v1637, 1.0
      %v1654 = vsel %vm1574, %v1558, %v1638
      %v1655 = vsel %vm1575, %v1559, %v1639
      %v1656 = vsel %vm1576, %v1560, %v1640
      %v1657 = vsel %vm1577, %v1561, %v1641
      %v1658 = vsel %vm1578, %v1562, %v1642
      %v1659 = vsel %vm1579, %v1563, %v1643
      %v1660 = vsel %vm1580, %v1564, %v1644
      %v1661 = vsel %vm1581, %v1565, %v1645
      %v1662 = vsel %vm1582, %v1566, %v1646
      %v1663 = vsel %vm1583, %v1567, %v1647
      %v1664 = vsel %vm1584, %v1568, %v1648
      %v1665 = vsel %vm1585, %v1569, %v1649
      %v1666 = vsel %vm1586, %v1570, %v1650
      %v1667 = vsel %vm1587, %v1571, %v1651
      %v1668 = vsel %vm1588, %v1572, %v1652
      %v1669 = vsel %vm1589, %v1573, %v1653
      %v1670 = vpack.c.bf16 %v1655, %v1654
      %v1671 = vpack.c.bf16 %v1657, %v1656
      %v1672 = vpack.c.bf16 %v1659, %v1658
      %v1673 = vpack.c.bf16 %v1661, %v1660
      %v1674 = vpack.c.bf16 %v1663, %v1662
      %v1675 = vpack.c.bf16 %v1665, %v1664
      %v1676 = vpack.c.bf16 %v1667, %v1666
      %v1677 = vpack.c.bf16 %v1669, %v1668
      %v1686 = vunpack.c.l.b16 %v1670
      %v1687 = vunpack.c.h.b16 %v1670
      %v1688 = vunpack.c.l.b16 %v1671
      %v1689 = vunpack.c.h.b16 %v1671
      %v1690 = vunpack.c.l.b16 %v1672
      %v1691 = vunpack.c.h.b16 %v1672
      %v1692 = vunpack.c.l.b16 %v1673
      %v1693 = vunpack.c.h.b16 %v1673
      %v1694 = vunpack.c.l.b16 %v1674
      %v1695 = vunpack.c.h.b16 %v1674
      %v1696 = vunpack.c.l.b16 %v1675
      %v1697 = vunpack.c.h.b16 %v1675
      %v1698 = vunpack.c.l.b16 %v1676
      %v1699 = vunpack.c.h.b16 %v1676
      %v1700 = vunpack.c.l.b16 %v1677
      %v1701 = vunpack.c.h.b16 %v1677
      %v1702 = vpack.c.b16 %v1686, %v1686
      %v1703 = vpack.c.b16 %v1687, %v1687
      %v1704 = vpack.c.b16 %v1688, %v1688
      %v1705 = vpack.c.b16 %v1689, %v1689
      %v1706 = vpack.c.b16 %v1690, %v1690
      %v1707 = vpack.c.b16 %v1691, %v1691
      %v1708 = vpack.c.b16 %v1692, %v1692
      %v1709 = vpack.c.b16 %v1693, %v1693
      %v1710 = vpack.c.b16 %v1694, %v1694
      %v1711 = vpack.c.b16 %v1695, %v1695
      %v1712 = vpack.c.b16 %v1696, %v1696
      %v1713 = vpack.c.b16 %v1697, %v1697
      %v1714 = vpack.c.b16 %v1698, %v1698
      %v1715 = vpack.c.b16 %v1699, %v1699
      %v1716 = vpack.c.b16 %v1700, %v1700
      %v1717 = vpack.c.b16 %v1701, %v1701
      %1734 = vst [vmem:[%s210] sm:$0xf] %v1702
      %1735 = vst [vmem:[%s210 + $0x4] sm:$0xf] %v1703
      %1736 = vst [vmem:[%s210 + $0x8] sm:$0xf] %v1704
      %1737 = vst [vmem:[%s210 + $0xc] sm:$0xf] %v1705
      %1738 = vst [vmem:[%s210 + $0x10] sm:$0xf] %v1706
      %1739 = vst [vmem:[%s210 + $0x14] sm:$0xf] %v1707
      %1740 = vst [vmem:[%s210 + $0x18] sm:$0xf] %v1708
      %1741 = vst [vmem:[%s210 + $0x1c] sm:$0xf] %v1709
      %1742 = vst [vmem:[%s210 + $0x20] sm:$0xf] %v1710
      %1743 = vst [vmem:[%s210 + $0x24] sm:$0xf] %v1711
      %1744 = vst [vmem:[%s210 + $0x28] sm:$0xf] %v1712
      %1745 = vst [vmem:[%s210 + $0x2c] sm:$0xf] %v1713
      %1746 = vst [vmem:[%s210 + $0x30] sm:$0xf] %v1714
      %1747 = vst [vmem:[%s210 + $0x34] sm:$0xf] %v1715
      %1748 = vst [vmem:[%s210 + $0x38] sm:$0xf] %v1716
      %1749 = vst [vmem:[%s210 + $0x3c] sm:$0xf] %v1717
      %p1750 = scmp.lt.s32.totalorder %s14, 1
      %s1751 = scalar_select %p1750, %s14, 1
      %s1752 = smul.addr %s1751, 16
      %s1753 = smul.addr %s1752, 4
      %s1754 = scalar_lea.vmem %s3, %s1753
      // Predicated region
      $region33: #{online_gcrn_forward.14} parent=31 // pred_check
        %p1755 = pneg %p110
      $region34: #{online_gcrn_forward.14} parent=31 // pred_check_branch
        %1757 = sbr.rel (%p1755) target = $region36
      $region35: #{online_gcrn_forward.14} parent=31 // pred_region
        _
      $region36: #{online_gcrn_forward.14} parent=31 // pred_fallthru
        _
    $region32: #{online_gcrn_forward.14} parent=5 // pred_fallthru
      _
    %p1758 = scmp.le.s32.totalorder 2, %s9
    // Predicated region
    $region37: #{online_gcrn_forward.14} parent=5 // pred_check
      %p1759 = pneg %p1758
    $region38: #{online_gcrn_forward.14} parent=5 // pred_check_branch
      %1761 = sbr.rel (%p1759) target = $region40
    $region39: #{online_gcrn_forward.14} parent=5 // pred_region
      %s1762 = ssub.s32 %s9, 2
      // Predicated region
      $region41: #{online_gcrn_forward.14} parent=39 // pred_check
        %p1763 = pneg %p116
      $region42: #{online_gcrn_forward.14} parent=39 // pred_check_branch
        %1765 = sbr.rel (%p1763) target = $region44
      $region43: #{online_gcrn_forward.14} parent=39 // pred_region
        %p1766 = scmp.lt.s32.totalorder %s15, 1
        %s1767 = scalar_select %p1766, %s15, 1
        %s1768 = smul.addr %s1767, 16
        %s1769 = smul.addr %s1768, 4
        %s1770 = scalar_lea.vmem %s3, %s1769
      $region44: #{online_gcrn_forward.14} parent=39 // pred_fallthru
        _
    $region40: #{online_gcrn_forward.14} parent=5 // pred_fallthru
      _
  $region6: #{online_gcrn_forward.14} parent=0 // loop_footer
    %s13 = sadd.s32 1, %s9
  $region7: #{online_gcrn_forward.14} parent=0 // loop_footer_branch
    %8 = sbr.rel target = $region3
  $region8: #{online_gcrn_forward.14} parent=0 // loop_exit
    _

// kernel: online_gcrn_forward.17
$region0: #{online_gcrn_forward.17}
  #allocation0 [shape = 'u32[]', space=smem, size = 0x4, offset = 0x4, fixed_abs, tag = 'smem constant byte address 0x4 - core index']
  #allocation1 [shape = 'u32[144,128]{1,0:T(1,128)}', space=vmem, size = 0x12000, scoped, tag = 'internal scratch']
  %s0 = inlined_call_operand.vmem [shape: bf16[2,512,128], index: 0, kind: input, shape index: {}]
  %s1 = inlined_call_operand.vmem [shape: bf16[2,4,512], index: 1, kind: input, shape index: {}]
  %s2 = inlined_call_operand.vmem [shape: f32[2,4,1], index: 2, kind: input, shape index: {}]
  %s3 = inlined_call_operand.vmem [shape: f32[2,2,128], index: 3, kind: output, shape index: {}]
  %s4 = sld [smem:[#allocation0]]
  $region45: #{online_gcrn_forward.17} parent=0
    _
  %s6 = ssub.s32 1, %s4
  %s7 = scalar_select 0, %s6, %s4
  loop: start=0, step=1, limit=4
  $region2: #{online_gcrn_forward.17} parent=0 // loop_pre_header
    _
  $region3: #{online_gcrn_forward.17} parent=0 // loop_header
    %s9 = sphi 0, %s13
    %p10 = scmp.ge.s32.totalorder %s9, 4
    %s19 = sphi 0, %s21
    %s22 = sphi 0, %s19
    %s23 = sphi 0, %s22
    %s39 = sphi 0, %s23
    %s45 = sphi 0, %s47
    %s48 = sphi 0, %s45
    %s49 = sphi 0, %s48
    %s65 = sphi 0, %s49
    %s71 = sphi 0, %s73
    %s74 = sphi 0, %s71
    %s75 = sphi 0, %s74
    %s91 = sphi 0, %s75
    %s97 = sphi 0, %s99
    %s100 = sphi 0, %s97
    %s101 = sphi 0, %s100
    %s117 = sphi 0, %s101
  $region4: #{online_gcrn_forward.17} parent=0 // loop_header_branch
    %12 = sbr.rel (%p10) target = $region8
  $region5: #{online_gcrn_forward.17} parent=0 // loop_body
    %s14 = ssub.s32 %s9, 1
    %s15 = ssub.s32 %s9, 2
    %s16 = sadd.s32 %s9, 1
    %s17 = ssub.s32 %s9, %s16
    %p18 = scmp.eq.s32.totalorder %s17, 0
    %s20 = sadd.s32 %s19, 1
    %s21 = scalar_select %p18, %s19, %s20
    %p24 = pneg %p18
    %p25 = scmp.eq.s32.totalorder %s9, 1
    %p26 = por %p24, %p25
    %p27 = scmp.ne.s32.totalorder %s19, %s22
    %p28 = scmp.eq.s32.totalorder %s9, 0
    %p29 = por %p27, %p28
    %p30 = scmp.ne.s32.totalorder %s19, %s22
    %p31 = scmp.eq.s32.totalorder %s14, 1
    %p32 = por %p30, %p31
    %p33 = scmp.ne.s32.totalorder %s22, %s23
    %p34 = scmp.eq.s32.totalorder %s14, 0
    %p35 = por %p33, %p34
    %p36 = scmp.ne.s32.totalorder %s22, %s23
    %p37 = scmp.eq.s32.totalorder %s15, 1
    %p38 = por %p36, %p37
    %p40 = scmp.ne.s32.totalorder %s23, %s39
    %p41 = scmp.eq.s32.totalorder %s15, 0
    %p42 = por %p40, %p41
    %s43 = ssub.s32 %s9, %s16
    %p44 = scmp.eq.s32.totalorder %s43, 0
    %s46 = sadd.s32 %s45, 1
    %s47 = scalar_select %p44, %s45, %s46
    %p50 = pneg %p44
    %p51 = scmp.eq.s32.totalorder %s9, 1
    %p52 = por %p50, %p51
    %p53 = scmp.ne.s32.totalorder %s45, %s48
    %p54 = scmp.eq.s32.totalorder %s9, 0
    %p55 = por %p53, %p54
    %p56 = scmp.ne.s32.totalorder %s45, %s48
    %p57 = scmp.eq.s32.totalorder %s14, 1
    %p58 = por %p56, %p57
    %p59 = scmp.ne.s32.totalorder %s48, %s49
    %p60 = scmp.eq.s32.totalorder %s14, 0
    %p61 = por %p59, %p60
    %p62 = scmp.ne.s32.totalorder %s48, %s49
    %p63 = scmp.eq.s32.totalorder %s15, 1
    %p64 = por %p62, %p63
    %p66 = scmp.ne.s32.totalorder %s49, %s65
    %p67 = scmp.eq.s32.totalorder %s15, 0
    %p68 = por %p66, %p67
    %s69 = ssub.s32 %s9, %s16
    %p70 = scmp.eq.s32.totalorder %s69, 0
    %s72 = sadd.s32 %s71, 1
    %s73 = scalar_select %p70, %s71, %s72
    %p76 = pneg %p70
    %p77 = scmp.eq.s32.totalorder %s9, 1
    %p78 = por %p76, %p77
    %p79 = scmp.ne.s32.totalorder %s71, %s74
    %p80 = scmp.eq.s32.totalorder %s9, 0
    %p81 = por %p79, %p80
    %p82 = scmp.ne.s32.totalorder %s71, %s74
    %p83 = scmp.eq.s32.totalorder %s14, 1
    %p84 = por %p82, %p83
    %p85 = scmp.ne.s32.totalorder %s74, %s75
    %p86 = scmp.eq.s32.totalorder %s14, 0
    %p87 = por %p85, %p86
    %p88 = scmp.ne.s32.totalorder %s74, %s75
    %p89 = scmp.eq.s32.totalorder %s15, 1
    %p90 = por %p88, %p89
    %p92 = scmp.ne.s32.totalorder %s75, %s91
    %p93 = scmp.eq.s32.totalorder %s15, 0
    %p94 = por %p92, %p93
    %s95 = ssub.s32 %s9, %s16
    %p96 = scmp.eq.s32.totalorder %s95, 0
    %s98 = sadd.s32 %s97, 1
    %s99 = scalar_select %p96, %s97, %s98
    %p102 = pneg %p96
    %p103 = scmp.eq.s32.totalorder %s9, 1
    %p104 = por %p102, %p103
    %p105 = scmp.ne.s32.totalorder %s97, %s100
    %p106 = scmp.eq.s32.totalorder %s9, 0
    %p107 = por %p105, %p106
    %p108 = scmp.ne.s32.totalorder %s97, %s100
    %p109 = scmp.eq.s32.totalorder %s14, 1
    %p110 = por %p108, %p109
    %p111 = scmp.ne.s32.totalorder %s100, %s101
    %p112 = scmp.eq.s32.totalorder %s14, 0
    %p113 = por %p111, %p112
    %p114 = scmp.ne.s32.totalorder %s100, %s101
    %p115 = scmp.eq.s32.totalorder %s15, 1
    %p116 = por %p114, %p115
    %p118 = scmp.ne.s32.totalorder %s101, %s117
    %p119 = scmp.eq.s32.totalorder %s15, 0
    %p120 = por %p118, %p119
    %p121 = scmp.le.s32.totalorder 1, %s9
    %p122 = scmp.lt.s32.totalorder %s9, 3
    %p123 = pnand %p121, %p122
    %p124 = pneg %p123
    // Predicated region
    $region9: #{online_gcrn_forward.17} parent=5 // pred_check
      _
    $region10: #{online_gcrn_forward.17} parent=5 // pred_check_branch
      %126 = sbr.rel (%p123) target = $region12
    $region11: #{online_gcrn_forward.17} parent=5 // pred_region
      %s127 = ssub.s32 %s9, 1
    $region12: #{online_gcrn_forward.17} parent=5 // pred_fallthru
      _
    %p128 = scmp.lt.s32.totalorder %s9, 2
    // Predicated region
    $region13: #{online_gcrn_forward.17} parent=5 // pred_check
      %p129 = pneg %p128
    $region14: #{online_gcrn_forward.17} parent=5 // pred_check_branch
      %131 = sbr.rel (%p129) target = $region16
    $region15: #{online_gcrn_forward.17} parent=5 // pred_region
      // Predicated region
      $region17: #{online_gcrn_forward.17} parent=15 // pred_check
        %p132 = pneg %p29
      $region18: #{online_gcrn_forward.17} parent=15 // pred_check_branch
        %134 = sbr.rel (%p132) target = $region20
      $region19: #{online_gcrn_forward.17} parent=15 // pred_region
        %p135 = scmp.lt.s32.totalorder %s9, 1
        %s136 = scalar_select %p135, %s9, 1
        %s137 = smul.addr %s136, 64
        %s138 = smul.addr %s137, 4
        %s139 = scalar_lea.vmem %s0, %s138
      $region20: #{online_gcrn_forward.17} parent=15 // pred_fallthru
        _
      // Predicated region
      $region21: #{online_gcrn_forward.17} parent=15 // pred_check
        %p140 = pneg %p55
      $region22: #{online_gcrn_forward.17} parent=15 // pred_check_branch
        %142 = sbr.rel (%p140) target = $region24
      $region23: #{online_gcrn_forward.17} parent=15 // pred_region
        %p143 = scmp.lt.s32.totalorder %s9, 1
        %s144 = scalar_select %p143, %s9, 1
        %s145 = smul.addr %s144, 4
        %s146 = smul.addr %s145, 2
        %s147 = scalar_lea.vmem %s1, %s146
      $region24: #{online_gcrn_forward.17} parent=15 // pred_fallthru
        _
      // Predicated region
      $region25: #{online_gcrn_forward.17} parent=15 // pred_check
        %p148 = pneg %p81
      $region26: #{online_gcrn_forward.17} parent=15 // pred_check_branch
        %150 = sbr.rel (%p148) target = $region28
      $region27: #{online_gcrn_forward.17} parent=15 // pred_region
        %p151 = scmp.lt.s32.totalorder %s9, 1
        %s152 = scalar_select %p151, %s9, 1
        %s153 = smul.addr %s152, 4
        %s154 = scalar_lea.vmem %s2, %s153
      $region28: #{online_gcrn_forward.17} parent=15 // pred_fallthru
        _
    $region16: #{online_gcrn_forward.17} parent=5 // pred_fallthru
      _
    %p155 = scmp.le.s32.totalorder 1, %s9
    %p156 = scmp.lt.s32.totalorder %s9, 3
    %p157 = pnand %p155, %p156
    %p158 = pneg %p157
    // Predicated region
    $region29: #{online_gcrn_forward.17} parent=5 // pred_check
      _
    $region30: #{online_gcrn_forward.17} parent=5 // pred_check_branch
      %160 = sbr.rel (%p157) target = $region32
    $region31: #{online_gcrn_forward.17} parent=5 // pred_region
      %s161 = ssub.s32 %s9, 1
      %p162 = scmp.lt.s32.totalorder %s14, 1
      %s163 = scalar_select %p162, %s14, 1
      %s164 = smul.addr %s163, 64
      %s165 = smul.addr %s164, 4
      %s166 = scalar_lea.vmem %s0, %s165
      %p167 = pneg %p35
      %p168 = pneg %p32
      %p169 = scmp.lt.s32.totalorder %s14, 1
      %s170 = scalar_select %p169, %s14, 1
      %s171 = smul.addr %s170, 4
      %s172 = smul.addr %s171, 2
      %s173 = scalar_lea.vmem %s1, %s172
      %p174 = pneg %p61
      %p175 = pneg %p58
      %p176 = scmp.lt.s32.totalorder %s14, 1
      %s177 = scalar_select %p176, %s14, 1
      %s178 = smul.addr %s177, 4
      %s179 = scalar_lea.vmem %s2, %s178
      %p180 = pneg %p87
      %p181 = pneg %p84
      %p182 = pneg %p113
      %p183 = pneg %p110
      %p184 = scmp.lt.s32.totalorder %s14, 1
      %s185 = scalar_select %p184, %s14, 1
      %s186 = smul.addr %s185, 2
      %s187 = scalar_lea.vmem %s3, %s186
      %p188 = scmp.lt.s32.totalorder %s14, 1
      %s189 = scalar_select %p188, %s14, 1
      %s190 = smul.addr %s189, 64
      %s191 = smul.addr %s190, 4
      %s192 = scalar_lea.vmem %s0, %s191
      %p193 = scmp.lt.s32.totalorder %s14, 1
      %s194 = scalar_select %p193, %s14, 1
      %s195 = smul.addr %s194, 4
      %s196 = smul.addr %s195, 2
      %s197 = scalar_lea.vmem %s1, %s196
      %p198 = scmp.lt.s32.totalorder %s14, 1
      %s199 = scalar_select %p198, %s14, 1
      %s200 = smul.addr %s199, 4
      %s201 = scalar_lea.vmem %s2, %s200
      %p202 = scmp.lt.s32.totalorder %s14, 1
      %s203 = scalar_select %p202, %s14, 1
      %s204 = smul.addr %s203, 2
      %s205 = scalar_lea.vmem %s3, %s204
      %v207 = vld [vmem:[%s197] sm:$0xff]
      %v208 = vld [vmem:[%s192] sm:$0xf]
      %v209 = vld [vmem:[%s192 + $0x4] sm:$0xf]
      %v210 = vld [vmem:[%s192 + $0x8] sm:$0xf]
      %v211 = vld [vmem:[%s192 + $0xc] sm:$0xf]
      %v212 = vld [vmem:[%s192 + $0x10] sm:$0xf]
      %v213 = vld [vmem:[%s192 + $0x14] sm:$0xf]
      %v214 = vld [vmem:[%s192 + $0x18] sm:$0xf]
      %v215 = vld [vmem:[%s192 + $0x1c] sm:$0xf]
      %v216 = vld [vmem:[%s192 + $0x20] sm:$0xf]
      %v217 = vld [vmem:[%s192 + $0x24] sm:$0xf]
      %v218 = vld [vmem:[%s192 + $0x28] sm:$0xf]
      %v219 = vld [vmem:[%s192 + $0x2c] sm:$0xf]
      %v220 = vld [vmem:[%s192 + $0x30] sm:$0xf]
      %v221 = vld [vmem:[%s192 + $0x34] sm:$0xf]
      %v222 = vld [vmem:[%s192 + $0x38] sm:$0xf]
      %v223 = vld [vmem:[%s192 + $0x3c] sm:$0xf]
      %v224 = vld [vmem:[%s192 + $0x40] sm:$0xf]
      %v225 = vld [vmem:[%s192 + $0x44] sm:$0xf]
      %v226 = vld [vmem:[%s192 + $0x48] sm:$0xf]
      %v227 = vld [vmem:[%s192 + $0x4c] sm:$0xf]
      %v228 = vld [vmem:[%s192 + $0x50] sm:$0xf]
      %v229 = vld [vmem:[%s192 + $0x54] sm:$0xf]
      %v230 = vld [vmem:[%s192 + $0x58] sm:$0xf]
      %v231 = vld [vmem:[%s192 + $0x5c] sm:$0xf]
      %v232 = vld [vmem:[%s192 + $0x60] sm:$0xf]
      %v233 = vld [vmem:[%s192 + $0x64] sm:$0xf]
      %v234 = vld [vmem:[%s192 + $0x68] sm:$0xf]
      %v235 = vld [vmem:[%s192 + $0x6c] sm:$0xf]
      %v236 = vld [vmem:[%s192 + $0x70] sm:$0xf]
      %v237 = vld [vmem:[%s192 + $0x74] sm:$0xf]
      %v238 = vld [vmem:[%s192 + $0x78] sm:$0xf]
      %v239 = vld [vmem:[%s192 + $0x7c] sm:$0xf]
      %v240 = vld [vmem:[%s192 + $0x80] sm:$0xf]
      %v241 = vld [vmem:[%s192 + $0x84] sm:$0xf]
      %v242 = vld [vmem:[%s192 + $0x88] sm:$0xf]
      %v243 = vld [vmem:[%s192 + $0x8c] sm:$0xf]
      %v244 = vld [vmem:[%s192 + $0x90] sm:$0xf]
      %v245 = vld [vmem:[%s192 + $0x94] sm:$0xf]
      %v246 = vld [vmem:[%s192 + $0x98] sm:$0xf]
      %v247 = vld [vmem:[%s192 + $0x9c] sm:$0xf]
      %v248 = vld [vmem:[%s192 + $0xa0] sm:$0xf]
      %v249 = vld [vmem:[%s192 + $0xa4] sm:$0xf]
      %v250 = vld [vmem:[%s192 + $0xa8] sm:$0xf]
      %v251 = vld [vmem:[%s192 + $0xac] sm:$0xf]
      %v252 = vld [vmem:[%s192 + $0xb0] sm:$0xf]
      %v253 = vld [vmem:[%s192 + $0xb4] sm:$0xf]
      %v254 = vld [vmem:[%s192 + $0xb8] sm:$0xf]
      %v255 = vld [vmem:[%s192 + $0xbc] sm:$0xf]
      %v256 = vld [vmem:[%s192 + $0xc0] sm:$0xf]
      %v257 = vld [vmem:[%s192 + $0xc4] sm:$0xf]
      %v258 = vld [vmem:[%s192 + $0xc8] sm:$0xf]
      %v259 = vld [vmem:[%s192 + $0xcc] sm:$0xf]
      %v260 = vld [vmem:[%s192 + $0xd0] sm:$0xf]
      %v261 = vld [vmem:[%s192 + $0xd4] sm:$0xf]
      %v262 = vld [vmem:[%s192 + $0xd8] sm:$0xf]
      %v263 = vld [vmem:[%s192 + $0xdc] sm:$0xf]
      %v264 = vld [vmem:[%s192 + $0xe0] sm:$0xf]
      %v265 = vld [vmem:[%s192 + $0xe4] sm:$0xf]
      %v266 = vld [vmem:[%s192 + $0xe8] sm:$0xf]
      %v267 = vld [vmem:[%s192 + $0xec] sm:$0xf]
      %v268 = vld [vmem:[%s192 + $0xf0] sm:$0xf]
      %v269 = vld [vmem:[%s192 + $0xf4] sm:$0xf]
      %v270 = vld [vmem:[%s192 + $0xf8] sm:$0xf]
      %v271 = vld [vmem:[%s192 + $0xfc] sm:$0xf]
      %v272 = vld [vmem:[%s201] sm:$0xf]
      %274 = vset.pattern.permute.xlu0 0
      %275 = vperm.xlu0 %274, %v272
      %v276 = vpop.permute.xlu0 %275
      %v279 = vcombine.high %v207, %v207
      %v281 = vunpack.c.l.s4 1983009808
      %v282 = vunpack.c.0.s8 %v281
      %v283 = vlaneseq
      %v284 = vshrl.u32 %v283, 7
      %v285 = vsub.s32 %v282, %v284
      %v286 = vrot.slane %v207, %v285
      %v288 = vunpack.c.l.s4 1983009808
      %v289 = vunpack.c.0.s8 %v288
      %v290 = vlaneseq
      %v291 = vshrl.u32 %v290, 7
      %v292 = vsub.s32 %v289, %v291
      %v293 = vrot.slane %v279, %v292
      %v294 = vcombine.high %v286, %v286
      %v295 = vcombine.high %v293, %v293
      %v364 = vunpack.c.l.b16 %v208
      %v365 = vunpack.c.l.b16 %v209
      %v366 = vunpack.c.l.b16 %v210
      %v367 = vunpack.c.l.b16 %v211
      %v368 = vunpack.c.l.b16 %v212
      %v369 = vunpack.c.l.b16 %v213
      %v370 = vunpack.c.l.b16 %v214
      %v371 = vunpack.c.l.b16 %v215
      %v372 = vunpack.c.l.b16 %v216
      %v373 = vunpack.c.l.b16 %v217
      %v374 = vunpack.c.l.b16 %v218
      %v375 = vunpack.c.l.b16 %v219
      %v376 = vunpack.c.l.b16 %v220
      %v377 = vunpack.c.l.b16 %v221
      %v378 = vunpack.c.l.b16 %v222
      %v379 = vunpack.c.l.b16 %v223
      %v380 = vunpack.c.l.b16 %v224
      %v381 = vunpack.c.l.b16 %v225
      %v382 = vunpack.c.l.b16 %v226
      %v383 = vunpack.c.l.b16 %v227
      %v384 = vunpack.c.l.b16 %v228
      %v385 = vunpack.c.l.b16 %v229
      %v386 = vunpack.c.l.b16 %v230
      %v387 = vunpack.c.l.b16 %v231
      %v388 = vunpack.c.l.b16 %v232
      %v389 = vunpack.c.l.b16 %v233
      %v390 = vunpack.c.l.b16 %v234
      %v391 = vunpack.c.l.b16 %v235
      %v392 = vunpack.c.l.b16 %v236
      %v393 = vunpack.c.l.b16 %v237
      %v394 = vunpack.c.l.b16 %v238
      %v395 = vunpack.c.l.b16 %v239
      %v396 = vunpack.c.l.b16 %v240
      %v397 = vunpack.c.l.b16 %v241
      %v398 = vunpack.c.l.b16 %v242
      %v399 = vunpack.c.l.b16 %v243
      %v400 = vunpack.c.l.b16 %v244
      %v401 = vunpack.c.l.b16 %v245
      %v402 = vunpack.c.l.b16 %v246
      %v403 = vunpack.c.l.b16 %v247
      %v404 = vunpack.c.l.b16 %v248
      %v405 = vunpack.c.l.b16 %v249
      %v406 = vunpack.c.l.b16 %v250
      %v407 = vunpack.c.l.b16 %v251
      %v408 = vunpack.c.l.b16 %v252
      %v409 = vunpack.c.l.b16 %v253
      %v410 = vunpack.c.l.b16 %v254
      %v411 = vunpack.c.l.b16 %v255
      %v412 = vunpack.c.l.b16 %v256
      %v413 = vunpack.c.l.b16 %v257
      %v414 = vunpack.c.l.b16 %v258
      %v415 = vunpack.c.l.b16 %v259
      %v416 = vunpack.c.l.b16 %v260
      %v417 = vunpack.c.l.b16 %v261
      %v418 = vunpack.c.l.b16 %v262
      %v419 = vunpack.c.l.b16 %v263
      %v420 = vunpack.c.l.b16 %v264
      %v421 = vunpack.c.l.b16 %v265
      %v422 = vunpack.c.l.b16 %v266
      %v423 = vunpack.c.l.b16 %v267
      %v424 = vunpack.c.l.b16 %v268
      %v425 = vunpack.c.l.b16 %v269
      %v426 = vunpack.c.l.b16 %v270
      %v427 = vunpack.c.l.b16 %v271
      %v428 = vpack.c.b16 %v365, %v364
      %v429 = vpack.c.b16 %v367, %v366
      %v430 = vpack.c.b16 %v369, %v368
      %v431 = vpack.c.b16 %v371, %v370
      %v432 = vpack.c.b16 %v373, %v372
      %v433 = vpack.c.b16 %v375, %v374
      %v434 = vpack.c.b16 %v377, %v376
      %v435 = vpack.c.b16 %v379, %v378
      %v436 = vpack.c.b16 %v381, %v380
      %v437 = vpack.c.b16 %v383, %v382
      %v438 = vpack.c.b16 %v385, %v384
      %v439 = vpack.c.b16 %v387, %v386
      %v440 = vpack.c.b16 %v389, %v388
      %v441 = vpack.c.b16 %v391, %v390
      %v442 = vpack.c.b16 %v393, %v392
      %v443 = vpack.c.b16 %v395, %v394
      %v444 = vpack.c.b16 %v397, %v396
      %v445 = vpack.c.b16 %v399, %v398
      %v446 = vpack.c.b16 %v401, %v400
      %v447 = vpack.c.b16 %v403, %v402
      %v448 = vpack.c.b16 %v405, %v404
      %v449 = vpack.c.b16 %v407, %v406
      %v450 = vpack.c.b16 %v409, %v408
      %v451 = vpack.c.b16 %v411, %v410
      %v452 = vpack.c.b16 %v413, %v412
      %v453 = vpack.c.b16 %v415, %v414
      %v454 = vpack.c.b16 %v417, %v416
      %v455 = vpack.c.b16 %v419, %v418
      %v456 = vpack.c.b16 %v421, %v420
      %v457 = vpack.c.b16 %v423, %v422
      %v458 = vpack.c.b16 %v425, %v424
      %v459 = vpack.c.b16 %v427, %v426
      %492 = vmatprep.subr.bf16.mxu0 0
      %493 = vmatpush1.bf16.msra.mxu0 %v435
      %494 = vmatprep.subr.bf16.mxu0 0
      %495 = vmatpush1.bf16.msra.mxu0 %v434
      %496 = vmatprep.subr.bf16.mxu0 0
      %497 = vmatpush1.bf16.msra.mxu0 %v433
      %498 = vmatprep.subr.bf16.mxu0 0
      %499 = vmatpush1.bf16.msra.mxu0 %v432
      %500 = vmatprep.subr.bf16.mxu0 0
      %501 = vmatpush1.bf16.msra.mxu0 %v431
      %502 = vmatprep.subr.bf16.mxu0 0
      %503 = vmatpush1.bf16.msra.mxu0 %v430
      %504 = vmatprep.subr.bf16.mxu0 0
      %505 = vmatpush1.bf16.msra.mxu0 %v429
      %506 = vmatprep.subr.bf16.mxu0 0
      %507 = vmatpush1.bf16.msra.mxu0 %v428
      %508 = vmatprep.subr.bf16.mxu0 0
      %509 = vmatpush2.bf16.msra.mxu0 %v443
      %510 = vmatprep.subr.bf16.mxu0 0
      %511 = vmatpush2.bf16.msra.mxu0 %v442
      %512 = vmatprep.subr.bf16.mxu0 0
      %513 = vmatpush2.bf16.msra.mxu0 %v441
      %514 = vmatprep.subr.bf16.mxu0 0
      %515 = vmatpush2.bf16.msra.mxu0 %v440
      %516 = vmatprep.subr.bf16.mxu0 0
      %517 = vmatpush2.bf16.msra.mxu0 %v439
      %518 = vmatprep.subr.bf16.mxu0 0
      %519 = vmatpush2.bf16.msra.mxu0 %v438
      %520 = vmatprep.subr.bf16.mxu0 0
      %521 = vmatpush2.bf16.msra.mxu0 %v437
      %522 = vmatprep.subr.bf16.mxu0 0
      %523 = vmatpush2.bf16.msra.mxu0 %v436
      %524 = vmatprep.mubr.bf16.mxu0 %v294
      %525 = vmatmul.mubr.bf16.gmra.mxu0 %v286
      %v526 = vpop.f32.mrf.mxu0
      %v527 = vadd.f32 %v276, %v526
      %v528 = vpop.f32.mrf.mxu0
      %v529 = vpop.f32.mrf.mxu0
      %v530 = vpop.f32.mrf.mxu0
      %531 = vdwg.mxu0
      %532 = vmatprep.subr.bf16.mxu0 0
      %533 = vmatpush1.bf16.msra.mxu0 %v451
      %534 = vmatprep.subr.bf16.mxu0 0
      %535 = vmatpush1.bf16.msra.mxu0 %v450
      %536 = vmatprep.subr.bf16.mxu0 0
      %537 = vmatpush1.bf16.msra.mxu0 %v449
      %538 = vmatprep.subr.bf16.mxu0 0
      %539 = vmatpush1.bf16.msra.mxu0 %v448
      %540 = vmatprep.subr.bf16.mxu0 0
      %541 = vmatpush1.bf16.msra.mxu0 %v447
      %542 = vmatprep.subr.bf16.mxu0 0
      %543 = vmatpush1.bf16.msra.mxu0 %v446
      %544 = vmatprep.subr.bf16.mxu0 0
      %545 = vmatpush1.bf16.msra.mxu0 %v445
      %546 = vmatprep.subr.bf16.mxu0 0
      %547 = vmatpush1.bf16.msra.mxu0 %v444
      %548 = vmatprep.subr.bf16.mxu0 0
      %549 = vmatpush2.bf16.msra.mxu0 %v459
      %550 = vmatprep.subr.bf16.mxu0 0
      %551 = vmatpush2.bf16.msra.mxu0 %v458
      %552 = vmatprep.subr.bf16.mxu0 0
      %553 = vmatpush2.bf16.msra.mxu0 %v457
      %554 = vmatprep.subr.bf16.mxu0 0
      %555 = vmatpush2.bf16.msra.mxu0 %v456
      %556 = vmatprep.subr.bf16.mxu0 0
      %557 = vmatpush2.bf16.msra.mxu0 %v455
      %558 = vmatprep.subr.bf16.mxu0 0
      %559 = vmatpush2.bf16.msra.mxu0 %v454
      %560 = vmatprep.subr.bf16.mxu0 0
      %561 = vmatpush2.bf16.msra.mxu0 %v453
      %562 = vmatprep.subr.bf16.mxu0 0
      %563 = vmatpush2.bf16.msra.mxu0 %v452
      %564 = vmatprep.mubr.bf16.mxu0 %v295
      %565 = vmatmul.mubr.bf16.gmra.mxu0 %v293
      %v566 = vpop.f32.mrf.mxu0
      %v567 = vadd.f32 %v527, %v566
      %v568 = vpop.f32.mrf.mxu0
      %v569 = vpop.f32.mrf.mxu0
      %v570 = vpop.f32.mrf.mxu0
      %571 = vdwg.mxu0
      %v572 = vxor.u32 %v567, 2147483648
      %v573 = vmul.f32 %v572, 1.442695
      %v574 = vpow.pop %v573
      %v575 = vadd.f32 %v574, 1.0
      %v576 = vrcp.pop %v575
      %v577 = vmul.f32 1.0, %v576
      %v579 = vrot.slane %v567, 6
      %v581 = vmul.f32 %v577, %v579
      %vm582 = vcmp.gt.f32.partialorder %v581, 0.0
      %v583 = vmin.f32 %v581, 0.0
      %v584 = vmul.f32 %v583, 1.442695
      %v585 = vpow.pop %v584
      %v586 = vsub.f32 %v585, 1.0
      %v587 = vsel %vm582, %v581, %v586
      %vm588 = vcmp.gt.f32.partialorder %v587, 0.0
      %v589 = vmin.f32 %v587, 0.0
      %v590 = vmul.f32 %v589, 1.442695
      %v591 = vpow.pop %v590
      %v592 = vsub.f32 %v591, 1.0
      %v593 = vsel %vm588, %v587, %v592
      %594 = vst [vmem:[%s205 - $0x2] sm:$0xc] %v593
      %p595 = scmp.lt.s32.totalorder %s14, 1
      %s596 = scalar_select %p595, %s14, 1
      %s597 = smul.addr %s596, 2
      %s598 = scalar_lea.vmem %s3, %s597
      // Predicated region
      $region33: #{online_gcrn_forward.17} parent=31 // pred_check
        %p599 = pneg %p110
      $region34: #{online_gcrn_forward.17} parent=31 // pred_check_branch
        %601 = sbr.rel (%p599) target = $region36
      $region35: #{online_gcrn_forward.17} parent=31 // pred_region
        _
      $region36: #{online_gcrn_forward.17} parent=31 // pred_fallthru
        _
    $region32: #{online_gcrn_forward.17} parent=5 // pred_fallthru
      _
    %p602 = scmp.le.s32.totalorder 2, %s9
    // Predicated region
    $region37: #{online_gcrn_forward.17} parent=5 // pred_check
      %p603 = pneg %p602
    $region38: #{online_gcrn_forward.17} parent=5 // pred_check_branch
      %605 = sbr.rel (%p603) target = $region40
    $region39: #{online_gcrn_forward.17} parent=5 // pred_region
      %s606 = ssub.s32 %s9, 2
      // Predicated region
      $region41: #{online_gcrn_forward.17} parent=39 // pred_check
        %p607 = pneg %p116
      $region42: #{online_gcrn_forward.17} parent=39 // pred_check_branch
        %609 = sbr.rel (%p607) target = $region44
      $region43: #{online_gcrn_forward.17} parent=39 // pred_region
        %p610 = scmp.lt.s32.totalorder %s15, 1
        %s611 = scalar_select %p610, %s15, 1
        %s612 = smul.addr %s611, 2
        %s613 = scalar_lea.vmem %s3, %s612
      $region44: #{online_gcrn_forward.17} parent=39 // pred_fallthru
        _
    $region40: #{online_gcrn_forward.17} parent=5 // pred_fallthru
      _
  $region6: #{online_gcrn_forward.17} parent=0 // loop_footer
    %s13 = sadd.s32 1, %s9
  $region7: #{online_gcrn_forward.17} parent=0 // loop_footer_branch
    %8 = sbr.rel target = $region3
  $region8: #{online_gcrn_forward.17} parent=0 // loop_exit
    _

</llo_original>
